<compile_context>
chip_gen: v7x
topology: tpu7x:2x2x1
jax: 0.10.0
libtpu: 0.0.40
codegen_flags: <defaults>
</compile_context>

<pallas_src>
import functools

import jax
import jax.numpy as jnp
from jax.experimental import pallas as pl
from jax.experimental.pallas import tpu as pltpu

LANE = 128


def _round_up(x, m):
    return ((x + m - 1) // m) * m


def _tpu_config():
    """Generation-aware tiling / VMEM budget.

    v5e / v6e: 1 TensorCore, 128 MiB VMEM -> one big row tile, ~64 MiB scoped VMEM.
    v7x      : 2 TensorCores, 64 MiB VMEM -> keep >=2 row tiles so the "parallel"
               grid axis can shard across both cores; budget ~44 MiB scoped VMEM.
    """
    small_vmem = False
    try:
        small_vmem = pltpu.get_tpu_info().vmem_capacity_bytes <= 80 * 1024 * 1024
    except Exception:
        try:
            small_vmem = "v7" in jax.devices()[0].device_kind.lower()
        except Exception:
            small_vmem = False
    if small_vmem:
        return dict(row_tile_target=512, min_row_tiles=2, vmem_limit=44 * 1024 * 1024)
    return dict(row_tile_target=1024, min_row_tiles=1, vmem_limit=64 * 1024 * 1024)


def _pick_tm(m, target, min_tiles):
    tm = _round_up(min(target, _round_up(m, 8)), 8)
    while tm > 8 and (m + tm - 1) // tm < min_tiles:
        tm = _round_up(tm // 2, 8)
    return max(tm, 8)


# ----------------------------------------------------------------------------
# Pallas kernels: one fused matmul family (bias / +relu / +residual+relu)
# ----------------------------------------------------------------------------

def _mm_bias_kernel(x_ref, w_ref, b_ref, o_ref):
    y = jnp.dot(x_ref[...], w_ref[...], preferred_element_type=jnp.float32) + b_ref[...]
    o_ref[...] = y.astype(o_ref.dtype)


def _mm_bias_relu_kernel(x_ref, w_ref, b_ref, o_ref):
    y = jnp.dot(x_ref[...], w_ref[...], preferred_element_type=jnp.float32) + b_ref[...]
    o_ref[...] = jnp.maximum(y, 0.0).astype(o_ref.dtype)


def _mm_bias_res_relu_kernel(x_ref, w_ref, b_ref, r_ref, o_ref):
    y = (jnp.dot(x_ref[...], w_ref[...], preferred_element_type=jnp.float32)
         + b_ref[...] + r_ref[...].astype(jnp.float32))
    o_ref[...] = jnp.maximum(y, 0.0).astype(o_ref.dtype)


def _fused_matmul(x, w, bias, res=None, *, relu, tm, out_dtype, vmem_limit):
    """y = [relu](x @ w + bias [+ res]); row-tiled over the flattened-pixel axis.

    x: (mp, K) bf16, w: (K, Np) bf16 (BN scale folded), bias: (1, Np) f32,
    res: optional (mp, Np) bf16. K is never tiled (it equals the full array dim),
    so each grid step is a single full-K MXU matmul with f32 accumulation.
    """
    mp, kdim = x.shape
    _, np_ = w.shape
    assert mp % tm == 0 and np_ % LANE == 0
    in_specs = [pl.BlockSpec((tm, kdim), lambda i: (i, 0)),
                pl.BlockSpec((kdim, np_), lambda i: (0, 0)),
                pl.BlockSpec((1, np_), lambda i: (0, 0))]
    args = [x, w, bias]
    if res is not None:
        in_specs.append(pl.BlockSpec((tm, np_), lambda i: (i, 0)))
        args.append(res)
        kernel = _mm_bias_res_relu_kernel
    else:
        kernel = _mm_bias_relu_kernel if relu else _mm_bias_kernel
    out_bytes = mp * np_ * jnp.dtype(out_dtype).itemsize
    cost = pl.CostEstimate(
        flops=2 * mp * kdim * np_, transcendentals=0,
        bytes_accessed=sum(int(a.size) * a.dtype.itemsize for a in args) + out_bytes)
    return pl.pallas_call(
        kernel,
        out_shape=jax.ShapeDtypeStruct((mp, np_), out_dtype),
        grid=(mp // tm,),
        in_specs=in_specs,
        out_specs=pl.BlockSpec((tm, np_), lambda i: (i, 0)),
        compiler_params=pltpu.CompilerParams(
            dimension_semantics=("parallel",), vmem_limit_bytes=vmem_limit),
        cost_estimate=cost,
    )(*args)


# ----------------------------------------------------------------------------
# JAX glue: flattened im2col for the offset conv, modulated bilinear sampling
# ----------------------------------------------------------------------------

def im2col_flat(x_img, ks, dil, pad):
    """(N,H,W,C) -> (N*H*W, kk*C) with tap-major channel layout (index = k*C + c)."""
    n, h, w, c = x_img.shape
    xp = jnp.pad(x_img, ((0, 0), (pad, pad), (pad, pad), (0, 0)))
    cols = []
    for ky in range(ks):
        for kx in range(ks):
            cols.append(xp[:, ky * dil:ky * dil + h, kx * dil:kx * dil + w, :])
    return jnp.concatenate(cols, axis=-1).reshape(n * h * w, ks * ks * c)


def bilinear_sample_group(img_flat, ys, xs, mod, h, w, batch_base):
    """Modulated bilinear gather for one deformable group.

    img_flat: (N*H*W, cg) bf16; ys/xs/mod: (N,H,W,KK) f32 coords & modulation mask.
    The mask and the out-of-image zero-padding are folded into the 4 bilinear weights,
    so the gathered values stay bf16 and no separate mask-multiply pass is needed.
    Returns (N,H,W,KK,cg) bf16.
    """
    y0 = jnp.floor(ys)
    x0 = jnp.floor(xs)
    y1 = y0 + 1.0
    x1 = x0 + 1.0
    wy1 = ys - y0
    wy0 = 1.0 - wy1
    wx1 = xs - x0
    wx0 = 1.0 - wx1

    def corner(yi, xi, wgt):
        valid = (yi >= 0) & (yi <= h - 1) & (xi >= 0) & (xi <= w - 1)
        yc = jnp.clip(yi, 0, h - 1).astype(jnp.int32)
        xc = jnp.clip(xi, 0, w - 1).astype(jnp.int32)
        idx = batch_base + yc * w + xc                                  # (N,H,W,KK)
        v = jnp.take(img_flat, idx, axis=0, mode="clip")                # (N,H,W,KK,cg) bf16
        wgt = jnp.where(valid, wgt * mod, 0.0).astype(jnp.bfloat16)
        return v * wgt[..., None]

    return (corner(y0, x0, wy0 * wx0) + corner(y0, x1, wy0 * wx1)
            + corner(y1, x0, wy1 * wx0) + corner(y1, x1, wy1 * wx1))


# ----------------------------------------------------------------------------
# DeformBottleneck forward
# ----------------------------------------------------------------------------

def deform_bottleneck_forward(x_nchw, p, *, width, outp, dg=2, ks=3, dil=2, pad=2):
    cfg = _tpu_config()
    vmem_limit = cfg["vmem_limit"]

    x = jnp.transpose(x_nchw, (0, 2, 3, 1))                       # NCHW -> NHWC (f32)
    n, h, w_sp, cin = x.shape
    m = n * h * w_sp
    kk = ks * ks
    cg = width // dg

    tm = _pick_tm(m, cfg["row_tile_target"], cfg["min_row_tiles"])
    mp = _round_up(m, tm)

    def pad_rows(a):
        return jnp.pad(a, ((0, mp - m), (0, 0)))

    x_flat = x.reshape(m, cin)

    # --- conv1 (1x1) + BN1 + ReLU: fused row-tiled matmul (bf16 in, f32 MXU acc) ---
    out1 = _fused_matmul(pad_rows(x_flat).astype(jnp.bfloat16), p["w1"], p["bn1_shift"],
                         relu=True, tm=tm, out_dtype=jnp.bfloat16, vmem_limit=vmem_limit)
    out1_img = out1[:m, :width].reshape(n, h, w_sp, width)        # bf16, true channels

    # --- offset_conv (3x3 dilated): taps flattened into K = kk*width -> one matmul ---
    # TODO(synk): the 9 shifted slabs are still materialized by XLA; a haloed, spatially
    # tiled in-kernel im2col would cut this input traffic ~9x and drop the intermediate.
    patches0 = pad_rows(im2col_flat(out1_img, ks, dil, pad))      # (mp, kk*width) bf16
    offset_mask = _fused_matmul(patches0, p["w_off"], p["b_off"], relu=False,
                                tm=tm, out_dtype=jnp.float32, vmem_limit=vmem_limit)[:m]
    off_ch = dg * 2 * kk
    # Channel order assumed: per group, per tap, (dy, dx); mask channels follow.
    # mmcv-style packs may permute differently -- permute pretrained weights when loading.
    offset = offset_mask[:, :off_ch].reshape(n, h, w_sp, dg, kk, 2)
    # TODO(synk): sigmoid*2 could be fused into the offset-conv kernel finalize (idle EUP).
    mask = (jax.nn.sigmoid(offset_mask[:, off_ch:off_ch + dg * kk]) * 2.0
            ).reshape(n, h, w_sp, dg, kk)                          # double_mask

    # --- modulated deformable bilinear sampling (data-dependent gather; stays in XLA) ---
    # TODO(synk): a VMEM-resident Pallas gather fused into the contraction would avoid the
    # 4 XLA gathers and keep `sampled` out of HBM; kept in JAX for robustness.
    hs = jnp.arange(h, dtype=jnp.float32)
    ws = jnp.arange(w_sp, dtype=jnp.float32)
    kys, kxs = jnp.meshgrid(jnp.arange(ks), jnp.arange(ks), indexing="ij")
    kys = kys.reshape(-1).astype(jnp.float32)
    kxs = kxs.reshape(-1).astype(jnp.float32)
    base_y = (hs[:, None] - pad + dil * kys[None, :])[None, :, None, :]   # (1,H,1,kk)
    base_x = (ws[:, None] - pad + dil * kxs[None, :])[None, None, :, :]   # (1,1,W,kk)
    batch_base = (jnp.arange(n, dtype=jnp.int32) * (h * w_sp))[:, None, None, None]

    group_cols = []
    for g in range(dg):                                            # static; dg is tiny
        ys = base_y + offset[..., g, :, 0]                         # DCNv2 (dy, dx) per tap
        xs = base_x + offset[..., g, :, 1]
        img_flat = out1_img[..., g * cg:(g + 1) * cg].reshape(m, cg)
        group_cols.append(bilinear_sample_group(img_flat, ys, xs, mask[..., g, :],
                                                h, w_sp, batch_base))
    sampled = jnp.concatenate(group_cols, axis=-1)                 # (N,H,W,kk,width) bf16

    # --- deformable conv + BN2 + ReLU: mask already folded into the samples; the 9 taps
    #     flatten into K = kk*width -> a single full-K MXU matmul per row tile ---
    patches = pad_rows(sampled.reshape(m, kk * width))             # (mp, kk*width) bf16
    out2 = _fused_matmul(patches, p["w2"], p["bn2_shift"],
                         relu=True, tm=tm, out_dtype=jnp.bfloat16, vmem_limit=vmem_limit)

    # --- conv3 (1x1) + BN3 + residual + ReLU (bf16 residual stream, f32 add in-kernel) ---
    outp_p = p["w3"].shape[1]
    # identity skip: downsample is None, so inplanes == planes*expansion (lane-pad only)
    identity = jnp.pad(x_flat, ((0, mp - m), (0, outp_p - cin))).astype(jnp.bfloat16)
    out3 = _fused_matmul(out2, p["w3"], p["bn3_shift"], identity,
                         relu=True, tm=tm, out_dtype=jnp.float32, vmem_limit=vmem_limit)

    out = out3[:m, :outp].reshape(n, h, w_sp, outp)
    return jnp.transpose(out, (0, 3, 1, 2))                        # back to NCHW


# ----------------------------------------------------------------------------
# Deterministic parameter init (mirrors the module's __init__ shapes)
# ----------------------------------------------------------------------------

def init_params(key, inplanes, planes, *, dg=2, ks=3, base_width=64, groups=1):
    width = int(planes * (base_width / 64.0)) * groups
    outp = planes * 4
    kk = ks * ks
    width_p = _round_up(width, LANE)
    outp_p = _round_up(outp, LANE)
    off_out = dg * 3 * kk
    off_out_p = _round_up(off_out, LANE)

    keys = jax.random.split(key, 12)

    def rnd(k, shape, s=0.1):
        return jax.random.normal(k, shape, jnp.float32) * s

    w1 = rnd(keys[0], (inplanes, width))                  # conv1x1 as (in, out)
    w2 = rnd(keys[1], (width, width, ks, ks))             # deform conv, torch (O, Cin, Kh, Kw)
    w3 = rnd(keys[2], (width, outp))                      # conv1x1 as (in, out)

    def bn_affine(kg, kb, km, c, eps=1e-5):
        gamma = 1.0 + rnd(kg, (c,), 0.05)
        beta = rnd(kb, (c,), 0.05)
        running_mean = rnd(km, (c,), 0.05)
        running_var = jnp.ones((c,), jnp.float32)
        scale = gamma / jnp.sqrt(running_var + eps)
        shift = beta - running_mean * scale
        return scale, shift

    s1, b1 = bn_affine(keys[3], keys[4], keys[5], width)
    s2, b2 = bn_affine(keys[6], keys[7], keys[8], width)
    s3, b3 = bn_affine(keys[9], keys[10], keys[11], outp)

    def pad_cols(a, cols):
        return jnp.pad(a, ((0, 0), (0, cols - a.shape[-1])))

    # conv1: fold BN1 scale into columns, lane-pad out-channels, bf16.
    w1_p = pad_cols(w1 * s1[None, :], width_p).astype(jnp.bfloat16)
    bn1_shift = pad_cols(b1[None, :], width_p)             # f32, zero-padded

    # deform conv: (O,Cin,Kh,Kw) -> flattened-K (kk*Cin, O), tap-major (k*Cin + c),
    # fold BN2 scale over output columns, lane-pad O.
    w2_flat = jnp.transpose(w2, (2, 3, 1, 0)).reshape(kk * width, width) * s2[None, :]
    w2_p = pad_cols(w2_flat, width_p).astype(jnp.bfloat16)
    bn2_shift = pad_cols(b2[None, :], width_p)

    # conv3: fold BN3 scale, pad K rows to width_p and out-channels to outp_p.
    w3_p = jnp.pad(w3 * s3[None, :],
                   ((0, width_p - width), (0, outp_p - outp))).astype(jnp.bfloat16)
    bn3_shift = pad_cols(b3[None, :], outp_p)

    # offset_conv (groups=dg) is zero-initialized per the module. Dense flattened-K layout
    # (kk*width, off_out_p); real pretrained grouped weights must be embedded
    # block-diagonally per deformable group before loading into w_off.
    w_off = jnp.zeros((kk * width, off_out_p), jnp.bfloat16)
    b_off = jnp.zeros((1, off_out_p), jnp.float32)
    # TODO(synk): a ModulatedDeformConv bias (if present) would fold directly into bn2_shift.

    params = dict(w1=w1_p, w2=w2_p, w3=w3_p,
                  bn1_shift=bn1_shift, bn2_shift=bn2_shift, bn3_shift=bn3_shift,
                  w_off=w_off, b_off=b_off)
    dims = dict(width=width, outp=outp, dg=dg, ks=ks)
    return params, dims


if __name__ == "__main__":
    N, inplanes, H, W = 2, 16, 16, 16
    planes = 4  # planes*expansion == inplanes so the identity skip is valid (downsample=None)

    key = jax.random.PRNGKey(0)
    kx, kp = jax.random.split(key)
    x = jax.random.normal(kx, (N, inplanes, H, W), jnp.float32)
    params, dims = init_params(kp, inplanes, planes)

    fwd = jax.jit(functools.partial(deform_bottleneck_forward,
                                    width=dims["width"], outp=dims["outp"],
                                    dg=dims["dg"], ks=dims["ks"], dil=2, pad=2))
    out = fwd(x, params)
    jax.block_until_ready(out)

    assert out.shape == (N, planes * 4, H, W), out.shape
    assert bool(jnp.all(jnp.isfinite(out)))
    assert bool(jnp.all(out >= 0.0))  # final ReLU
    print("KERNEL_OK")
</pallas_src>

<mosaic_0001>
module attributes {stable_mosaic.version = 11 : i64} {
  func.func @_mm_bias_relu_kernel(%arg0: i32, %arg1: memref<512x16xbf16, #tpu.memory_space<vmem>>, %arg2: memref<16x128xbf16, #tpu.memory_space<vmem>>, %arg3: memref<1x128xf32, #tpu.memory_space<vmem>>, %arg4: memref<512x128xbf16, #tpu.memory_space<vmem>>) attributes {dimension_semantics = [#tpu.dimension_semantics<parallel>], iteration_bounds = array<i64: 1>, scalar_prefetch = 0 : i64, scratch_operands = 0 : i64, tpu.core_type = #tpu.core_type<tc>, window_params = [{transform_indices = @transform_0, window_bounds = array<i64: 512, 16>}, {pipeline_mode = #tpu.pipeline_mode<synchronous>, transform_indices = @transform_1, window_bounds = array<i64: 16, 128>}, {pipeline_mode = #tpu.pipeline_mode<synchronous>, transform_indices = @transform_2, window_bounds = array<i64: 1, 128>}, {transform_indices = @transform_3, window_bounds = array<i64: 512, 128>}]} {
    %c0 = arith.constant 0 : index
    %c0_0 = arith.constant 0 : index
    %0 = vector.load %arg1[%c0, %c0_0] : memref<512x16xbf16, #tpu.memory_space<vmem>>, vector<512x16xbf16>
    %c0_1 = arith.constant 0 : index
    %c0_2 = arith.constant 0 : index
    %1 = vector.load %arg2[%c0_1, %c0_2] : memref<16x128xbf16, #tpu.memory_space<vmem>>, vector<16x128xbf16>
    %cst = arith.constant dense<0.000000e+00> : vector<512x128xf32>
    %2 = tpu.matmul %0, %1, %cst {dimension_numbers = #tpu.dot_dimension_numbers<[1], [0], [0], [1], [0, 0, 1, 1], [], []>} : vector<512x16xbf16>, vector<16x128xbf16>, vector<512x128xf32> -> vector<512x128xf32>
    %c0_3 = arith.constant 0 : index
    %c0_4 = arith.constant 0 : index
    %3 = vector.load %arg3[%c0_3, %c0_4] : memref<1x128xf32, #tpu.memory_space<vmem>>, vector<1x128xf32>
    %4 = vector.broadcast %3 : vector<1x128xf32> to vector<512x128xf32>
    %5 = arith.addf %2, %4 : vector<512x128xf32>
    %cst_5 = arith.constant 0.000000e+00 : f32
    %6 = vector.broadcast %cst_5 : f32 to vector<512x128xf32>
    %7 = arith.maximumf %5, %6 : vector<512x128xf32>
    %8 = arith.truncf %7 : vector<512x128xf32> to vector<512x128xbf16>
    %c0_6 = arith.constant 0 : index
    %c0_7 = arith.constant 0 : index
    %9 = vector.load %arg4[%c0_6, %c0_7] : memref<512x128xbf16, #tpu.memory_space<vmem>>, vector<512x128xbf16>
    tpu.vector_store %arg4[%c0_6, %c0_7], %8 {strides = array<i32>} : memref<512x128xbf16, #tpu.memory_space<vmem>>, vector<512x128xbf16>,
    return
  }
  func.func @transform_0(%arg0: i32) -> (i32, i32) {
    %c0_i32 = arith.constant 0 : i32
    %c0_i32_0 = arith.constant 0 : i32
    return %arg0, %c0_i32 : i32, i32
  }
  func.func @transform_1(%arg0: i32) -> (i32, i32) {
    %c0_i32 = arith.constant 0 : i32
    %c0_i32_0 = arith.constant 0 : i32
    %c0_i32_1 = arith.constant 0 : i32
    return %c0_i32, %c0_i32_0 : i32, i32
  }
  func.func @transform_2(%arg0: i32) -> (i32, i32) {
    %c0_i32 = arith.constant 0 : i32
    %c0_i32_0 = arith.constant 0 : i32
    %c0_i32_1 = arith.constant 0 : i32
    return %c0_i32, %c0_i32_0 : i32, i32
  }
  func.func @transform_3(%arg0: i32) -> (i32, i32) {
    %c0_i32 = arith.constant 0 : i32
    %c0_i32_0 = arith.constant 0 : i32
    return %arg0, %c0_i32 : i32, i32
  }
}

module attributes {stable_mosaic.version = 11 : i64} {
  func.func @_mm_bias_kernel(%arg0: i32, %arg1: memref<512x36xbf16, #tpu.memory_space<vmem>>, %arg2: memref<36x128xbf16, #tpu.memory_space<vmem>>, %arg3: memref<1x128xf32, #tpu.memory_space<vmem>>, %arg4: memref<512x128xf32, #tpu.memory_space<vmem>>) attributes {dimension_semantics = [#tpu.dimension_semantics<parallel>], iteration_bounds = array<i64: 1>, scalar_prefetch = 0 : i64, scratch_operands = 0 : i64, tpu.core_type = #tpu.core_type<tc>, window_params = [{transform_indices = @transform_0, window_bounds = array<i64: 512, 36>}, {pipeline_mode = #tpu.pipeline_mode<synchronous>, transform_indices = @transform_1, window_bounds = array<i64: 36, 128>}, {pipeline_mode = #tpu.pipeline_mode<synchronous>, transform_indices = @transform_2, window_bounds = array<i64: 1, 128>}, {transform_indices = @transform_3, window_bounds = array<i64: 512, 128>}]} {
    %c0 = arith.constant 0 : index
    %c0_0 = arith.constant 0 : index
    %0 = vector.load %arg1[%c0, %c0_0] : memref<512x36xbf16, #tpu.memory_space<vmem>>, vector<512x36xbf16>
    %c0_1 = arith.constant 0 : index
    %c0_2 = arith.constant 0 : index
    %1 = vector.load %arg2[%c0_1, %c0_2] : memref<36x128xbf16, #tpu.memory_space<vmem>>, vector<36x128xbf16>
    %cst = arith.constant dense<0.000000e+00> : vector<512x128xf32>
    %2 = tpu.matmul %0, %1, %cst {dimension_numbers = #tpu.dot_dimension_numbers<[1], [0], [0], [1], [0, 0, 1, 1], [], []>} : vector<512x36xbf16>, vector<36x128xbf16>, vector<512x128xf32> -> vector<512x128xf32>
    %c0_3 = arith.constant 0 : index
    %c0_4 = arith.constant 0 : index
    %3 = vector.load %arg3[%c0_3, %c0_4] : memref<1x128xf32, #tpu.memory_space<vmem>>, vector<1x128xf32>
    %4 = vector.broadcast %3 : vector<1x128xf32> to vector<512x128xf32>
    %5 = arith.addf %2, %4 : vector<512x128xf32>
    %c0_5 = arith.constant 0 : index
    %c0_6 = arith.constant 0 : index
    %6 = vector.load %arg4[%c0_5, %c0_6] : memref<512x128xf32, #tpu.memory_space<vmem>>, vector<512x128xf32>
    tpu.vector_store %arg4[%c0_5, %c0_6], %5 {strides = array<i32>} : memref<512x128xf32, #tpu.memory_space<vmem>>, vector<512x128xf32>,
    return
  }
  func.func @transform_0(%arg0: i32) -> (i32, i32) {
    %c0_i32 = arith.constant 0 : i32
    %c0_i32_0 = arith.constant 0 : i32
    return %arg0, %c0_i32 : i32, i32
  }
  func.func @transform_1(%arg0: i32) -> (i32, i32) {
    %c0_i32 = arith.constant 0 : i32
    %c0_i32_0 = arith.constant 0 : i32
    %c0_i32_1 = arith.constant 0 : i32
    return %c0_i32, %c0_i32_0 : i32, i32
  }
  func.func @transform_2(%arg0: i32) -> (i32, i32) {
    %c0_i32 = arith.constant 0 : i32
    %c0_i32_0 = arith.constant 0 : i32
    %c0_i32_1 = arith.constant 0 : i32
    return %c0_i32, %c0_i32_0 : i32, i32
  }
  func.func @transform_3(%arg0: i32) -> (i32, i32) {
    %c0_i32 = arith.constant 0 : i32
    %c0_i32_0 = arith.constant 0 : i32
    return %arg0, %c0_i32 : i32, i32
  }
}

module attributes {stable_mosaic.version = 11 : i64} {
  func.func @_mm_bias_relu_kernel(%arg0: i32, %arg1: memref<512x36xbf16, #tpu.memory_space<vmem>>, %arg2: memref<36x128xbf16, #tpu.memory_space<vmem>>, %arg3: memref<1x128xf32, #tpu.memory_space<vmem>>, %arg4: memref<512x128xbf16, #tpu.memory_space<vmem>>) attributes {dimension_semantics = [#tpu.dimension_semantics<parallel>], iteration_bounds = array<i64: 1>, scalar_prefetch = 0 : i64, scratch_operands = 0 : i64, tpu.core_type = #tpu.core_type<tc>, window_params = [{transform_indices = @transform_0, window_bounds = array<i64: 512, 36>}, {pipeline_mode = #tpu.pipeline_mode<synchronous>, transform_indices = @transform_1, window_bounds = array<i64: 36, 128>}, {pipeline_mode = #tpu.pipeline_mode<synchronous>, transform_indices = @transform_2, window_bounds = array<i64: 1, 128>}, {transform_indices = @transform_3, window_bounds = array<i64: 512, 128>}]} {
    %c0 = arith.constant 0 : index
    %c0_0 = arith.constant 0 : index
    %0 = vector.load %arg1[%c0, %c0_0] : memref<512x36xbf16, #tpu.memory_space<vmem>>, vector<512x36xbf16>
    %c0_1 = arith.constant 0 : index
    %c0_2 = arith.constant 0 : index
    %1 = vector.load %arg2[%c0_1, %c0_2] : memref<36x128xbf16, #tpu.memory_space<vmem>>, vector<36x128xbf16>
    %cst = arith.constant dense<0.000000e+00> : vector<512x128xf32>
    %2 = tpu.matmul %0, %1, %cst {dimension_numbers = #tpu.dot_dimension_numbers<[1], [0], [0], [1], [0, 0, 1, 1], [], []>} : vector<512x36xbf16>, vector<36x128xbf16>, vector<512x128xf32> -> vector<512x128xf32>
    %c0_3 = arith.constant 0 : index
    %c0_4 = arith.constant 0 : index
    %3 = vector.load %arg3[%c0_3, %c0_4] : memref<1x128xf32, #tpu.memory_space<vmem>>, vector<1x128xf32>
    %4 = vector.broadcast %3 : vector<1x128xf32> to vector<512x128xf32>
    %5 = arith.addf %2, %4 : vector<512x128xf32>
    %cst_5 = arith.constant 0.000000e+00 : f32
    %6 = vector.broadcast %cst_5 : f32 to vector<512x128xf32>
    %7 = arith.maximumf %5, %6 : vector<512x128xf32>
    %8 = arith.truncf %7 : vector<512x128xf32> to vector<512x128xbf16>
    %c0_6 = arith.constant 0 : index
    %c0_7 = arith.constant 0 : index
    %9 = vector.load %arg4[%c0_6, %c0_7] : memref<512x128xbf16, #tpu.memory_space<vmem>>, vector<512x128xbf16>
    tpu.vector_store %arg4[%c0_6, %c0_7], %8 {strides = array<i32>} : memref<512x128xbf16, #tpu.memory_space<vmem>>, vector<512x128xbf16>,
    return
  }
  func.func @transform_0(%arg0: i32) -> (i32, i32) {
    %c0_i32 = arith.constant 0 : i32
    %c0_i32_0 = arith.constant 0 : i32
    return %arg0, %c0_i32 : i32, i32
  }
  func.func @transform_1(%arg0: i32) -> (i32, i32) {
    %c0_i32 = arith.constant 0 : i32
    %c0_i32_0 = arith.constant 0 : i32
    %c0_i32_1 = arith.constant 0 : i32
    return %c0_i32, %c0_i32_0 : i32, i32
  }
  func.func @transform_2(%arg0: i32) -> (i32, i32) {
    %c0_i32 = arith.constant 0 : i32
    %c0_i32_0 = arith.constant 0 : i32
    %c0_i32_1 = arith.constant 0 : i32
    return %c0_i32, %c0_i32_0 : i32, i32
  }
  func.func @transform_3(%arg0: i32) -> (i32, i32) {
    %c0_i32 = arith.constant 0 : i32
    %c0_i32_0 = arith.constant 0 : i32
    return %arg0, %c0_i32 : i32, i32
  }
}

module attributes {stable_mosaic.version = 11 : i64} {
  func.func @_mm_bias_res_relu_kernel(%arg0: i32, %arg1: memref<512x128xbf16, #tpu.memory_space<vmem>>, %arg2: memref<128x128xbf16, #tpu.memory_space<vmem>>, %arg3: memref<1x128xf32, #tpu.memory_space<vmem>>, %arg4: memref<512x128xbf16, #tpu.memory_space<vmem>>, %arg5: memref<512x128xf32, #tpu.memory_space<vmem>>) attributes {dimension_semantics = [#tpu.dimension_semantics<parallel>], iteration_bounds = array<i64: 1>, scalar_prefetch = 0 : i64, scratch_operands = 0 : i64, tpu.core_type = #tpu.core_type<tc>, window_params = [{transform_indices = @transform_0, window_bounds = array<i64: 512, 128>}, {pipeline_mode = #tpu.pipeline_mode<synchronous>, transform_indices = @transform_1, window_bounds = array<i64: 128, 128>}, {pipeline_mode = #tpu.pipeline_mode<synchronous>, transform_indices = @transform_2, window_bounds = array<i64: 1, 128>}, {transform_indices = @transform_3, window_bounds = array<i64: 512, 128>}, {transform_indices = @transform_4, window_bounds = array<i64: 512, 128>}]} {
    %c0 = arith.constant 0 : index
    %c0_0 = arith.constant 0 : index
    %0 = vector.load %arg1[%c0, %c0_0] : memref<512x128xbf16, #tpu.memory_space<vmem>>, vector<512x128xbf16>
    %c0_1 = arith.constant 0 : index
    %c0_2 = arith.constant 0 : index
    %1 = vector.load %arg2[%c0_1, %c0_2] : memref<128x128xbf16, #tpu.memory_space<vmem>>, vector<128x128xbf16>
    %cst = arith.constant dense<0.000000e+00> : vector<512x128xf32>
    %2 = tpu.matmul %0, %1, %cst {dimension_numbers = #tpu.dot_dimension_numbers<[1], [0], [0], [1], [0, 0, 1, 1], [], []>} : vector<512x128xbf16>, vector<128x128xbf16>, vector<512x128xf32> -> vector<512x128xf32>
    %c0_3 = arith.constant 0 : index
    %c0_4 = arith.constant 0 : index
    %3 = vector.load %arg3[%c0_3, %c0_4] : memref<1x128xf32, #tpu.memory_space<vmem>>, vector<1x128xf32>
    %4 = vector.broadcast %3 : vector<1x128xf32> to vector<512x128xf32>
    %5 = arith.addf %2, %4 : vector<512x128xf32>
    %c0_5 = arith.constant 0 : index
    %c0_6 = arith.constant 0 : index
    %6 = vector.load %arg4[%c0_5, %c0_6] : memref<512x128xbf16, #tpu.memory_space<vmem>>, vector<512x128xbf16>
    %7 = arith.extf %6 : vector<512x128xbf16> to vector<512x128xf32>
    %8 = arith.addf %5, %7 : vector<512x128xf32>
    %cst_7 = arith.constant 0.000000e+00 : f32
    %9 = vector.broadcast %cst_7 : f32 to vector<512x128xf32>
    %10 = arith.maximumf %8, %9 : vector<512x128xf32>
    %c0_8 = arith.constant 0 : index
    %c0_9 = arith.constant 0 : index
    %11 = vector.load %arg5[%c0_8, %c0_9] : memref<512x128xf32, #tpu.memory_space<vmem>>, vector<512x128xf32>
    tpu.vector_store %arg5[%c0_8, %c0_9], %10 {strides = array<i32>} : memref<512x128xf32, #tpu.memory_space<vmem>>, vector<512x128xf32>,
    return
  }
  func.func @transform_0(%arg0: i32) -> (i32, i32) {
    %c0_i32 = arith.constant 0 : i32
    %c0_i32_0 = arith.constant 0 : i32
    return %arg0, %c0_i32 : i32, i32
  }
  func.func @transform_1(%arg0: i32) -> (i32, i32) {
    %c0_i32 = arith.constant 0 : i32
    %c0_i32_0 = arith.constant 0 : i32
    %c0_i32_1 = arith.constant 0 : i32
    return %c0_i32, %c0_i32_0 : i32, i32
  }
  func.func @transform_2(%arg0: i32) -> (i32, i32) {
    %c0_i32 = arith.constant 0 : i32
    %c0_i32_0 = arith.constant 0 : i32
    %c0_i32_1 = arith.constant 0 : i32
    return %c0_i32, %c0_i32_0 : i32, i32
  }
  func.func @transform_3(%arg0: i32) -> (i32, i32) {
    %c0_i32 = arith.constant 0 : i32
    %c0_i32_0 = arith.constant 0 : i32
    return %arg0, %c0_i32 : i32, i32
  }
  func.func @transform_4(%arg0: i32) -> (i32, i32) {
    %c0_i32 = arith.constant 0 : i32
    %c0_i32_0 = arith.constant 0 : i32
    return %arg0, %c0_i32 : i32, i32
  }
}

</mosaic_0001>

<llo_original>
// kernel: deform_bottleneck_forward.4
$region0: #{deform_bottleneck_forward.4}
  #allocation0 [shape = 'u32[]', space=smem, size = 0x4, offset = 0x4, fixed_abs, tag = 'smem constant byte address 0x4 - core index']
  #allocation1 [shape = 'u32[144,128]{1,0:T(1,128)}', space=vmem, size = 0x12000, scoped, tag = 'internal scratch']
  %s0 = inlined_call_operand.hbm [shape: bf16[512,16], index: 0, kind: input, shape index: {}]
  %s1 = inlined_call_operand.hbm [shape: bf16[16,128], index: 1, kind: input, shape index: {}]
  %s2 = inlined_call_operand.hbm [shape: f32[1,128], index: 2, kind: input, shape index: {}]
  %s3 = inlined_call_operand.hbm [shape: bf16[512,128], index: 3, kind: output, shape index: {}]
  %s4 = sld [smem:[#allocation0]]
  $region34: #{deform_bottleneck_forward.4} parent=0
    _
  %s6 = ssub.s32 1, %s4
  %s7 = scalar_select 0, %s6, %s4
  $region1: #{deform_bottleneck_forward.4} parent=0
    #allocation2 [shape = 'u8[131072]{0}', space=vmem, size = 0x20000, scoped, tag = 'input window, operand 0, single buffered']
    #allocation3 [shape = 's32[1]{0}', space=sflag, size = 0x4, scoped, tag = 'scoped memory for deform_bottleneck_forward.4']
    #allocation4 [shape = 's32[1]{0}', space=sflag, size = 0x4, scoped, tag = 'scoped memory for deform_bottleneck_forward.4']
    #allocation5 [shape = 'u8[4096]{0}', space=vmem, size = 0x1000, scoped, tag = 'input window, operand 1, single buffered']
    #allocation6 [shape = 's32[1]{0}', space=sflag, size = 0x4, scoped, tag = 'scoped memory for deform_bottleneck_forward.4']
    #allocation7 [shape = 'u8[512]{0}', space=vmem, size = 0x400, scoped, tag = 'input window, operand 2, single buffered']
    #allocation8 [shape = 'u8[131072]{0}', space=vmem, size = 0x20000, scoped, tag = 'output window, operand 0, single buffered']
    %8 = vsyncpa [#allocation3], 0
    %9 = vsyncpa [#allocation6], 0
    %10 = vsyncpa [#allocation4], 0
    // Predicated region
    $region2: #{deform_bottleneck_forward.4} parent=1 // pred_check
      _
    $region3: #{deform_bottleneck_forward.4} parent=1 // pred_check_branch
      %12 = sbr.rel (0) target = $region5
    $region4: #{deform_bottleneck_forward.4} parent=1 // pred_region
      %s14 = ssub.s32 4096, 4096
      %15 = vsyncadd [#allocation3], %s14
      %s16 = sshll.u32 [#allocation2], 4
      %s17 = int_to_ptr.vmem [resolvable:$true] %s16
      %22 = dma.hbm_to_vmem [thread:$0]  %s0, 4096, %s17, [#allocation3], 64, 64, 4
    $region5: #{deform_bottleneck_forward.4} parent=1 // pred_fallthru
      _
    // Predicated region
    $region6: #{deform_bottleneck_forward.4} parent=1 // pred_check
      _
    $region7: #{deform_bottleneck_forward.4} parent=1 // pred_check_branch
      %24 = sbr.rel (0) target = $region9
    $region8: #{deform_bottleneck_forward.4} parent=1 // pred_region
      %s26 = ssub.s32 128, 128
      %27 = vsyncadd [#allocation6], %s26
      %s28 = sshll.u32 [#allocation5], 4
      %s29 = int_to_ptr.vmem [resolvable:$true] %s28
      %34 = dma.hbm_to_vmem [thread:$0]  %s1, 128, %s29, [#allocation6], 64, 64, 4
    $region9: #{deform_bottleneck_forward.4} parent=1 // pred_fallthru
      _
    // Predicated region
    $region10: #{deform_bottleneck_forward.4} parent=1 // pred_check
      _
    $region11: #{deform_bottleneck_forward.4} parent=1 // pred_check_branch
      %36 = sbr.rel (0) target = $region13
    $region12: #{deform_bottleneck_forward.4} parent=1 // pred_region
      %s38 = ssub.s32 16, 16
      %39 = vsyncadd [#allocation6], %s38
      %s41 = sshll.u32 [#allocation7], 4
      %s42 = int_to_ptr.vmem [resolvable:$true] %s41
      %44 = dma.hbm_to_vmem [thread:$0]  %s2, 16, %s42, [#allocation6]
    $region13: #{deform_bottleneck_forward.4} parent=1 // pred_fallthru
      _
    // Predicated region
    $region14: #{deform_bottleneck_forward.4} parent=1 // pred_check
      _
    $region15: #{deform_bottleneck_forward.4} parent=1 // pred_check_branch
      %46 = sbr.rel (0) target = $region17
    $region16: #{deform_bottleneck_forward.4} parent=1 // pred_region
      %47 = dma.done [#allocation3], 4096
    $region17: #{deform_bottleneck_forward.4} parent=1 // pred_fallthru
      _
    // Predicated region
    $region18: #{deform_bottleneck_forward.4} parent=1 // pred_check
      _
    $region19: #{deform_bottleneck_forward.4} parent=1 // pred_check_branch
      %49 = sbr.rel (0) target = $region21
    $region20: #{deform_bottleneck_forward.4} parent=1 // pred_region
      %50 = dma.done [#allocation6], 128
    $region21: #{deform_bottleneck_forward.4} parent=1 // pred_fallthru
      _
    // Predicated region
    $region22: #{deform_bottleneck_forward.4} parent=1 // pred_check
      _
    $region23: #{deform_bottleneck_forward.4} parent=1 // pred_check_branch
      %52 = sbr.rel (0) target = $region25
    $region24: #{deform_bottleneck_forward.4} parent=1 // pred_region
      %53 = dma.done [#allocation6], 16
    $region25: #{deform_bottleneck_forward.4} parent=1 // pred_fallthru
      _
    %v55 = vld [vmem:[#allocation2] sm:$0xf]
    %v56 = vld [vmem:[#allocation2 + $0x4] sm:$0xf]
    %v57 = vld [vmem:[#allocation2 + $0x8] sm:$0xf]
    %v58 = vld [vmem:[#allocation2 + $0xc] sm:$0xf]
    %v59 = vld [vmem:[#allocation2 + $0x10] sm:$0xf]
    %v60 = vld [vmem:[#allocation2 + $0x14] sm:$0xf]
    %v61 = vld [vmem:[#allocation2 + $0x18] sm:$0xf]
    %v62 = vld [vmem:[#allocation2 + $0x1c] sm:$0xf]
    %v63 = vld [vmem:[#allocation2 + $0x20] sm:$0xf]
    %v64 = vld [vmem:[#allocation2 + $0x24] sm:$0xf]
    %v65 = vld [vmem:[#allocation2 + $0x28] sm:$0xf]
    %v66 = vld [vmem:[#allocation2 + $0x2c] sm:$0xf]
    %v67 = vld [vmem:[#allocation2 + $0x30] sm:$0xf]
    %v68 = vld [vmem:[#allocation2 + $0x34] sm:$0xf]
    %v69 = vld [vmem:[#allocation2 + $0x38] sm:$0xf]
    %v70 = vld [vmem:[#allocation2 + $0x3c] sm:$0xf]
    %v71 = vld [vmem:[#allocation2 + $0x40] sm:$0xf]
    %v72 = vld [vmem:[#allocation2 + $0x44] sm:$0xf]
    %v73 = vld [vmem:[#allocation2 + $0x48] sm:$0xf]
    %v74 = vld [vmem:[#allocation2 + $0x4c] sm:$0xf]
    %v75 = vld [vmem:[#allocation2 + $0x50] sm:$0xf]
    %v76 = vld [vmem:[#allocation2 + $0x54] sm:$0xf]
    %v77 = vld [vmem:[#allocation2 + $0x58] sm:$0xf]
    %v78 = vld [vmem:[#allocation2 + $0x5c] sm:$0xf]
    %v79 = vld [vmem:[#allocation2 + $0x60] sm:$0xf]
    %v80 = vld [vmem:[#allocation2 + $0x64] sm:$0xf]
    %v81 = vld [vmem:[#allocation2 + $0x68] sm:$0xf]
    %v82 = vld [vmem:[#allocation2 + $0x6c] sm:$0xf]
    %v83 = vld [vmem:[#allocation2 + $0x70] sm:$0xf]
    %v84 = vld [vmem:[#allocation2 + $0x74] sm:$0xf]
    %v85 = vld [vmem:[#allocation2 + $0x78] sm:$0xf]
    %v86 = vld [vmem:[#allocation2 + $0x7c] sm:$0xf]
    %v87 = vld [vmem:[#allocation2 + $0x80] sm:$0xf]
    %v88 = vld [vmem:[#allocation2 + $0x84] sm:$0xf]
    %v89 = vld [vmem:[#allocation2 + $0x88] sm:$0xf]
    %v90 = vld [vmem:[#allocation2 + $0x8c] sm:$0xf]
    %v91 = vld [vmem:[#allocation2 + $0x90] sm:$0xf]
    %v92 = vld [vmem:[#allocation2 + $0x94] sm:$0xf]
    %v93 = vld [vmem:[#allocation2 + $0x98] sm:$0xf]
    %v94 = vld [vmem:[#allocation2 + $0x9c] sm:$0xf]
    %v95 = vld [vmem:[#allocation2 + $0xa0] sm:$0xf]
    %v96 = vld [vmem:[#allocation2 + $0xa4] sm:$0xf]
    %v97 = vld [vmem:[#allocation2 + $0xa8] sm:$0xf]
    %v98 = vld [vmem:[#allocation2 + $0xac] sm:$0xf]
    %v99 = vld [vmem:[#allocation2 + $0xb0] sm:$0xf]
    %v100 = vld [vmem:[#allocation2 + $0xb4] sm:$0xf]
    %v101 = vld [vmem:[#allocation2 + $0xb8] sm:$0xf]
    %v102 = vld [vmem:[#allocation2 + $0xbc] sm:$0xf]
    %v103 = vld [vmem:[#allocation2 + $0xc0] sm:$0xf]
    %v104 = vld [vmem:[#allocation2 + $0xc4] sm:$0xf]
    %v105 = vld [vmem:[#allocation2 + $0xc8] sm:$0xf]
    %v106 = vld [vmem:[#allocation2 + $0xcc] sm:$0xf]
    %v107 = vld [vmem:[#allocation2 + $0xd0] sm:$0xf]
    %v108 = vld [vmem:[#allocation2 + $0xd4] sm:$0xf]
    %v109 = vld [vmem:[#allocation2 + $0xd8] sm:$0xf]
    %v110 = vld [vmem:[#allocation2 + $0xdc] sm:$0xf]
    %v111 = vld [vmem:[#allocation2 + $0xe0] sm:$0xf]
    %v112 = vld [vmem:[#allocation2 + $0xe4] sm:$0xf]
    %v113 = vld [vmem:[#allocation2 + $0xe8] sm:$0xf]
    %v114 = vld [vmem:[#allocation2 + $0xec] sm:$0xf]
    %v115 = vld [vmem:[#allocation2 + $0xf0] sm:$0xf]
    %v116 = vld [vmem:[#allocation2 + $0xf4] sm:$0xf]
    %v117 = vld [vmem:[#allocation2 + $0xf8] sm:$0xf]
    %v118 = vld [vmem:[#allocation2 + $0xfc] sm:$0xf]
    %v119 = vld [vmem:[#allocation5] sm:$0xf]
    %v120 = vld [vmem:[#allocation5 + $0x4] sm:$0xf]
    %v121 = vld [vmem:[#allocation7] sm:$0x1]
    %v123 = vlaneseq
    %v124 = vshrl.u32 %v123, 7
    %v125 = vsub.s32 0, %v124
    %v126 = vrot.slane %v121, %v125
    %v192 = vunpack.c.l.b16 %v55
    %v193 = vunpack.c.l.b16 %v56
    %v194 = vunpack.c.l.b16 %v57
    %v195 = vunpack.c.l.b16 %v58
    %v196 = vunpack.c.l.b16 %v59
    %v197 = vunpack.c.l.b16 %v60
    %v198 = vunpack.c.l.b16 %v61
    %v199 = vunpack.c.l.b16 %v62
    %v200 = vunpack.c.l.b16 %v63
    %v201 = vunpack.c.l.b16 %v64
    %v202 = vunpack.c.l.b16 %v65
    %v203 = vunpack.c.l.b16 %v66
    %v204 = vunpack.c.l.b16 %v67
    %v205 = vunpack.c.l.b16 %v68
    %v206 = vunpack.c.l.b16 %v69
    %v207 = vunpack.c.l.b16 %v70
    %v208 = vunpack.c.l.b16 %v71
    %v209 = vunpack.c.l.b16 %v72
    %v210 = vunpack.c.l.b16 %v73
    %v211 = vunpack.c.l.b16 %v74
    %v212 = vunpack.c.l.b16 %v75
    %v213 = vunpack.c.l.b16 %v76
    %v214 = vunpack.c.l.b16 %v77
    %v215 = vunpack.c.l.b16 %v78
    %v216 = vunpack.c.l.b16 %v79
    %v217 = vunpack.c.l.b16 %v80
    %v218 = vunpack.c.l.b16 %v81
    %v219 = vunpack.c.l.b16 %v82
    %v220 = vunpack.c.l.b16 %v83
    %v221 = vunpack.c.l.b16 %v84
    %v222 = vunpack.c.l.b16 %v85
    %v223 = vunpack.c.l.b16 %v86
    %v224 = vunpack.c.l.b16 %v87
    %v225 = vunpack.c.l.b16 %v88
    %v226 = vunpack.c.l.b16 %v89
    %v227 = vunpack.c.l.b16 %v90
    %v228 = vunpack.c.l.b16 %v91
    %v229 = vunpack.c.l.b16 %v92
    %v230 = vunpack.c.l.b16 %v93
    %v231 = vunpack.c.l.b16 %v94
    %v232 = vunpack.c.l.b16 %v95
    %v233 = vunpack.c.l.b16 %v96
    %v234 = vunpack.c.l.b16 %v97
    %v235 = vunpack.c.l.b16 %v98
    %v236 = vunpack.c.l.b16 %v99
    %v237 = vunpack.c.l.b16 %v100
    %v238 = vunpack.c.l.b16 %v101
    %v239 = vunpack.c.l.b16 %v102
    %v240 = vunpack.c.l.b16 %v103
    %v241 = vunpack.c.l.b16 %v104
    %v242 = vunpack.c.l.b16 %v105
    %v243 = vunpack.c.l.b16 %v106
    %v244 = vunpack.c.l.b16 %v107
    %v245 = vunpack.c.l.b16 %v108
    %v246 = vunpack.c.l.b16 %v109
    %v247 = vunpack.c.l.b16 %v110
    %v248 = vunpack.c.l.b16 %v111
    %v249 = vunpack.c.l.b16 %v112
    %v250 = vunpack.c.l.b16 %v113
    %v251 = vunpack.c.l.b16 %v114
    %v252 = vunpack.c.l.b16 %v115
    %v253 = vunpack.c.l.b16 %v116
    %v254 = vunpack.c.l.b16 %v117
    %v255 = vunpack.c.l.b16 %v118
    %v256 = vpack.c.b16 %v193, %v192
    %v257 = vpack.c.b16 %v195, %v194
    %v258 = vpack.c.b16 %v197, %v196
    %v259 = vpack.c.b16 %v199, %v198
    %v260 = vpack.c.b16 %v201, %v200
    %v261 = vpack.c.b16 %v203, %v202
    %v262 = vpack.c.b16 %v205, %v204
    %v263 = vpack.c.b16 %v207, %v206
    %v264 = vpack.c.b16 %v209, %v208
    %v265 = vpack.c.b16 %v211, %v210
    %v266 = vpack.c.b16 %v213, %v212
    %v267 = vpack.c.b16 %v215, %v214
    %v268 = vpack.c.b16 %v217, %v216
    %v269 = vpack.c.b16 %v219, %v218
    %v270 = vpack.c.b16 %v221, %v220
    %v271 = vpack.c.b16 %v223, %v222
    %v272 = vpack.c.b16 %v225, %v224
    %v273 = vpack.c.b16 %v227, %v226
    %v274 = vpack.c.b16 %v229, %v228
    %v275 = vpack.c.b16 %v231, %v230
    %v276 = vpack.c.b16 %v233, %v232
    %v277 = vpack.c.b16 %v235, %v234
    %v278 = vpack.c.b16 %v237, %v236
    %v279 = vpack.c.b16 %v239, %v238
    %v280 = vpack.c.b16 %v241, %v240
    %v281 = vpack.c.b16 %v243, %v242
    %v282 = vpack.c.b16 %v245, %v244
    %v283 = vpack.c.b16 %v247, %v246
    %v284 = vpack.c.b16 %v249, %v248
    %v285 = vpack.c.b16 %v251, %v250
    %v286 = vpack.c.b16 %v253, %v252
    %v287 = vpack.c.b16 %v255, %v254
    %v290 = vunpack.c.l.b16 %v119
    %v291 = vunpack.c.l.b16 %v120
    %v292 = vpack.c.b16 %v291, %v290
    %vm294 = vcmask 130048
    %v296 = vsel %vm294, %v256, 0
    %v299 = vsel %vm294, %v257, 0
    %v302 = vsel %vm294, %v258, 0
    %v305 = vsel %vm294, %v259, 0
    %v308 = vsel %vm294, %v260, 0
    %v311 = vsel %vm294, %v261, 0
    %v314 = vsel %vm294, %v262, 0
    %v317 = vsel %vm294, %v263, 0
    %v320 = vsel %vm294, %v264, 0
    %v323 = vsel %vm294, %v265, 0
    %v326 = vsel %vm294, %v266, 0
    %v329 = vsel %vm294, %v267, 0
    %v332 = vsel %vm294, %v268, 0
    %v335 = vsel %vm294, %v269, 0
    %v338 = vsel %vm294, %v270, 0
    %v341 = vsel %vm294, %v271, 0
    %v344 = vsel %vm294, %v272, 0
    %v347 = vsel %vm294, %v273, 0
    %v350 = vsel %vm294, %v274, 0
    %v353 = vsel %vm294, %v275, 0
    %v356 = vsel %vm294, %v276, 0
    %v359 = vsel %vm294, %v277, 0
    %v362 = vsel %vm294, %v278, 0
    %v365 = vsel %vm294, %v279, 0
    %v368 = vsel %vm294, %v280, 0
    %v371 = vsel %vm294, %v281, 0
    %v374 = vsel %vm294, %v282, 0
    %v377 = vsel %vm294, %v283, 0
    %v380 = vsel %vm294, %v284, 0
    %v383 = vsel %vm294, %v285, 0
    %v386 = vsel %vm294, %v286, 0
    %v389 = vsel %vm294, %v287, 0
    %391 = vmatprep.subr.bf16.mxu0 0
    %392 = vmatpush1.bf16.msra.mxu0 %v292
    %393 = vmatprep.subr.bf16.mxu0 0
    %394 = vmatpush1.bf16.msra.mxu0 0
    %395 = vmatprep.subr.bf16.mxu0 0
    %396 = vmatpush1.bf16.msra.mxu0 0
    %397 = vmatprep.subr.bf16.mxu0 0
    %398 = vmatpush1.bf16.msra.mxu0 0
    %399 = vmatprep.subr.bf16.mxu0 0
    %400 = vmatpush1.bf16.msra.mxu0 0
    %401 = vmatprep.subr.bf16.mxu0 0
    %402 = vmatpush1.bf16.msra.mxu0 0
    %403 = vmatprep.subr.bf16.mxu0 0
    %404 = vmatpush1.bf16.msra.mxu0 0
    %405 = vmatprep.subr.bf16.mxu0 0
    %406 = vmatpush1.bf16.msra.mxu0 0
    %407 = vmatprep.subr.bf16.mxu0 0
    %408 = vmatpush1.bf16.msra.mxu0 0
    %409 = vmatprep.subr.bf16.mxu0 0
    %410 = vmatpush1.bf16.msra.mxu0 0
    %411 = vmatprep.subr.bf16.mxu0 0
    %412 = vmatpush1.bf16.msra.mxu0 0
    %413 = vmatprep.subr.bf16.mxu0 0
    %414 = vmatpush1.bf16.msra.mxu0 0
    %415 = vmatprep.subr.bf16.mxu0 0
    %416 = vmatpush1.bf16.msra.mxu0 0
    %417 = vmatprep.subr.bf16.mxu0 0
    %418 = vmatpush1.bf16.msra.mxu0 0
    %419 = vmatprep.subr.bf16.mxu0 0
    %420 = vmatpush1.bf16.msra.mxu0 0
    %421 = vmatprep.subr.bf16.mxu0 0
    %422 = vmatpush1.bf16.msra.mxu0 0
    %423 = vmatprep.mubr.bf16.mxu0 0
    %424 = vmatmul.mubr.bf16.gmra.mrb[0].mxu0 %v296
    %v425 = vpop.f32.mrb[0].mxu0
    %v426 = vadd.f32 %v126, %v425
    %v427 = vpop.f32.mrb[0].mxu0
    %v428 = vpop.f32.mrb[0].mxu0
    %v429 = vadd.f32 %v126, %v428
    %v430 = vpop.f32.mrb[0].mxu0
    %431 = vmatprep.mubr.bf16.mxu0 0
    %432 = vmatmul.mubr.bf16.gmra.mrb[0].mxu0 %v299
    %v433 = vpop.f32.mrb[0].mxu0
    %v434 = vadd.f32 %v126, %v433
    %v435 = vpop.f32.mrb[0].mxu0
    %v436 = vpop.f32.mrb[0].mxu0
    %v437 = vadd.f32 %v126, %v436
    %v438 = vpop.f32.mrb[0].mxu0
    %439 = vmatprep.mubr.bf16.mxu0 0
    %440 = vmatmul.mubr.bf16.gmra.mrb[0].mxu0 %v302
    %v441 = vpop.f32.mrb[0].mxu0
    %v442 = vadd.f32 %v126, %v441
    %v443 = vpop.f32.mrb[0].mxu0
    %v444 = vpop.f32.mrb[0].mxu0
    %v445 = vadd.f32 %v126, %v444
    %v446 = vpop.f32.mrb[0].mxu0
    %447 = vmatprep.mubr.bf16.mxu0 0
    %448 = vmatmul.mubr.bf16.gmra.mrb[0].mxu0 %v305
    %v449 = vpop.f32.mrb[0].mxu0
    %v450 = vadd.f32 %v126, %v449
    %v451 = vpop.f32.mrb[0].mxu0
    %v452 = vpop.f32.mrb[0].mxu0
    %v453 = vadd.f32 %v126, %v452
    %v454 = vpop.f32.mrb[0].mxu0
    %455 = vmatprep.mubr.bf16.mxu0 0
    %456 = vmatmul.mubr.bf16.gmra.mrb[0].mxu0 %v308
    %v457 = vpop.f32.mrb[0].mxu0
    %v458 = vadd.f32 %v126, %v457
    %v459 = vpop.f32.mrb[0].mxu0
    %v460 = vpop.f32.mrb[0].mxu0
    %v461 = vadd.f32 %v126, %v460
    %v462 = vpop.f32.mrb[0].mxu0
    %463 = vmatprep.mubr.bf16.mxu0 0
    %464 = vmatmul.mubr.bf16.gmra.mrb[0].mxu0 %v311
    %v465 = vpop.f32.mrb[0].mxu0
    %v466 = vadd.f32 %v126, %v465
    %v467 = vpop.f32.mrb[0].mxu0
    %v468 = vpop.f32.mrb[0].mxu0
    %v469 = vadd.f32 %v126, %v468
    %v470 = vpop.f32.mrb[0].mxu0
    %471 = vmatprep.mubr.bf16.mxu0 0
    %472 = vmatmul.mubr.bf16.gmra.mrb[0].mxu0 %v314
    %v473 = vpop.f32.mrb[0].mxu0
    %v474 = vadd.f32 %v126, %v473
    %v475 = vpop.f32.mrb[0].mxu0
    %v476 = vpop.f32.mrb[0].mxu0
    %v477 = vadd.f32 %v126, %v476
    %v478 = vpop.f32.mrb[0].mxu0
    %479 = vmatprep.mubr.bf16.mxu0 0
    %480 = vmatmul.mubr.bf16.gmra.mrb[0].mxu0 %v317
    %v481 = vpop.f32.mrb[0].mxu0
    %v482 = vadd.f32 %v126, %v481
    %v483 = vpop.f32.mrb[0].mxu0
    %v484 = vpop.f32.mrb[0].mxu0
    %v485 = vadd.f32 %v126, %v484
    %v486 = vpop.f32.mrb[0].mxu0
    %487 = vmatprep.mubr.bf16.mxu0 0
    %488 = vmatmul.mubr.bf16.gmra.mrb[0].mxu0 %v320
    %v489 = vpop.f32.mrb[0].mxu0
    %v490 = vadd.f32 %v126, %v489
    %v491 = vpop.f32.mrb[0].mxu0
    %v492 = vpop.f32.mrb[0].mxu0
    %v493 = vadd.f32 %v126, %v492
    %v494 = vpop.f32.mrb[0].mxu0
    %495 = vmatprep.mubr.bf16.mxu0 0
    %496 = vmatmul.mubr.bf16.gmra.mrb[0].mxu0 %v323
    %v497 = vpop.f32.mrb[0].mxu0
    %v498 = vadd.f32 %v126, %v497
    %v499 = vpop.f32.mrb[0].mxu0
    %v500 = vpop.f32.mrb[0].mxu0
    %v501 = vadd.f32 %v126, %v500
    %v502 = vpop.f32.mrb[0].mxu0
    %503 = vmatprep.mubr.bf16.mxu0 0
    %504 = vmatmul.mubr.bf16.gmra.mrb[0].mxu0 %v326
    %v505 = vpop.f32.mrb[0].mxu0
    %v506 = vadd.f32 %v126, %v505
    %v507 = vpop.f32.mrb[0].mxu0
    %v508 = vpop.f32.mrb[0].mxu0
    %v509 = vadd.f32 %v126, %v508
    %v510 = vpop.f32.mrb[0].mxu0
    %511 = vmatprep.mubr.bf16.mxu0 0
    %512 = vmatmul.mubr.bf16.gmra.mrb[0].mxu0 %v329
    %v513 = vpop.f32.mrb[0].mxu0
    %v514 = vadd.f32 %v126, %v513
    %v515 = vpop.f32.mrb[0].mxu0
    %v516 = vpop.f32.mrb[0].mxu0
    %v517 = vadd.f32 %v126, %v516
    %v518 = vpop.f32.mrb[0].mxu0
    %519 = vmatprep.mubr.bf16.mxu0 0
    %520 = vmatmul.mubr.bf16.gmra.mrb[0].mxu0 %v332
    %v521 = vpop.f32.mrb[0].mxu0
    %v522 = vadd.f32 %v126, %v521
    %v523 = vpop.f32.mrb[0].mxu0
    %v524 = vpop.f32.mrb[0].mxu0
    %v525 = vadd.f32 %v126, %v524
    %v526 = vpop.f32.mrb[0].mxu0
    %527 = vmatprep.mubr.bf16.mxu0 0
    %528 = vmatmul.mubr.bf16.gmra.mrb[0].mxu0 %v335
    %v529 = vpop.f32.mrb[0].mxu0
    %v530 = vadd.f32 %v126, %v529
    %v531 = vpop.f32.mrb[0].mxu0
    %v532 = vpop.f32.mrb[0].mxu0
    %v533 = vadd.f32 %v126, %v532
    %v534 = vpop.f32.mrb[0].mxu0
    %535 = vmatprep.mubr.bf16.mxu0 0
    %536 = vmatmul.mubr.bf16.gmra.mrb[0].mxu0 %v338
    %v537 = vpop.f32.mrb[0].mxu0
    %v538 = vadd.f32 %v126, %v537
    %v539 = vpop.f32.mrb[0].mxu0
    %v540 = vpop.f32.mrb[0].mxu0
    %v541 = vadd.f32 %v126, %v540
    %v542 = vpop.f32.mrb[0].mxu0
    %543 = vmatprep.mubr.bf16.mxu0 0
    %544 = vmatmul.mubr.bf16.gmra.mrb[0].mxu0 %v341
    %v545 = vpop.f32.mrb[0].mxu0
    %v546 = vadd.f32 %v126, %v545
    %v547 = vpop.f32.mrb[0].mxu0
    %v548 = vpop.f32.mrb[0].mxu0
    %v549 = vadd.f32 %v126, %v548
    %v550 = vpop.f32.mrb[0].mxu0
    %551 = vmatprep.mubr.bf16.mxu0 0
    %552 = vmatmul.mubr.bf16.gmra.mrb[0].mxu0 %v344
    %v553 = vpop.f32.mrb[0].mxu0
    %v554 = vadd.f32 %v126, %v553
    %v555 = vpop.f32.mrb[0].mxu0
    %v556 = vpop.f32.mrb[0].mxu0
    %v557 = vadd.f32 %v126, %v556
    %v558 = vpop.f32.mrb[0].mxu0
    %559 = vmatprep.mubr.bf16.mxu0 0
    %560 = vmatmul.mubr.bf16.gmra.mrb[0].mxu0 %v347
    %v561 = vpop.f32.mrb[0].mxu0
    %v562 = vadd.f32 %v126, %v561
    %v563 = vpop.f32.mrb[0].mxu0
    %v564 = vpop.f32.mrb[0].mxu0
    %v565 = vadd.f32 %v126, %v564
    %v566 = vpop.f32.mrb[0].mxu0
    %567 = vmatprep.mubr.bf16.mxu0 0
    %568 = vmatmul.mubr.bf16.gmra.mrb[0].mxu0 %v350
    %v569 = vpop.f32.mrb[0].mxu0
    %v570 = vadd.f32 %v126, %v569
    %v571 = vpop.f32.mrb[0].mxu0
    %v572 = vpop.f32.mrb[0].mxu0
    %v573 = vadd.f32 %v126, %v572
    %v574 = vpop.f32.mrb[0].mxu0
    %575 = vmatprep.mubr.bf16.mxu0 0
    %576 = vmatmul.mubr.bf16.gmra.mrb[0].mxu0 %v353
    %v577 = vpop.f32.mrb[0].mxu0
    %v578 = vadd.f32 %v126, %v577
    %v579 = vpop.f32.mrb[0].mxu0
    %v580 = vpop.f32.mrb[0].mxu0
    %v581 = vadd.f32 %v126, %v580
    %v582 = vpop.f32.mrb[0].mxu0
    %583 = vmatprep.mubr.bf16.mxu0 0
    %584 = vmatmul.mubr.bf16.gmra.mrb[0].mxu0 %v356
    %v585 = vpop.f32.mrb[0].mxu0
    %v586 = vadd.f32 %v126, %v585
    %v587 = vpop.f32.mrb[0].mxu0
    %v588 = vpop.f32.mrb[0].mxu0
    %v589 = vadd.f32 %v126, %v588
    %v590 = vpop.f32.mrb[0].mxu0
    %591 = vmatprep.mubr.bf16.mxu0 0
    %592 = vmatmul.mubr.bf16.gmra.mrb[0].mxu0 %v359
    %v593 = vpop.f32.mrb[0].mxu0
    %v594 = vadd.f32 %v126, %v593
    %v595 = vpop.f32.mrb[0].mxu0
    %v596 = vpop.f32.mrb[0].mxu0
    %v597 = vadd.f32 %v126, %v596
    %v598 = vpop.f32.mrb[0].mxu0
    %599 = vmatprep.mubr.bf16.mxu0 0
    %600 = vmatmul.mubr.bf16.gmra.mrb[0].mxu0 %v362
    %v601 = vpop.f32.mrb[0].mxu0
    %v602 = vadd.f32 %v126, %v601
    %v603 = vpop.f32.mrb[0].mxu0
    %v604 = vpop.f32.mrb[0].mxu0
    %v605 = vadd.f32 %v126, %v604
    %v606 = vpop.f32.mrb[0].mxu0
    %607 = vmatprep.mubr.bf16.mxu0 0
    %608 = vmatmul.mubr.bf16.gmra.mrb[0].mxu0 %v365
    %v609 = vpop.f32.mrb[0].mxu0
    %v610 = vadd.f32 %v126, %v609
    %v611 = vpop.f32.mrb[0].mxu0
    %v612 = vpop.f32.mrb[0].mxu0
    %v613 = vadd.f32 %v126, %v612
    %v614 = vpop.f32.mrb[0].mxu0
    %615 = vmatprep.mubr.bf16.mxu0 0
    %616 = vmatmul.mubr.bf16.gmra.mrb[0].mxu0 %v368
    %v617 = vpop.f32.mrb[0].mxu0
    %v618 = vadd.f32 %v126, %v617
    %v619 = vpop.f32.mrb[0].mxu0
    %v620 = vpop.f32.mrb[0].mxu0
    %v621 = vadd.f32 %v126, %v620
    %v622 = vpop.f32.mrb[0].mxu0
    %623 = vmatprep.mubr.bf16.mxu0 0
    %624 = vmatmul.mubr.bf16.gmra.mrb[0].mxu0 %v371
    %v625 = vpop.f32.mrb[0].mxu0
    %v626 = vadd.f32 %v126, %v625
    %v627 = vpop.f32.mrb[0].mxu0
    %v628 = vpop.f32.mrb[0].mxu0
    %v629 = vadd.f32 %v126, %v628
    %v630 = vpop.f32.mrb[0].mxu0
    %631 = vmatprep.mubr.bf16.mxu0 0
    %632 = vmatmul.mubr.bf16.gmra.mrb[0].mxu0 %v374
    %v633 = vpop.f32.mrb[0].mxu0
    %v634 = vadd.f32 %v126, %v633
    %v635 = vpop.f32.mrb[0].mxu0
    %v636 = vpop.f32.mrb[0].mxu0
    %v637 = vadd.f32 %v126, %v636
    %v638 = vpop.f32.mrb[0].mxu0
    %639 = vmatprep.mubr.bf16.mxu0 0
    %640 = vmatmul.mubr.bf16.gmra.mrb[0].mxu0 %v377
    %v641 = vpop.f32.mrb[0].mxu0
    %v642 = vadd.f32 %v126, %v641
    %v643 = vpop.f32.mrb[0].mxu0
    %v644 = vpop.f32.mrb[0].mxu0
    %v645 = vadd.f32 %v126, %v644
    %v646 = vpop.f32.mrb[0].mxu0
    %647 = vmatprep.mubr.bf16.mxu0 0
    %648 = vmatmul.mubr.bf16.gmra.mrb[0].mxu0 %v380
    %v649 = vpop.f32.mrb[0].mxu0
    %v650 = vadd.f32 %v126, %v649
    %v651 = vpop.f32.mrb[0].mxu0
    %v652 = vpop.f32.mrb[0].mxu0
    %v653 = vadd.f32 %v126, %v652
    %v654 = vpop.f32.mrb[0].mxu0
    %655 = vmatprep.mubr.bf16.mxu0 0
    %656 = vmatmul.mubr.bf16.gmra.mrb[0].mxu0 %v383
    %v657 = vpop.f32.mrb[0].mxu0
    %v658 = vadd.f32 %v126, %v657
    %v659 = vpop.f32.mrb[0].mxu0
    %v660 = vpop.f32.mrb[0].mxu0
    %v661 = vadd.f32 %v126, %v660
    %v662 = vpop.f32.mrb[0].mxu0
    %663 = vmatprep.mubr.bf16.mxu0 0
    %664 = vmatmul.mubr.bf16.gmra.mrb[0].mxu0 %v386
    %v665 = vpop.f32.mrb[0].mxu0
    %v666 = vadd.f32 %v126, %v665
    %v667 = vpop.f32.mrb[0].mxu0
    %v668 = vpop.f32.mrb[0].mxu0
    %v669 = vadd.f32 %v126, %v668
    %v670 = vpop.f32.mrb[0].mxu0
    %671 = vmatprep.mubr.bf16.mxu0 0
    %672 = vmatmul.mubr.bf16.gmra.mrb[0].mxu0 %v389
    %v673 = vpop.f32.mrb[0].mxu0
    %v674 = vadd.f32 %v126, %v673
    %v675 = vpop.f32.mrb[0].mxu0
    %v676 = vpop.f32.mrb[0].mxu0
    %v677 = vadd.f32 %v126, %v676
    %v678 = vpop.f32.mrb[0].mxu0
    %679 = vdwg.mxu0
    %v680 = vmax.f32 %v426, 0.0
    %v681 = vmax.f32 %v429, 0.0
    %v682 = vmax.f32 %v434, 0.0
    %v683 = vmax.f32 %v437, 0.0
    %v684 = vmax.f32 %v442, 0.0
    %v685 = vmax.f32 %v445, 0.0
    %v686 = vmax.f32 %v450, 0.0
    %v687 = vmax.f32 %v453, 0.0
    %v688 = vmax.f32 %v458, 0.0
    %v689 = vmax.f32 %v461, 0.0
    %v690 = vmax.f32 %v466, 0.0
    %v691 = vmax.f32 %v469, 0.0
    %v692 = vmax.f32 %v474, 0.0
    %v693 = vmax.f32 %v477, 0.0
    %v694 = vmax.f32 %v482, 0.0
    %v695 = vmax.f32 %v485, 0.0
    %v696 = vmax.f32 %v490, 0.0
    %v697 = vmax.f32 %v493, 0.0
    %v698 = vmax.f32 %v498, 0.0
    %v699 = vmax.f32 %v501, 0.0
    %v700 = vmax.f32 %v506, 0.0
    %v701 = vmax.f32 %v509, 0.0
    %v702 = vmax.f32 %v514, 0.0
    %v703 = vmax.f32 %v517, 0.0
    %v704 = vmax.f32 %v522, 0.0
    %v705 = vmax.f32 %v525, 0.0
    %v706 = vmax.f32 %v530, 0.0
    %v707 = vmax.f32 %v533, 0.0
    %v708 = vmax.f32 %v538, 0.0
    %v709 = vmax.f32 %v541, 0.0
    %v710 = vmax.f32 %v546, 0.0
    %v711 = vmax.f32 %v549, 0.0
    %v712 = vmax.f32 %v554, 0.0
    %v713 = vmax.f32 %v557, 0.0
    %v714 = vmax.f32 %v562, 0.0
    %v715 = vmax.f32 %v565, 0.0
    %v716 = vmax.f32 %v570, 0.0
    %v717 = vmax.f32 %v573, 0.0
    %v718 = vmax.f32 %v578, 0.0
    %v719 = vmax.f32 %v581, 0.0
    %v720 = vmax.f32 %v586, 0.0
    %v721 = vmax.f32 %v589, 0.0
    %v722 = vmax.f32 %v594, 0.0
    %v723 = vmax.f32 %v597, 0.0
    %v724 = vmax.f32 %v602, 0.0
    %v725 = vmax.f32 %v605, 0.0
    %v726 = vmax.f32 %v610, 0.0
    %v727 = vmax.f32 %v613, 0.0
    %v728 = vmax.f32 %v618, 0.0
    %v729 = vmax.f32 %v621, 0.0
    %v730 = vmax.f32 %v626, 0.0
    %v731 = vmax.f32 %v629, 0.0
    %v732 = vmax.f32 %v634, 0.0
    %v733 = vmax.f32 %v637, 0.0
    %v734 = vmax.f32 %v642, 0.0
    %v735 = vmax.f32 %v645, 0.0
    %v736 = vmax.f32 %v650, 0.0
    %v737 = vmax.f32 %v653, 0.0
    %v738 = vmax.f32 %v658, 0.0
    %v739 = vmax.f32 %v661, 0.0
    %v740 = vmax.f32 %v666, 0.0
    %v741 = vmax.f32 %v669, 0.0
    %v742 = vmax.f32 %v674, 0.0
    %v743 = vmax.f32 %v677, 0.0
    %v744 = vpack.c.bf16 %v681, %v680
    %v745 = vpack.c.bf16 %v683, %v682
    %v746 = vpack.c.bf16 %v685, %v684
    %v747 = vpack.c.bf16 %v687, %v686
    %v748 = vpack.c.bf16 %v689, %v688
    %v749 = vpack.c.bf16 %v691, %v690
    %v750 = vpack.c.bf16 %v693, %v692
    %v751 = vpack.c.bf16 %v695, %v694
    %v752 = vpack.c.bf16 %v697, %v696
    %v753 = vpack.c.bf16 %v699, %v698
    %v754 = vpack.c.bf16 %v701, %v700
    %v755 = vpack.c.bf16 %v703, %v702
    %v756 = vpack.c.bf16 %v705, %v704
    %v757 = vpack.c.bf16 %v707, %v706
    %v758 = vpack.c.bf16 %v709, %v708
    %v759 = vpack.c.bf16 %v711, %v710
    %v760 = vpack.c.bf16 %v713, %v712
    %v761 = vpack.c.bf16 %v715, %v714
    %v762 = vpack.c.bf16 %v717, %v716
    %v763 = vpack.c.bf16 %v719, %v718
    %v764 = vpack.c.bf16 %v721, %v720
    %v765 = vpack.c.bf16 %v723, %v722
    %v766 = vpack.c.bf16 %v725, %v724
    %v767 = vpack.c.bf16 %v727, %v726
    %v768 = vpack.c.bf16 %v729, %v728
    %v769 = vpack.c.bf16 %v731, %v730
    %v770 = vpack.c.bf16 %v733, %v732
    %v771 = vpack.c.bf16 %v735, %v734
    %v772 = vpack.c.bf16 %v737, %v736
    %v773 = vpack.c.bf16 %v739, %v738
    %v774 = vpack.c.bf16 %v741, %v740
    %v775 = vpack.c.bf16 %v743, %v742
    %v808 = vunpack.c.l.b16 %v744
    %v809 = vunpack.c.h.b16 %v744
    %v810 = vunpack.c.l.b16 %v745
    %v811 = vunpack.c.h.b16 %v745
    %v812 = vunpack.c.l.b16 %v746
    %v813 = vunpack.c.h.b16 %v746
    %v814 = vunpack.c.l.b16 %v747
    %v815 = vunpack.c.h.b16 %v747
    %v816 = vunpack.c.l.b16 %v748
    %v817 = vunpack.c.h.b16 %v748
    %v818 = vunpack.c.l.b16 %v749
    %v819 = vunpack.c.h.b16 %v749
    %v820 = vunpack.c.l.b16 %v750
    %v821 = vunpack.c.h.b16 %v750
    %v822 = vunpack.c.l.b16 %v751
    %v823 = vunpack.c.h.b16 %v751
    %v824 = vunpack.c.l.b16 %v752
    %v825 = vunpack.c.h.b16 %v752
    %v826 = vunpack.c.l.b16 %v753
    %v827 = vunpack.c.h.b16 %v753
    %v828 = vunpack.c.l.b16 %v754
    %v829 = vunpack.c.h.b16 %v754
    %v830 = vunpack.c.l.b16 %v755
    %v831 = vunpack.c.h.b16 %v755
    %v832 = vunpack.c.l.b16 %v756
    %v833 = vunpack.c.h.b16 %v756
    %v834 = vunpack.c.l.b16 %v757
    %v835 = vunpack.c.h.b16 %v757
    %v836 = vunpack.c.l.b16 %v758
    %v837 = vunpack.c.h.b16 %v758
    %v838 = vunpack.c.l.b16 %v759
    %v839 = vunpack.c.h.b16 %v759
    %v840 = vunpack.c.l.b16 %v760
    %v841 = vunpack.c.h.b16 %v760
    %v842 = vunpack.c.l.b16 %v761
    %v843 = vunpack.c.h.b16 %v761
    %v844 = vunpack.c.l.b16 %v762
    %v845 = vunpack.c.h.b16 %v762
    %v846 = vunpack.c.l.b16 %v763
    %v847 = vunpack.c.h.b16 %v763
    %v848 = vunpack.c.l.b16 %v764
    %v849 = vunpack.c.h.b16 %v764
    %v850 = vunpack.c.l.b16 %v765
    %v851 = vunpack.c.h.b16 %v765
    %v852 = vunpack.c.l.b16 %v766
    %v853 = vunpack.c.h.b16 %v766
    %v854 = vunpack.c.l.b16 %v767
    %v855 = vunpack.c.h.b16 %v767
    %v856 = vunpack.c.l.b16 %v768
    %v857 = vunpack.c.h.b16 %v768
    %v858 = vunpack.c.l.b16 %v769
    %v859 = vunpack.c.h.b16 %v769
    %v860 = vunpack.c.l.b16 %v770
    %v861 = vunpack.c.h.b16 %v770
    %v862 = vunpack.c.l.b16 %v771
    %v863 = vunpack.c.h.b16 %v771
    %v864 = vunpack.c.l.b16 %v772
    %v865 = vunpack.c.h.b16 %v772
    %v866 = vunpack.c.l.b16 %v773
    %v867 = vunpack.c.h.b16 %v773
    %v868 = vunpack.c.l.b16 %v774
    %v869 = vunpack.c.h.b16 %v774
    %v870 = vunpack.c.l.b16 %v775
    %v871 = vunpack.c.h.b16 %v775
    %v872 = vpack.c.b16 %v808, %v808
    %v873 = vpack.c.b16 %v809, %v809
    %v874 = vpack.c.b16 %v810, %v810
    %v875 = vpack.c.b16 %v811, %v811
    %v876 = vpack.c.b16 %v812, %v812
    %v877 = vpack.c.b16 %v813, %v813
    %v878 = vpack.c.b16 %v814, %v814
    %v879 = vpack.c.b16 %v815, %v815
    %v880 = vpack.c.b16 %v816, %v816
    %v881 = vpack.c.b16 %v817, %v817
    %v882 = vpack.c.b16 %v818, %v818
    %v883 = vpack.c.b16 %v819, %v819
    %v884 = vpack.c.b16 %v820, %v820
    %v885 = vpack.c.b16 %v821, %v821
    %v886 = vpack.c.b16 %v822, %v822
    %v887 = vpack.c.b16 %v823, %v823
    %v888 = vpack.c.b16 %v824, %v824
    %v889 = vpack.c.b16 %v825, %v825
    %v890 = vpack.c.b16 %v826, %v826
    %v891 = vpack.c.b16 %v827, %v827
    %v892 = vpack.c.b16 %v828, %v828
    %v893 = vpack.c.b16 %v829, %v829
    %v894 = vpack.c.b16 %v830, %v830
    %v895 = vpack.c.b16 %v831, %v831
    %v896 = vpack.c.b16 %v832, %v832
    %v897 = vpack.c.b16 %v833, %v833
    %v898 = vpack.c.b16 %v834, %v834
    %v899 = vpack.c.b16 %v835, %v835
    %v900 = vpack.c.b16 %v836, %v836
    %v901 = vpack.c.b16 %v837, %v837
    %v902 = vpack.c.b16 %v838, %v838
    %v903 = vpack.c.b16 %v839, %v839
    %v904 = vpack.c.b16 %v840, %v840
    %v905 = vpack.c.b16 %v841, %v841
    %v906 = vpack.c.b16 %v842, %v842
    %v907 = vpack.c.b16 %v843, %v843
    %v908 = vpack.c.b16 %v844, %v844
    %v909 = vpack.c.b16 %v845, %v845
    %v910 = vpack.c.b16 %v846, %v846
    %v911 = vpack.c.b16 %v847, %v847
    %v912 = vpack.c.b16 %v848, %v848
    %v913 = vpack.c.b16 %v849, %v849
    %v914 = vpack.c.b16 %v850, %v850
    %v915 = vpack.c.b16 %v851, %v851
    %v916 = vpack.c.b16 %v852, %v852
    %v917 = vpack.c.b16 %v853, %v853
    %v918 = vpack.c.b16 %v854, %v854
    %v919 = vpack.c.b16 %v855, %v855
    %v920 = vpack.c.b16 %v856, %v856
    %v921 = vpack.c.b16 %v857, %v857
    %v922 = vpack.c.b16 %v858, %v858
    %v923 = vpack.c.b16 %v859, %v859
    %v924 = vpack.c.b16 %v860, %v860
    %v925 = vpack.c.b16 %v861, %v861
    %v926 = vpack.c.b16 %v862, %v862
    %v927 = vpack.c.b16 %v863, %v863
    %v928 = vpack.c.b16 %v864, %v864
    %v929 = vpack.c.b16 %v865, %v865
    %v930 = vpack.c.b16 %v866, %v866
    %v931 = vpack.c.b16 %v867, %v867
    %v932 = vpack.c.b16 %v868, %v868
    %v933 = vpack.c.b16 %v869, %v869
    %v934 = vpack.c.b16 %v870, %v870
    %v935 = vpack.c.b16 %v871, %v871
    %1000 = vst [vmem:[#allocation8] sm:$0xf] %v872
    %1001 = vst [vmem:[#allocation8 + $0x4] sm:$0xf] %v873
    %1002 = vst [vmem:[#allocation8 + $0x8] sm:$0xf] %v874
    %1003 = vst [vmem:[#allocation8 + $0xc] sm:$0xf] %v875
    %1004 = vst [vmem:[#allocation8 + $0x10] sm:$0xf] %v876
    %1005 = vst [vmem:[#allocation8 + $0x14] sm:$0xf] %v877
    %1006 = vst [vmem:[#allocation8 + $0x18] sm:$0xf] %v878
    %1007 = vst [vmem:[#allocation8 + $0x1c] sm:$0xf] %v879
    %1008 = vst [vmem:[#allocation8 + $0x20] sm:$0xf] %v880
    %1009 = vst [vmem:[#allocation8 + $0x24] sm:$0xf] %v881
    %1010 = vst [vmem:[#allocation8 + $0x28] sm:$0xf] %v882
    %1011 = vst [vmem:[#allocation8 + $0x2c] sm:$0xf] %v883
    %1012 = vst [vmem:[#allocation8 + $0x30] sm:$0xf] %v884
    %1013 = vst [vmem:[#allocation8 + $0x34] sm:$0xf] %v885
    %1014 = vst [vmem:[#allocation8 + $0x38] sm:$0xf] %v886
    %1015 = vst [vmem:[#allocation8 + $0x3c] sm:$0xf] %v887
    %1016 = vst [vmem:[#allocation8 + $0x40] sm:$0xf] %v888
    %1017 = vst [vmem:[#allocation8 + $0x44] sm:$0xf] %v889
    %1018 = vst [vmem:[#allocation8 + $0x48] sm:$0xf] %v890
    %1019 = vst [vmem:[#allocation8 + $0x4c] sm:$0xf] %v891
    %1020 = vst [vmem:[#allocation8 + $0x50] sm:$0xf] %v892
    %1021 = vst [vmem:[#allocation8 + $0x54] sm:$0xf] %v893
    %1022 = vst [vmem:[#allocation8 + $0x58] sm:$0xf] %v894
    %1023 = vst [vmem:[#allocation8 + $0x5c] sm:$0xf] %v895
    %1024 = vst [vmem:[#allocation8 + $0x60] sm:$0xf] %v896
    %1025 = vst [vmem:[#allocation8 + $0x64] sm:$0xf] %v897
    %1026 = vst [vmem:[#allocation8 + $0x68] sm:$0xf] %v898
    %1027 = vst [vmem:[#allocation8 + $0x6c] sm:$0xf] %v899
    %1028 = vst [vmem:[#allocation8 + $0x70] sm:$0xf] %v900
    %1029 = vst [vmem:[#allocation8 + $0x74] sm:$0xf] %v901
    %1030 = vst [vmem:[#allocation8 + $0x78] sm:$0xf] %v902
    %1031 = vst [vmem:[#allocation8 + $0x7c] sm:$0xf] %v903
    %1032 = vst [vmem:[#allocation8 + $0x80] sm:$0xf] %v904
    %1033 = vst [vmem:[#allocation8 + $0x84] sm:$0xf] %v905
    %1034 = vst [vmem:[#allocation8 + $0x88] sm:$0xf] %v906
    %1035 = vst [vmem:[#allocation8 + $0x8c] sm:$0xf] %v907
    %1036 = vst [vmem:[#allocation8 + $0x90] sm:$0xf] %v908
    %1037 = vst [vmem:[#allocation8 + $0x94] sm:$0xf] %v909
    %1038 = vst [vmem:[#allocation8 + $0x98] sm:$0xf] %v910
    %1039 = vst [vmem:[#allocation8 + $0x9c] sm:$0xf] %v911
    %1040 = vst [vmem:[#allocation8 + $0xa0] sm:$0xf] %v912
    %1041 = vst [vmem:[#allocation8 + $0xa4] sm:$0xf] %v913
    %1042 = vst [vmem:[#allocation8 + $0xa8] sm:$0xf] %v914
    %1043 = vst [vmem:[#allocation8 + $0xac] sm:$0xf] %v915
    %1044 = vst [vmem:[#allocation8 + $0xb0] sm:$0xf] %v916
    %1045 = vst [vmem:[#allocation8 + $0xb4] sm:$0xf] %v917
    %1046 = vst [vmem:[#allocation8 + $0xb8] sm:$0xf] %v918
    %1047 = vst [vmem:[#allocation8 + $0xbc] sm:$0xf] %v919
    %1048 = vst [vmem:[#allocation8 + $0xc0] sm:$0xf] %v920
    %1049 = vst [vmem:[#allocation8 + $0xc4] sm:$0xf] %v921
    %1050 = vst [vmem:[#allocation8 + $0xc8] sm:$0xf] %v922
    %1051 = vst [vmem:[#allocation8 + $0xcc] sm:$0xf] %v923
    %1052 = vst [vmem:[#allocation8 + $0xd0] sm:$0xf] %v924
    %1053 = vst [vmem:[#allocation8 + $0xd4] sm:$0xf] %v925
    %1054 = vst [vmem:[#allocation8 + $0xd8] sm:$0xf] %v926
    %1055 = vst [vmem:[#allocation8 + $0xdc] sm:$0xf] %v927
    %1056 = vst [vmem:[#allocation8 + $0xe0] sm:$0xf] %v928
    %1057 = vst [vmem:[#allocation8 + $0xe4] sm:$0xf] %v929
    %1058 = vst [vmem:[#allocation8 + $0xe8] sm:$0xf] %v930
    %1059 = vst [vmem:[#allocation8 + $0xec] sm:$0xf] %v931
    %1060 = vst [vmem:[#allocation8 + $0xf0] sm:$0xf] %v932
    %1061 = vst [vmem:[#allocation8 + $0xf4] sm:$0xf] %v933
    %1062 = vst [vmem:[#allocation8 + $0xf8] sm:$0xf] %v934
    %1063 = vst [vmem:[#allocation8 + $0xfc] sm:$0xf] %v935
    // Predicated region
    $region26: #{deform_bottleneck_forward.4} parent=1 // pred_check
      _
    $region27: #{deform_bottleneck_forward.4} parent=1 // pred_check_branch
      %1065 = sbr.rel (0) target = $region29
    $region28: #{deform_bottleneck_forward.4} parent=1 // pred_region
      %s1067 = ssub.s32 4096, 4096
      %1068 = vsyncadd [#allocation4], %s1067
      %s1069 = sshll.u32 [#allocation8], 4
      %s1070 = int_to_ptr.vmem [resolvable:$true] %s1069
      %1075 = dma.vmem_to_hbm [thread:$0]  %s1070, 4096, %s3, [#allocation4], 64, 64, 4
    $region29: #{deform_bottleneck_forward.4} parent=1 // pred_fallthru
      _
    // Predicated region
    $region30: #{deform_bottleneck_forward.4} parent=1 // pred_check
      _
    $region31: #{deform_bottleneck_forward.4} parent=1 // pred_check_branch
      %1077 = sbr.rel (0) target = $region33
    $region32: #{deform_bottleneck_forward.4} parent=1 // pred_region
      %1078 = dma.done [#allocation4], 4096
    $region33: #{deform_bottleneck_forward.4} parent=1 // pred_fallthru
      _
    %1079 = vsyncpa [#allocation3], 1
    %1080 = vsyncpa [#allocation6], 1
    %1081 = vsyncpa [#allocation4], 1

// kernel: deform_bottleneck_forward.5
$region0: #{deform_bottleneck_forward.5}
  #allocation0 [shape = 'u32[]', space=smem, size = 0x4, offset = 0x4, fixed_abs, tag = 'smem constant byte address 0x4 - core index']
  #allocation1 [shape = 'u32[144,128]{1,0:T(1,128)}', space=vmem, size = 0x12000, scoped, tag = 'internal scratch']
  %s0 = inlined_call_operand.hbm [shape: bf16[512,36], index: 0, kind: input, shape index: {}]
  %s1 = inlined_call_operand.hbm [shape: bf16[36,128], index: 1, kind: input, shape index: {}]
  %s2 = inlined_call_operand.hbm [shape: f32[1,128], index: 2, kind: input, shape index: {}]
  %s3 = inlined_call_operand.hbm [shape: f32[512,128], index: 3, kind: output, shape index: {}]
  %s4 = sld [smem:[#allocation0]]
  $region34: #{deform_bottleneck_forward.5} parent=0
    _
  %s6 = ssub.s32 1, %s4
  %s7 = scalar_select 0, %s6, %s4
  $region1: #{deform_bottleneck_forward.5} parent=0
    #allocation2 [shape = 'u8[131072]{0}', space=vmem, size = 0x20000, scoped, tag = 'input window, operand 0, single buffered']
    #allocation3 [shape = 's32[1]{0}', space=sflag, size = 0x4, scoped, tag = 'scoped memory for deform_bottleneck_forward.5']
    #allocation4 [shape = 's32[1]{0}', space=sflag, size = 0x4, scoped, tag = 'scoped memory for deform_bottleneck_forward.5']
    #allocation5 [shape = 'u8[10240]{0}', space=vmem, size = 0x2800, scoped, tag = 'input window, operand 1, single buffered']
    #allocation6 [shape = 's32[1]{0}', space=sflag, size = 0x4, scoped, tag = 'scoped memory for deform_bottleneck_forward.5']
    #allocation7 [shape = 'u8[512]{0}', space=vmem, size = 0x400, scoped, tag = 'input window, operand 2, single buffered']
    #allocation8 [shape = 'u8[262144]{0}', space=vmem, size = 0x40000, scoped, tag = 'output window, operand 0, single buffered']
    %8 = vsyncpa [#allocation3], 0
    %9 = vsyncpa [#allocation6], 0
    %10 = vsyncpa [#allocation4], 0
    // Predicated region
    $region2: #{deform_bottleneck_forward.5} parent=1 // pred_check
      _
    $region3: #{deform_bottleneck_forward.5} parent=1 // pred_check_branch
      %12 = sbr.rel (0) target = $region5
    $region4: #{deform_bottleneck_forward.5} parent=1 // pred_region
      %s14 = ssub.s32 4096, 4096
      %15 = vsyncadd [#allocation3], %s14
      %s16 = sshll.u32 [#allocation2], 4
      %s17 = int_to_ptr.vmem [resolvable:$true] %s16
      %22 = dma.hbm_to_vmem [thread:$0]  %s0, 4096, %s17, [#allocation3], 64, 64, 4
    $region5: #{deform_bottleneck_forward.5} parent=1 // pred_fallthru
      _
    // Predicated region
    $region6: #{deform_bottleneck_forward.5} parent=1 // pred_check
      _
    $region7: #{deform_bottleneck_forward.5} parent=1 // pred_check_branch
      %24 = sbr.rel (0) target = $region9
    $region8: #{deform_bottleneck_forward.5} parent=1 // pred_region
      %s26 = ssub.s32 320, 320
      %27 = vsyncadd [#allocation6], %s26
      %s28 = sshll.u32 [#allocation5], 4
      %s29 = int_to_ptr.vmem [resolvable:$true] %s28
      %34 = dma.hbm_to_vmem [thread:$0]  %s1, 320, %s29, [#allocation6], 64, 64, 4
    $region9: #{deform_bottleneck_forward.5} parent=1 // pred_fallthru
      _
    // Predicated region
    $region10: #{deform_bottleneck_forward.5} parent=1 // pred_check
      _
    $region11: #{deform_bottleneck_forward.5} parent=1 // pred_check_branch
      %36 = sbr.rel (0) target = $region13
    $region12: #{deform_bottleneck_forward.5} parent=1 // pred_region
      %s38 = ssub.s32 16, 16
      %39 = vsyncadd [#allocation6], %s38
      %s41 = sshll.u32 [#allocation7], 4
      %s42 = int_to_ptr.vmem [resolvable:$true] %s41
      %44 = dma.hbm_to_vmem [thread:$0]  %s2, 16, %s42, [#allocation6]
    $region13: #{deform_bottleneck_forward.5} parent=1 // pred_fallthru
      _
    // Predicated region
    $region14: #{deform_bottleneck_forward.5} parent=1 // pred_check
      _
    $region15: #{deform_bottleneck_forward.5} parent=1 // pred_check_branch
      %46 = sbr.rel (0) target = $region17
    $region16: #{deform_bottleneck_forward.5} parent=1 // pred_region
      %47 = dma.done [#allocation3], 4096
    $region17: #{deform_bottleneck_forward.5} parent=1 // pred_fallthru
      _
    // Predicated region
    $region18: #{deform_bottleneck_forward.5} parent=1 // pred_check
      _
    $region19: #{deform_bottleneck_forward.5} parent=1 // pred_check_branch
      %49 = sbr.rel (0) target = $region21
    $region20: #{deform_bottleneck_forward.5} parent=1 // pred_region
      %50 = dma.done [#allocation6], 320
    $region21: #{deform_bottleneck_forward.5} parent=1 // pred_fallthru
      _
    // Predicated region
    $region22: #{deform_bottleneck_forward.5} parent=1 // pred_check
      _
    $region23: #{deform_bottleneck_forward.5} parent=1 // pred_check_branch
      %52 = sbr.rel (0) target = $region25
    $region24: #{deform_bottleneck_forward.5} parent=1 // pred_region
      %53 = dma.done [#allocation6], 16
    $region25: #{deform_bottleneck_forward.5} parent=1 // pred_fallthru
      _
    %v55 = vld [vmem:[#allocation2] sm:$0xf]
    %v56 = vld [vmem:[#allocation2 + $0x4] sm:$0xf]
    %v57 = vld [vmem:[#allocation2 + $0x8] sm:$0xf]
    %v58 = vld [vmem:[#allocation2 + $0xc] sm:$0xf]
    %v59 = vld [vmem:[#allocation2 + $0x10] sm:$0xf]
    %v60 = vld [vmem:[#allocation2 + $0x14] sm:$0xf]
    %v61 = vld [vmem:[#allocation2 + $0x18] sm:$0xf]
    %v62 = vld [vmem:[#allocation2 + $0x1c] sm:$0xf]
    %v63 = vld [vmem:[#allocation2 + $0x20] sm:$0xf]
    %v64 = vld [vmem:[#allocation2 + $0x24] sm:$0xf]
    %v65 = vld [vmem:[#allocation2 + $0x28] sm:$0xf]
    %v66 = vld [vmem:[#allocation2 + $0x2c] sm:$0xf]
    %v67 = vld [vmem:[#allocation2 + $0x30] sm:$0xf]
    %v68 = vld [vmem:[#allocation2 + $0x34] sm:$0xf]
    %v69 = vld [vmem:[#allocation2 + $0x38] sm:$0xf]
    %v70 = vld [vmem:[#allocation2 + $0x3c] sm:$0xf]
    %v71 = vld [vmem:[#allocation2 + $0x40] sm:$0xf]
    %v72 = vld [vmem:[#allocation2 + $0x44] sm:$0xf]
    %v73 = vld [vmem:[#allocation2 + $0x48] sm:$0xf]
    %v74 = vld [vmem:[#allocation2 + $0x4c] sm:$0xf]
    %v75 = vld [vmem:[#allocation2 + $0x50] sm:$0xf]
    %v76 = vld [vmem:[#allocation2 + $0x54] sm:$0xf]
    %v77 = vld [vmem:[#allocation2 + $0x58] sm:$0xf]
    %v78 = vld [vmem:[#allocation2 + $0x5c] sm:$0xf]
    %v79 = vld [vmem:[#allocation2 + $0x60] sm:$0xf]
    %v80 = vld [vmem:[#allocation2 + $0x64] sm:$0xf]
    %v81 = vld [vmem:[#allocation2 + $0x68] sm:$0xf]
    %v82 = vld [vmem:[#allocation2 + $0x6c] sm:$0xf]
    %v83 = vld [vmem:[#allocation2 + $0x70] sm:$0xf]
    %v84 = vld [vmem:[#allocation2 + $0x74] sm:$0xf]
    %v85 = vld [vmem:[#allocation2 + $0x78] sm:$0xf]
    %v86 = vld [vmem:[#allocation2 + $0x7c] sm:$0xf]
    %v87 = vld [vmem:[#allocation2 + $0x80] sm:$0xf]
    %v88 = vld [vmem:[#allocation2 + $0x84] sm:$0xf]
    %v89 = vld [vmem:[#allocation2 + $0x88] sm:$0xf]
    %v90 = vld [vmem:[#allocation2 + $0x8c] sm:$0xf]
    %v91 = vld [vmem:[#allocation2 + $0x90] sm:$0xf]
    %v92 = vld [vmem:[#allocation2 + $0x94] sm:$0xf]
    %v93 = vld [vmem:[#allocation2 + $0x98] sm:$0xf]
    %v94 = vld [vmem:[#allocation2 + $0x9c] sm:$0xf]
    %v95 = vld [vmem:[#allocation2 + $0xa0] sm:$0xf]
    %v96 = vld [vmem:[#allocation2 + $0xa4] sm:$0xf]
    %v97 = vld [vmem:[#allocation2 + $0xa8] sm:$0xf]
    %v98 = vld [vmem:[#allocation2 + $0xac] sm:$0xf]
    %v99 = vld [vmem:[#allocation2 + $0xb0] sm:$0xf]
    %v100 = vld [vmem:[#allocation2 + $0xb4] sm:$0xf]
    %v101 = vld [vmem:[#allocation2 + $0xb8] sm:$0xf]
    %v102 = vld [vmem:[#allocation2 + $0xbc] sm:$0xf]
    %v103 = vld [vmem:[#allocation2 + $0xc0] sm:$0xf]
    %v104 = vld [vmem:[#allocation2 + $0xc4] sm:$0xf]
    %v105 = vld [vmem:[#allocation2 + $0xc8] sm:$0xf]
    %v106 = vld [vmem:[#allocation2 + $0xcc] sm:$0xf]
    %v107 = vld [vmem:[#allocation2 + $0xd0] sm:$0xf]
    %v108 = vld [vmem:[#allocation2 + $0xd4] sm:$0xf]
    %v109 = vld [vmem:[#allocation2 + $0xd8] sm:$0xf]
    %v110 = vld [vmem:[#allocation2 + $0xdc] sm:$0xf]
    %v111 = vld [vmem:[#allocation2 + $0xe0] sm:$0xf]
    %v112 = vld [vmem:[#allocation2 + $0xe4] sm:$0xf]
    %v113 = vld [vmem:[#allocation2 + $0xe8] sm:$0xf]
    %v114 = vld [vmem:[#allocation2 + $0xec] sm:$0xf]
    %v115 = vld [vmem:[#allocation2 + $0xf0] sm:$0xf]
    %v116 = vld [vmem:[#allocation2 + $0xf4] sm:$0xf]
    %v117 = vld [vmem:[#allocation2 + $0xf8] sm:$0xf]
    %v118 = vld [vmem:[#allocation2 + $0xfc] sm:$0xf]
    %v119 = vld [vmem:[#allocation5] sm:$0xf]
    %v120 = vld [vmem:[#allocation5 + $0x4] sm:$0xf]
    %v121 = vld [vmem:[#allocation5 + $0x8] sm:$0xf]
    %v122 = vld [vmem:[#allocation5 + $0xc] sm:$0xf]
    %v123 = vld [vmem:[#allocation5 + $0x10] sm:$0x3]
    %v124 = vld [vmem:[#allocation7] sm:$0x1]
    %v126 = vlaneseq
    %v127 = vshrl.u32 %v126, 7
    %v128 = vsub.s32 0, %v127
    %v129 = vrot.slane %v124, %v128
    %v195 = vunpack.c.l.b16 %v55
    %v196 = vunpack.c.l.b16 %v56
    %v197 = vunpack.c.l.b16 %v57
    %v198 = vunpack.c.l.b16 %v58
    %v199 = vunpack.c.l.b16 %v59
    %v200 = vunpack.c.l.b16 %v60
    %v201 = vunpack.c.l.b16 %v61
    %v202 = vunpack.c.l.b16 %v62
    %v203 = vunpack.c.l.b16 %v63
    %v204 = vunpack.c.l.b16 %v64
    %v205 = vunpack.c.l.b16 %v65
    %v206 = vunpack.c.l.b16 %v66
    %v207 = vunpack.c.l.b16 %v67
    %v208 = vunpack.c.l.b16 %v68
    %v209 = vunpack.c.l.b16 %v69
    %v210 = vunpack.c.l.b16 %v70
    %v211 = vunpack.c.l.b16 %v71
    %v212 = vunpack.c.l.b16 %v72
    %v213 = vunpack.c.l.b16 %v73
    %v214 = vunpack.c.l.b16 %v74
    %v215 = vunpack.c.l.b16 %v75
    %v216 = vunpack.c.l.b16 %v76
    %v217 = vunpack.c.l.b16 %v77
    %v218 = vunpack.c.l.b16 %v78
    %v219 = vunpack.c.l.b16 %v79
    %v220 = vunpack.c.l.b16 %v80
    %v221 = vunpack.c.l.b16 %v81
    %v222 = vunpack.c.l.b16 %v82
    %v223 = vunpack.c.l.b16 %v83
    %v224 = vunpack.c.l.b16 %v84
    %v225 = vunpack.c.l.b16 %v85
    %v226 = vunpack.c.l.b16 %v86
    %v227 = vunpack.c.l.b16 %v87
    %v228 = vunpack.c.l.b16 %v88
    %v229 = vunpack.c.l.b16 %v89
    %v230 = vunpack.c.l.b16 %v90
    %v231 = vunpack.c.l.b16 %v91
    %v232 = vunpack.c.l.b16 %v92
    %v233 = vunpack.c.l.b16 %v93
    %v234 = vunpack.c.l.b16 %v94
    %v235 = vunpack.c.l.b16 %v95
    %v236 = vunpack.c.l.b16 %v96
    %v237 = vunpack.c.l.b16 %v97
    %v238 = vunpack.c.l.b16 %v98
    %v239 = vunpack.c.l.b16 %v99
    %v240 = vunpack.c.l.b16 %v100
    %v241 = vunpack.c.l.b16 %v101
    %v242 = vunpack.c.l.b16 %v102
    %v243 = vunpack.c.l.b16 %v103
    %v244 = vunpack.c.l.b16 %v104
    %v245 = vunpack.c.l.b16 %v105
    %v246 = vunpack.c.l.b16 %v106
    %v247 = vunpack.c.l.b16 %v107
    %v248 = vunpack.c.l.b16 %v108
    %v249 = vunpack.c.l.b16 %v109
    %v250 = vunpack.c.l.b16 %v110
    %v251 = vunpack.c.l.b16 %v111
    %v252 = vunpack.c.l.b16 %v112
    %v253 = vunpack.c.l.b16 %v113
    %v254 = vunpack.c.l.b16 %v114
    %v255 = vunpack.c.l.b16 %v115
    %v256 = vunpack.c.l.b16 %v116
    %v257 = vunpack.c.l.b16 %v117
    %v258 = vunpack.c.l.b16 %v118
    %v259 = vpack.c.b16 %v196, %v195
    %v260 = vpack.c.b16 %v198, %v197
    %v261 = vpack.c.b16 %v200, %v199
    %v262 = vpack.c.b16 %v202, %v201
    %v263 = vpack.c.b16 %v204, %v203
    %v264 = vpack.c.b16 %v206, %v205
    %v265 = vpack.c.b16 %v208, %v207
    %v266 = vpack.c.b16 %v210, %v209
    %v267 = vpack.c.b16 %v212, %v211
    %v268 = vpack.c.b16 %v214, %v213
    %v269 = vpack.c.b16 %v216, %v215
    %v270 = vpack.c.b16 %v218, %v217
    %v271 = vpack.c.b16 %v220, %v219
    %v272 = vpack.c.b16 %v222, %v221
    %v273 = vpack.c.b16 %v224, %v223
    %v274 = vpack.c.b16 %v226, %v225
    %v275 = vpack.c.b16 %v228, %v227
    %v276 = vpack.c.b16 %v230, %v229
    %v277 = vpack.c.b16 %v232, %v231
    %v278 = vpack.c.b16 %v234, %v233
    %v279 = vpack.c.b16 %v236, %v235
    %v280 = vpack.c.b16 %v238, %v237
    %v281 = vpack.c.b16 %v240, %v239
    %v282 = vpack.c.b16 %v242, %v241
    %v283 = vpack.c.b16 %v244, %v243
    %v284 = vpack.c.b16 %v246, %v245
    %v285 = vpack.c.b16 %v248, %v247
    %v286 = vpack.c.b16 %v250, %v249
    %v287 = vpack.c.b16 %v252, %v251
    %v288 = vpack.c.b16 %v254, %v253
    %v289 = vpack.c.b16 %v256, %v255
    %v290 = vpack.c.b16 %v258, %v257
    %v296 = vunpack.c.l.b16 %v119
    %v297 = vunpack.c.l.b16 %v120
    %v298 = vunpack.c.l.b16 %v121
    %v299 = vunpack.c.l.b16 %v122
    %v300 = vunpack.c.l.b16 %v123
    %v301 = vpack.c.b16 %v297, %v296
    %v302 = vpack.c.b16 %v299, %v298
    %v303 = vpack.c.b16 %v300, %v300
    %vm306 = vcmask 293888
    %v308 = vsel %vm306, %v259, 0
    %v311 = vsel %vm306, %v260, 0
    %v314 = vsel %vm306, %v261, 0
    %v317 = vsel %vm306, %v262, 0
    %v320 = vsel %vm306, %v263, 0
    %v323 = vsel %vm306, %v264, 0
    %v326 = vsel %vm306, %v265, 0
    %v329 = vsel %vm306, %v266, 0
    %v332 = vsel %vm306, %v267, 0
    %v335 = vsel %vm306, %v268, 0
    %v338 = vsel %vm306, %v269, 0
    %v341 = vsel %vm306, %v270, 0
    %v344 = vsel %vm306, %v271, 0
    %v347 = vsel %vm306, %v272, 0
    %v350 = vsel %vm306, %v273, 0
    %v353 = vsel %vm306, %v274, 0
    %v356 = vsel %vm306, %v275, 0
    %v359 = vsel %vm306, %v276, 0
    %v362 = vsel %vm306, %v277, 0
    %v365 = vsel %vm306, %v278, 0
    %v368 = vsel %vm306, %v279, 0
    %v371 = vsel %vm306, %v280, 0
    %v374 = vsel %vm306, %v281, 0
    %v377 = vsel %vm306, %v282, 0
    %v380 = vsel %vm306, %v283, 0
    %v383 = vsel %vm306, %v284, 0
    %v386 = vsel %vm306, %v285, 0
    %v389 = vsel %vm306, %v286, 0
    %v392 = vsel %vm306, %v287, 0
    %v395 = vsel %vm306, %v288, 0
    %v398 = vsel %vm306, %v289, 0
    %v401 = vsel %vm306, %v290, 0
    %vm403 = vcmask 1041408
    %v405 = vsel %vm403, %v303, 0
    %407 = vmatprep.subr.bf16.mxu0 0
    %408 = vmatpush1.bf16.msra.mxu0 %v301
    %409 = vmatprep.subr.bf16.mxu0 0
    %410 = vmatpush1.bf16.msra.mxu0 %v302
    %411 = vmatprep.subr.bf16.mxu0 0
    %412 = vmatpush1.bf16.msra.mxu0 %v405
    %413 = vmatprep.subr.bf16.mxu0 0
    %414 = vmatpush1.bf16.msra.mxu0 0
    %415 = vmatprep.subr.bf16.mxu0 0
    %416 = vmatpush1.bf16.msra.mxu0 0
    %417 = vmatprep.subr.bf16.mxu0 0
    %418 = vmatpush1.bf16.msra.mxu0 0
    %419 = vmatprep.subr.bf16.mxu0 0
    %420 = vmatpush1.bf16.msra.mxu0 0
    %421 = vmatprep.subr.bf16.mxu0 0
    %422 = vmatpush1.bf16.msra.mxu0 0
    %423 = vmatprep.subr.bf16.mxu0 0
    %424 = vmatpush1.bf16.msra.mxu0 0
    %425 = vmatprep.subr.bf16.mxu0 0
    %426 = vmatpush1.bf16.msra.mxu0 0
    %427 = vmatprep.subr.bf16.mxu0 0
    %428 = vmatpush1.bf16.msra.mxu0 0
    %429 = vmatprep.subr.bf16.mxu0 0
    %430 = vmatpush1.bf16.msra.mxu0 0
    %431 = vmatprep.subr.bf16.mxu0 0
    %432 = vmatpush1.bf16.msra.mxu0 0
    %433 = vmatprep.subr.bf16.mxu0 0
    %434 = vmatpush1.bf16.msra.mxu0 0
    %435 = vmatprep.subr.bf16.mxu0 0
    %436 = vmatpush1.bf16.msra.mxu0 0
    %437 = vmatprep.subr.bf16.mxu0 0
    %438 = vmatpush1.bf16.msra.mxu0 0
    %439 = vmatprep.mubr.bf16.mxu0 0
    %440 = vmatmul.mubr.bf16.gmra.mrb[0].mxu0 %v308
    %v441 = vpop.f32.mrb[0].mxu0
    %v442 = vadd.f32 %v129, %v441
    %v443 = vpop.f32.mrb[0].mxu0
    %v444 = vpop.f32.mrb[0].mxu0
    %v445 = vadd.f32 %v129, %v444
    %v446 = vpop.f32.mrb[0].mxu0
    %447 = vmatprep.mubr.bf16.mxu0 0
    %448 = vmatmul.mubr.bf16.gmra.mrb[0].mxu0 %v311
    %v449 = vpop.f32.mrb[0].mxu0
    %v450 = vadd.f32 %v129, %v449
    %v451 = vpop.f32.mrb[0].mxu0
    %v452 = vpop.f32.mrb[0].mxu0
    %v453 = vadd.f32 %v129, %v452
    %v454 = vpop.f32.mrb[0].mxu0
    %455 = vmatprep.mubr.bf16.mxu0 0
    %456 = vmatmul.mubr.bf16.gmra.mrb[0].mxu0 %v314
    %v457 = vpop.f32.mrb[0].mxu0
    %v458 = vadd.f32 %v129, %v457
    %v459 = vpop.f32.mrb[0].mxu0
    %v460 = vpop.f32.mrb[0].mxu0
    %v461 = vadd.f32 %v129, %v460
    %v462 = vpop.f32.mrb[0].mxu0
    %463 = vmatprep.mubr.bf16.mxu0 0
    %464 = vmatmul.mubr.bf16.gmra.mrb[0].mxu0 %v317
    %v465 = vpop.f32.mrb[0].mxu0
    %v466 = vadd.f32 %v129, %v465
    %v467 = vpop.f32.mrb[0].mxu0
    %v468 = vpop.f32.mrb[0].mxu0
    %v469 = vadd.f32 %v129, %v468
    %v470 = vpop.f32.mrb[0].mxu0
    %471 = vmatprep.mubr.bf16.mxu0 0
    %472 = vmatmul.mubr.bf16.gmra.mrb[0].mxu0 %v320
    %v473 = vpop.f32.mrb[0].mxu0
    %v474 = vadd.f32 %v129, %v473
    %v475 = vpop.f32.mrb[0].mxu0
    %v476 = vpop.f32.mrb[0].mxu0
    %v477 = vadd.f32 %v129, %v476
    %v478 = vpop.f32.mrb[0].mxu0
    %479 = vmatprep.mubr.bf16.mxu0 0
    %480 = vmatmul.mubr.bf16.gmra.mrb[0].mxu0 %v323
    %v481 = vpop.f32.mrb[0].mxu0
    %v482 = vadd.f32 %v129, %v481
    %v483 = vpop.f32.mrb[0].mxu0
    %v484 = vpop.f32.mrb[0].mxu0
    %v485 = vadd.f32 %v129, %v484
    %v486 = vpop.f32.mrb[0].mxu0
    %487 = vmatprep.mubr.bf16.mxu0 0
    %488 = vmatmul.mubr.bf16.gmra.mrb[0].mxu0 %v326
    %v489 = vpop.f32.mrb[0].mxu0
    %v490 = vadd.f32 %v129, %v489
    %v491 = vpop.f32.mrb[0].mxu0
    %v492 = vpop.f32.mrb[0].mxu0
    %v493 = vadd.f32 %v129, %v492
    %v494 = vpop.f32.mrb[0].mxu0
    %495 = vmatprep.mubr.bf16.mxu0 0
    %496 = vmatmul.mubr.bf16.gmra.mrb[0].mxu0 %v329
    %v497 = vpop.f32.mrb[0].mxu0
    %v498 = vadd.f32 %v129, %v497
    %v499 = vpop.f32.mrb[0].mxu0
    %v500 = vpop.f32.mrb[0].mxu0
    %v501 = vadd.f32 %v129, %v500
    %v502 = vpop.f32.mrb[0].mxu0
    %503 = vmatprep.mubr.bf16.mxu0 0
    %504 = vmatmul.mubr.bf16.gmra.mrb[0].mxu0 %v332
    %v505 = vpop.f32.mrb[0].mxu0
    %v506 = vadd.f32 %v129, %v505
    %v507 = vpop.f32.mrb[0].mxu0
    %v508 = vpop.f32.mrb[0].mxu0
    %v509 = vadd.f32 %v129, %v508
    %v510 = vpop.f32.mrb[0].mxu0
    %511 = vmatprep.mubr.bf16.mxu0 0
    %512 = vmatmul.mubr.bf16.gmra.mrb[0].mxu0 %v335
    %v513 = vpop.f32.mrb[0].mxu0
    %v514 = vadd.f32 %v129, %v513
    %v515 = vpop.f32.mrb[0].mxu0
    %v516 = vpop.f32.mrb[0].mxu0
    %v517 = vadd.f32 %v129, %v516
    %v518 = vpop.f32.mrb[0].mxu0
    %519 = vmatprep.mubr.bf16.mxu0 0
    %520 = vmatmul.mubr.bf16.gmra.mrb[0].mxu0 %v338
    %v521 = vpop.f32.mrb[0].mxu0
    %v522 = vadd.f32 %v129, %v521
    %v523 = vpop.f32.mrb[0].mxu0
    %v524 = vpop.f32.mrb[0].mxu0
    %v525 = vadd.f32 %v129, %v524
    %v526 = vpop.f32.mrb[0].mxu0
    %527 = vmatprep.mubr.bf16.mxu0 0
    %528 = vmatmul.mubr.bf16.gmra.mrb[0].mxu0 %v341
    %v529 = vpop.f32.mrb[0].mxu0
    %v530 = vadd.f32 %v129, %v529
    %v531 = vpop.f32.mrb[0].mxu0
    %v532 = vpop.f32.mrb[0].mxu0
    %v533 = vadd.f32 %v129, %v532
    %v534 = vpop.f32.mrb[0].mxu0
    %535 = vmatprep.mubr.bf16.mxu0 0
    %536 = vmatmul.mubr.bf16.gmra.mrb[0].mxu0 %v344
    %v537 = vpop.f32.mrb[0].mxu0
    %v538 = vadd.f32 %v129, %v537
    %v539 = vpop.f32.mrb[0].mxu0
    %v540 = vpop.f32.mrb[0].mxu0
    %v541 = vadd.f32 %v129, %v540
    %v542 = vpop.f32.mrb[0].mxu0
    %543 = vmatprep.mubr.bf16.mxu0 0
    %544 = vmatmul.mubr.bf16.gmra.mrb[0].mxu0 %v347
    %v545 = vpop.f32.mrb[0].mxu0
    %v546 = vadd.f32 %v129, %v545
    %v547 = vpop.f32.mrb[0].mxu0
    %v548 = vpop.f32.mrb[0].mxu0
    %v549 = vadd.f32 %v129, %v548
    %v550 = vpop.f32.mrb[0].mxu0
    %551 = vmatprep.mubr.bf16.mxu0 0
    %552 = vmatmul.mubr.bf16.gmra.mrb[0].mxu0 %v350
    %v553 = vpop.f32.mrb[0].mxu0
    %v554 = vadd.f32 %v129, %v553
    %v555 = vpop.f32.mrb[0].mxu0
    %v556 = vpop.f32.mrb[0].mxu0
    %v557 = vadd.f32 %v129, %v556
    %v558 = vpop.f32.mrb[0].mxu0
    %559 = vmatprep.mubr.bf16.mxu0 0
    %560 = vmatmul.mubr.bf16.gmra.mrb[0].mxu0 %v353
    %v561 = vpop.f32.mrb[0].mxu0
    %v562 = vadd.f32 %v129, %v561
    %v563 = vpop.f32.mrb[0].mxu0
    %v564 = vpop.f32.mrb[0].mxu0
    %v565 = vadd.f32 %v129, %v564
    %v566 = vpop.f32.mrb[0].mxu0
    %567 = vmatprep.mubr.bf16.mxu0 0
    %568 = vmatmul.mubr.bf16.gmra.mrb[0].mxu0 %v356
    %v569 = vpop.f32.mrb[0].mxu0
    %v570 = vadd.f32 %v129, %v569
    %v571 = vpop.f32.mrb[0].mxu0
    %v572 = vpop.f32.mrb[0].mxu0
    %v573 = vadd.f32 %v129, %v572
    %v574 = vpop.f32.mrb[0].mxu0
    %575 = vmatprep.mubr.bf16.mxu0 0
    %576 = vmatmul.mubr.bf16.gmra.mrb[0].mxu0 %v359
    %v577 = vpop.f32.mrb[0].mxu0
    %v578 = vadd.f32 %v129, %v577
    %v579 = vpop.f32.mrb[0].mxu0
    %v580 = vpop.f32.mrb[0].mxu0
    %v581 = vadd.f32 %v129, %v580
    %v582 = vpop.f32.mrb[0].mxu0
    %583 = vmatprep.mubr.bf16.mxu0 0
    %584 = vmatmul.mubr.bf16.gmra.mrb[0].mxu0 %v362
    %v585 = vpop.f32.mrb[0].mxu0
    %v586 = vadd.f32 %v129, %v585
    %v587 = vpop.f32.mrb[0].mxu0
    %v588 = vpop.f32.mrb[0].mxu0
    %v589 = vadd.f32 %v129, %v588
    %v590 = vpop.f32.mrb[0].mxu0
    %591 = vmatprep.mubr.bf16.mxu0 0
    %592 = vmatmul.mubr.bf16.gmra.mrb[0].mxu0 %v365
    %v593 = vpop.f32.mrb[0].mxu0
    %v594 = vadd.f32 %v129, %v593
    %v595 = vpop.f32.mrb[0].mxu0
    %v596 = vpop.f32.mrb[0].mxu0
    %v597 = vadd.f32 %v129, %v596
    %v598 = vpop.f32.mrb[0].mxu0
    %599 = vmatprep.mubr.bf16.mxu0 0
    %600 = vmatmul.mubr.bf16.gmra.mrb[0].mxu0 %v368
    %v601 = vpop.f32.mrb[0].mxu0
    %v602 = vadd.f32 %v129, %v601
    %v603 = vpop.f32.mrb[0].mxu0
    %v604 = vpop.f32.mrb[0].mxu0
    %v605 = vadd.f32 %v129, %v604
    %v606 = vpop.f32.mrb[0].mxu0
    %607 = vmatprep.mubr.bf16.mxu0 0
    %608 = vmatmul.mubr.bf16.gmra.mrb[0].mxu0 %v371
    %v609 = vpop.f32.mrb[0].mxu0
    %v610 = vadd.f32 %v129, %v609
    %v611 = vpop.f32.mrb[0].mxu0
    %v612 = vpop.f32.mrb[0].mxu0
    %v613 = vadd.f32 %v129, %v612
    %v614 = vpop.f32.mrb[0].mxu0
    %615 = vmatprep.mubr.bf16.mxu0 0
    %616 = vmatmul.mubr.bf16.gmra.mrb[0].mxu0 %v374
    %v617 = vpop.f32.mrb[0].mxu0
    %v618 = vadd.f32 %v129, %v617
    %v619 = vpop.f32.mrb[0].mxu0
    %v620 = vpop.f32.mrb[0].mxu0
    %v621 = vadd.f32 %v129, %v620
    %v622 = vpop.f32.mrb[0].mxu0
    %623 = vmatprep.mubr.bf16.mxu0 0
    %624 = vmatmul.mubr.bf16.gmra.mrb[0].mxu0 %v377
    %v625 = vpop.f32.mrb[0].mxu0
    %v626 = vadd.f32 %v129, %v625
    %v627 = vpop.f32.mrb[0].mxu0
    %v628 = vpop.f32.mrb[0].mxu0
    %v629 = vadd.f32 %v129, %v628
    %v630 = vpop.f32.mrb[0].mxu0
    %631 = vmatprep.mubr.bf16.mxu0 0
    %632 = vmatmul.mubr.bf16.gmra.mrb[0].mxu0 %v380
    %v633 = vpop.f32.mrb[0].mxu0
    %v634 = vadd.f32 %v129, %v633
    %v635 = vpop.f32.mrb[0].mxu0
    %v636 = vpop.f32.mrb[0].mxu0
    %v637 = vadd.f32 %v129, %v636
    %v638 = vpop.f32.mrb[0].mxu0
    %639 = vmatprep.mubr.bf16.mxu0 0
    %640 = vmatmul.mubr.bf16.gmra.mrb[0].mxu0 %v383
    %v641 = vpop.f32.mrb[0].mxu0
    %v642 = vadd.f32 %v129, %v641
    %v643 = vpop.f32.mrb[0].mxu0
    %v644 = vpop.f32.mrb[0].mxu0
    %v645 = vadd.f32 %v129, %v644
    %v646 = vpop.f32.mrb[0].mxu0
    %647 = vmatprep.mubr.bf16.mxu0 0
    %648 = vmatmul.mubr.bf16.gmra.mrb[0].mxu0 %v386
    %v649 = vpop.f32.mrb[0].mxu0
    %v650 = vadd.f32 %v129, %v649
    %v651 = vpop.f32.mrb[0].mxu0
    %v652 = vpop.f32.mrb[0].mxu0
    %v653 = vadd.f32 %v129, %v652
    %v654 = vpop.f32.mrb[0].mxu0
    %655 = vmatprep.mubr.bf16.mxu0 0
    %656 = vmatmul.mubr.bf16.gmra.mrb[0].mxu0 %v389
    %v657 = vpop.f32.mrb[0].mxu0
    %v658 = vadd.f32 %v129, %v657
    %v659 = vpop.f32.mrb[0].mxu0
    %v660 = vpop.f32.mrb[0].mxu0
    %v661 = vadd.f32 %v129, %v660
    %v662 = vpop.f32.mrb[0].mxu0
    %663 = vmatprep.mubr.bf16.mxu0 0
    %664 = vmatmul.mubr.bf16.gmra.mrb[0].mxu0 %v392
    %v665 = vpop.f32.mrb[0].mxu0
    %v666 = vadd.f32 %v129, %v665
    %v667 = vpop.f32.mrb[0].mxu0
    %v668 = vpop.f32.mrb[0].mxu0
    %v669 = vadd.f32 %v129, %v668
    %v670 = vpop.f32.mrb[0].mxu0
    %671 = vmatprep.mubr.bf16.mxu0 0
    %672 = vmatmul.mubr.bf16.gmra.mrb[0].mxu0 %v395
    %v673 = vpop.f32.mrb[0].mxu0
    %v674 = vadd.f32 %v129, %v673
    %v675 = vpop.f32.mrb[0].mxu0
    %v676 = vpop.f32.mrb[0].mxu0
    %v677 = vadd.f32 %v129, %v676
    %v678 = vpop.f32.mrb[0].mxu0
    %679 = vmatprep.mubr.bf16.mxu0 0
    %680 = vmatmul.mubr.bf16.gmra.mrb[0].mxu0 %v398
    %v681 = vpop.f32.mrb[0].mxu0
    %v682 = vadd.f32 %v129, %v681
    %v683 = vpop.f32.mrb[0].mxu0
    %v684 = vpop.f32.mrb[0].mxu0
    %v685 = vadd.f32 %v129, %v684
    %v686 = vpop.f32.mrb[0].mxu0
    %687 = vmatprep.mubr.bf16.mxu0 0
    %688 = vmatmul.mubr.bf16.gmra.mrb[0].mxu0 %v401
    %v689 = vpop.f32.mrb[0].mxu0
    %v690 = vadd.f32 %v129, %v689
    %v691 = vpop.f32.mrb[0].mxu0
    %v692 = vpop.f32.mrb[0].mxu0
    %v693 = vadd.f32 %v129, %v692
    %v694 = vpop.f32.mrb[0].mxu0
    %695 = vdwg.mxu0
    %696 = vst [vmem:[#allocation8] sm:$0xff] %v442
    %697 = vst [vmem:[#allocation8 + $0x8] sm:$0xff] %v445
    %698 = vst [vmem:[#allocation8 + $0x10] sm:$0xff] %v450
    %699 = vst [vmem:[#allocation8 + $0x18] sm:$0xff] %v453
    %700 = vst [vmem:[#allocation8 + $0x20] sm:$0xff] %v458
    %701 = vst [vmem:[#allocation8 + $0x28] sm:$0xff] %v461
    %702 = vst [vmem:[#allocation8 + $0x30] sm:$0xff] %v466
    %703 = vst [vmem:[#allocation8 + $0x38] sm:$0xff] %v469
    %704 = vst [vmem:[#allocation8 + $0x40] sm:$0xff] %v474
    %705 = vst [vmem:[#allocation8 + $0x48] sm:$0xff] %v477
    %706 = vst [vmem:[#allocation8 + $0x50] sm:$0xff] %v482
    %707 = vst [vmem:[#allocation8 + $0x58] sm:$0xff] %v485
    %708 = vst [vmem:[#allocation8 + $0x60] sm:$0xff] %v490
    %709 = vst [vmem:[#allocation8 + $0x68] sm:$0xff] %v493
    %710 = vst [vmem:[#allocation8 + $0x70] sm:$0xff] %v498
    %711 = vst [vmem:[#allocation8 + $0x78] sm:$0xff] %v501
    %712 = vst [vmem:[#allocation8 + $0x80] sm:$0xff] %v506
    %713 = vst [vmem:[#allocation8 + $0x88] sm:$0xff] %v509
    %714 = vst [vmem:[#allocation8 + $0x90] sm:$0xff] %v514
    %715 = vst [vmem:[#allocation8 + $0x98] sm:$0xff] %v517
    %716 = vst [vmem:[#allocation8 + $0xa0] sm:$0xff] %v522
    %717 = vst [vmem:[#allocation8 + $0xa8] sm:$0xff] %v525
    %718 = vst [vmem:[#allocation8 + $0xb0] sm:$0xff] %v530
    %719 = vst [vmem:[#allocation8 + $0xb8] sm:$0xff] %v533
    %720 = vst [vmem:[#allocation8 + $0xc0] sm:$0xff] %v538
    %721 = vst [vmem:[#allocation8 + $0xc8] sm:$0xff] %v541
    %722 = vst [vmem:[#allocation8 + $0xd0] sm:$0xff] %v546
    %723 = vst [vmem:[#allocation8 + $0xd8] sm:$0xff] %v549
    %724 = vst [vmem:[#allocation8 + $0xe0] sm:$0xff] %v554
    %725 = vst [vmem:[#allocation8 + $0xe8] sm:$0xff] %v557
    %726 = vst [vmem:[#allocation8 + $0xf0] sm:$0xff] %v562
    %727 = vst [vmem:[#allocation8 + $0xf8] sm:$0xff] %v565
    %728 = vst [vmem:[#allocation8 + $0x100] sm:$0xff] %v570
    %729 = vst [vmem:[#allocation8 + $0x108] sm:$0xff] %v573
    %730 = vst [vmem:[#allocation8 + $0x110] sm:$0xff] %v578
    %731 = vst [vmem:[#allocation8 + $0x118] sm:$0xff] %v581
    %732 = vst [vmem:[#allocation8 + $0x120] sm:$0xff] %v586
    %733 = vst [vmem:[#allocation8 + $0x128] sm:$0xff] %v589
    %734 = vst [vmem:[#allocation8 + $0x130] sm:$0xff] %v594
    %735 = vst [vmem:[#allocation8 + $0x138] sm:$0xff] %v597
    %736 = vst [vmem:[#allocation8 + $0x140] sm:$0xff] %v602
    %737 = vst [vmem:[#allocation8 + $0x148] sm:$0xff] %v605
    %738 = vst [vmem:[#allocation8 + $0x150] sm:$0xff] %v610
    %739 = vst [vmem:[#allocation8 + $0x158] sm:$0xff] %v613
    %740 = vst [vmem:[#allocation8 + $0x160] sm:$0xff] %v618
    %741 = vst [vmem:[#allocation8 + $0x168] sm:$0xff] %v621
    %742 = vst [vmem:[#allocation8 + $0x170] sm:$0xff] %v626
    %743 = vst [vmem:[#allocation8 + $0x178] sm:$0xff] %v629
    %744 = vst [vmem:[#allocation8 + $0x180] sm:$0xff] %v634
    %745 = vst [vmem:[#allocation8 + $0x188] sm:$0xff] %v637
    %746 = vst [vmem:[#allocation8 + $0x190] sm:$0xff] %v642
    %747 = vst [vmem:[#allocation8 + $0x198] sm:$0xff] %v645
    %748 = vst [vmem:[#allocation8 + $0x1a0] sm:$0xff] %v650
    %749 = vst [vmem:[#allocation8 + $0x1a8] sm:$0xff] %v653
    %750 = vst [vmem:[#allocation8 + $0x1b0] sm:$0xff] %v658
    %751 = vst [vmem:[#allocation8 + $0x1b8] sm:$0xff] %v661
    %752 = vst [vmem:[#allocation8 + $0x1c0] sm:$0xff] %v666
    %753 = vst [vmem:[#allocation8 + $0x1c8] sm:$0xff] %v669
    %754 = vst [vmem:[#allocation8 + $0x1d0] sm:$0xff] %v674
    %755 = vst [vmem:[#allocation8 + $0x1d8] sm:$0xff] %v677
    %756 = vst [vmem:[#allocation8 + $0x1e0] sm:$0xff] %v682
    %757 = vst [vmem:[#allocation8 + $0x1e8] sm:$0xff] %v685
    %758 = vst [vmem:[#allocation8 + $0x1f0] sm:$0xff] %v690
    %759 = vst [vmem:[#allocation8 + $0x1f8] sm:$0xff] %v693
    // Predicated region
    $region26: #{deform_bottleneck_forward.5} parent=1 // pred_check
      _
    $region27: #{deform_bottleneck_forward.5} parent=1 // pred_check_branch
      %761 = sbr.rel (0) target = $region29
    $region28: #{deform_bottleneck_forward.5} parent=1 // pred_region
      %s763 = ssub.s32 8192, 8192
      %764 = vsyncadd [#allocation4], %s763
      %s765 = sshll.u32 [#allocation8], 4
      %s766 = int_to_ptr.vmem [resolvable:$true] %s765
      %771 = dma.vmem_to_hbm [thread:$0]  %s766, 8192, %s3, [#allocation4], 128, 128, 8
    $region29: #{deform_bottleneck_forward.5} parent=1 // pred_fallthru
      _
    // Predicated region
    $region30: #{deform_bottleneck_forward.5} parent=1 // pred_check
      _
    $region31: #{deform_bottleneck_forward.5} parent=1 // pred_check_branch
      %773 = sbr.rel (0) target = $region33
    $region32: #{deform_bottleneck_forward.5} parent=1 // pred_region
      %774 = dma.done [#allocation4], 8192
    $region33: #{deform_bottleneck_forward.5} parent=1 // pred_fallthru
      _
    %775 = vsyncpa [#allocation3], 1
    %776 = vsyncpa [#allocation6], 1
    %777 = vsyncpa [#allocation4], 1

// kernel: deform_bottleneck_forward.6
$region0: #{deform_bottleneck_forward.6}
  #allocation0 [shape = 'u32[]', space=smem, size = 0x4, offset = 0x4, fixed_abs, tag = 'smem constant byte address 0x4 - core index']
  #allocation1 [shape = 'u32[144,128]{1,0:T(1,128)}', space=vmem, size = 0x12000, scoped, tag = 'internal scratch']
  %s0 = inlined_call_operand.hbm [shape: bf16[512,36], index: 0, kind: input, shape index: {}]
  %s1 = inlined_call_operand.hbm [shape: bf16[36,128], index: 1, kind: input, shape index: {}]
  %s2 = inlined_call_operand.hbm [shape: f32[1,128], index: 2, kind: input, shape index: {}]
  %s3 = inlined_call_operand.hbm [shape: bf16[512,128], index: 3, kind: output, shape index: {}]
  %s4 = sld [smem:[#allocation0]]
  $region34: #{deform_bottleneck_forward.6} parent=0
    _
  %s6 = ssub.s32 1, %s4
  %s7 = scalar_select 0, %s6, %s4
  $region1: #{deform_bottleneck_forward.6} parent=0
    #allocation2 [shape = 'u8[131072]{0}', space=vmem, size = 0x20000, scoped, tag = 'input window, operand 0, single buffered']
    #allocation3 [shape = 's32[1]{0}', space=sflag, size = 0x4, scoped, tag = 'scoped memory for deform_bottleneck_forward.6']
    #allocation4 [shape = 's32[1]{0}', space=sflag, size = 0x4, scoped, tag = 'scoped memory for deform_bottleneck_forward.6']
    #allocation5 [shape = 'u8[10240]{0}', space=vmem, size = 0x2800, scoped, tag = 'input window, operand 1, single buffered']
    #allocation6 [shape = 's32[1]{0}', space=sflag, size = 0x4, scoped, tag = 'scoped memory for deform_bottleneck_forward.6']
    #allocation7 [shape = 'u8[512]{0}', space=vmem, size = 0x400, scoped, tag = 'input window, operand 2, single buffered']
    #allocation8 [shape = 'u8[131072]{0}', space=vmem, size = 0x20000, scoped, tag = 'output window, operand 0, single buffered']
    %8 = vsyncpa [#allocation3], 0
    %9 = vsyncpa [#allocation6], 0
    %10 = vsyncpa [#allocation4], 0
    // Predicated region
    $region2: #{deform_bottleneck_forward.6} parent=1 // pred_check
      _
    $region3: #{deform_bottleneck_forward.6} parent=1 // pred_check_branch
      %12 = sbr.rel (0) target = $region5
    $region4: #{deform_bottleneck_forward.6} parent=1 // pred_region
      %s14 = ssub.s32 4096, 4096
      %15 = vsyncadd [#allocation3], %s14
      %s16 = sshll.u32 [#allocation2], 4
      %s17 = int_to_ptr.vmem [resolvable:$true] %s16
      %22 = dma.hbm_to_vmem [thread:$0]  %s0, 4096, %s17, [#allocation3], 64, 64, 4
    $region5: #{deform_bottleneck_forward.6} parent=1 // pred_fallthru
      _
    // Predicated region
    $region6: #{deform_bottleneck_forward.6} parent=1 // pred_check
      _
    $region7: #{deform_bottleneck_forward.6} parent=1 // pred_check_branch
      %24 = sbr.rel (0) target = $region9
    $region8: #{deform_bottleneck_forward.6} parent=1 // pred_region
      %s26 = ssub.s32 320, 320
      %27 = vsyncadd [#allocation6], %s26
      %s28 = sshll.u32 [#allocation5], 4
      %s29 = int_to_ptr.vmem [resolvable:$true] %s28
      %34 = dma.hbm_to_vmem [thread:$0]  %s1, 320, %s29, [#allocation6], 64, 64, 4
    $region9: #{deform_bottleneck_forward.6} parent=1 // pred_fallthru
      _
    // Predicated region
    $region10: #{deform_bottleneck_forward.6} parent=1 // pred_check
      _
    $region11: #{deform_bottleneck_forward.6} parent=1 // pred_check_branch
      %36 = sbr.rel (0) target = $region13
    $region12: #{deform_bottleneck_forward.6} parent=1 // pred_region
      %s38 = ssub.s32 16, 16
      %39 = vsyncadd [#allocation6], %s38
      %s41 = sshll.u32 [#allocation7], 4
      %s42 = int_to_ptr.vmem [resolvable:$true] %s41
      %44 = dma.hbm_to_vmem [thread:$0]  %s2, 16, %s42, [#allocation6]
    $region13: #{deform_bottleneck_forward.6} parent=1 // pred_fallthru
      _
    // Predicated region
    $region14: #{deform_bottleneck_forward.6} parent=1 // pred_check
      _
    $region15: #{deform_bottleneck_forward.6} parent=1 // pred_check_branch
      %46 = sbr.rel (0) target = $region17
    $region16: #{deform_bottleneck_forward.6} parent=1 // pred_region
      %47 = dma.done [#allocation3], 4096
    $region17: #{deform_bottleneck_forward.6} parent=1 // pred_fallthru
      _
    // Predicated region
    $region18: #{deform_bottleneck_forward.6} parent=1 // pred_check
      _
    $region19: #{deform_bottleneck_forward.6} parent=1 // pred_check_branch
      %49 = sbr.rel (0) target = $region21
    $region20: #{deform_bottleneck_forward.6} parent=1 // pred_region
      %50 = dma.done [#allocation6], 320
    $region21: #{deform_bottleneck_forward.6} parent=1 // pred_fallthru
      _
    // Predicated region
    $region22: #{deform_bottleneck_forward.6} parent=1 // pred_check
      _
    $region23: #{deform_bottleneck_forward.6} parent=1 // pred_check_branch
      %52 = sbr.rel (0) target = $region25
    $region24: #{deform_bottleneck_forward.6} parent=1 // pred_region
      %53 = dma.done [#allocation6], 16
    $region25: #{deform_bottleneck_forward.6} parent=1 // pred_fallthru
      _
    %v55 = vld [vmem:[#allocation2] sm:$0xf]
    %v56 = vld [vmem:[#allocation2 + $0x4] sm:$0xf]
    %v57 = vld [vmem:[#allocation2 + $0x8] sm:$0xf]
    %v58 = vld [vmem:[#allocation2 + $0xc] sm:$0xf]
    %v59 = vld [vmem:[#allocation2 + $0x10] sm:$0xf]
    %v60 = vld [vmem:[#allocation2 + $0x14] sm:$0xf]
    %v61 = vld [vmem:[#allocation2 + $0x18] sm:$0xf]
    %v62 = vld [vmem:[#allocation2 + $0x1c] sm:$0xf]
    %v63 = vld [vmem:[#allocation2 + $0x20] sm:$0xf]
    %v64 = vld [vmem:[#allocation2 + $0x24] sm:$0xf]
    %v65 = vld [vmem:[#allocation2 + $0x28] sm:$0xf]
    %v66 = vld [vmem:[#allocation2 + $0x2c] sm:$0xf]
    %v67 = vld [vmem:[#allocation2 + $0x30] sm:$0xf]
    %v68 = vld [vmem:[#allocation2 + $0x34] sm:$0xf]
    %v69 = vld [vmem:[#allocation2 + $0x38] sm:$0xf]
    %v70 = vld [vmem:[#allocation2 + $0x3c] sm:$0xf]
    %v71 = vld [vmem:[#allocation2 + $0x40] sm:$0xf]
    %v72 = vld [vmem:[#allocation2 + $0x44] sm:$0xf]
    %v73 = vld [vmem:[#allocation2 + $0x48] sm:$0xf]
    %v74 = vld [vmem:[#allocation2 + $0x4c] sm:$0xf]
    %v75 = vld [vmem:[#allocation2 + $0x50] sm:$0xf]
    %v76 = vld [vmem:[#allocation2 + $0x54] sm:$0xf]
    %v77 = vld [vmem:[#allocation2 + $0x58] sm:$0xf]
    %v78 = vld [vmem:[#allocation2 + $0x5c] sm:$0xf]
    %v79 = vld [vmem:[#allocation2 + $0x60] sm:$0xf]
    %v80 = vld [vmem:[#allocation2 + $0x64] sm:$0xf]
    %v81 = vld [vmem:[#allocation2 + $0x68] sm:$0xf]
    %v82 = vld [vmem:[#allocation2 + $0x6c] sm:$0xf]
    %v83 = vld [vmem:[#allocation2 + $0x70] sm:$0xf]
    %v84 = vld [vmem:[#allocation2 + $0x74] sm:$0xf]
    %v85 = vld [vmem:[#allocation2 + $0x78] sm:$0xf]
    %v86 = vld [vmem:[#allocation2 + $0x7c] sm:$0xf]
    %v87 = vld [vmem:[#allocation2 + $0x80] sm:$0xf]
    %v88 = vld [vmem:[#allocation2 + $0x84] sm:$0xf]
    %v89 = vld [vmem:[#allocation2 + $0x88] sm:$0xf]
    %v90 = vld [vmem:[#allocation2 + $0x8c] sm:$0xf]
    %v91 = vld [vmem:[#allocation2 + $0x90] sm:$0xf]
    %v92 = vld [vmem:[#allocation2 + $0x94] sm:$0xf]
    %v93 = vld [vmem:[#allocation2 + $0x98] sm:$0xf]
    %v94 = vld [vmem:[#allocation2 + $0x9c] sm:$0xf]
    %v95 = vld [vmem:[#allocation2 + $0xa0] sm:$0xf]
    %v96 = vld [vmem:[#allocation2 + $0xa4] sm:$0xf]
    %v97 = vld [vmem:[#allocation2 + $0xa8] sm:$0xf]
    %v98 = vld [vmem:[#allocation2 + $0xac] sm:$0xf]
    %v99 = vld [vmem:[#allocation2 + $0xb0] sm:$0xf]
    %v100 = vld [vmem:[#allocation2 + $0xb4] sm:$0xf]
    %v101 = vld [vmem:[#allocation2 + $0xb8] sm:$0xf]
    %v102 = vld [vmem:[#allocation2 + $0xbc] sm:$0xf]
    %v103 = vld [vmem:[#allocation2 + $0xc0] sm:$0xf]
    %v104 = vld [vmem:[#allocation2 + $0xc4] sm:$0xf]
    %v105 = vld [vmem:[#allocation2 + $0xc8] sm:$0xf]
    %v106 = vld [vmem:[#allocation2 + $0xcc] sm:$0xf]
    %v107 = vld [vmem:[#allocation2 + $0xd0] sm:$0xf]
    %v108 = vld [vmem:[#allocation2 + $0xd4] sm:$0xf]
    %v109 = vld [vmem:[#allocation2 + $0xd8] sm:$0xf]
    %v110 = vld [vmem:[#allocation2 + $0xdc] sm:$0xf]
    %v111 = vld [vmem:[#allocation2 + $0xe0] sm:$0xf]
    %v112 = vld [vmem:[#allocation2 + $0xe4] sm:$0xf]
    %v113 = vld [vmem:[#allocation2 + $0xe8] sm:$0xf]
    %v114 = vld [vmem:[#allocation2 + $0xec] sm:$0xf]
    %v115 = vld [vmem:[#allocation2 + $0xf0] sm:$0xf]
    %v116 = vld [vmem:[#allocation2 + $0xf4] sm:$0xf]
    %v117 = vld [vmem:[#allocation2 + $0xf8] sm:$0xf]
    %v118 = vld [vmem:[#allocation2 + $0xfc] sm:$0xf]
    %v119 = vld [vmem:[#allocation5] sm:$0xf]
    %v120 = vld [vmem:[#allocation5 + $0x4] sm:$0xf]
    %v121 = vld [vmem:[#allocation5 + $0x8] sm:$0xf]
    %v122 = vld [vmem:[#allocation5 + $0xc] sm:$0xf]
    %v123 = vld [vmem:[#allocation5 + $0x10] sm:$0x3]
    %v124 = vld [vmem:[#allocation7] sm:$0x1]
    %v126 = vlaneseq
    %v127 = vshrl.u32 %v126, 7
    %v128 = vsub.s32 0, %v127
    %v129 = vrot.slane %v124, %v128
    %v195 = vunpack.c.l.b16 %v55
    %v196 = vunpack.c.l.b16 %v56
    %v197 = vunpack.c.l.b16 %v57
    %v198 = vunpack.c.l.b16 %v58
    %v199 = vunpack.c.l.b16 %v59
    %v200 = vunpack.c.l.b16 %v60
    %v201 = vunpack.c.l.b16 %v61
    %v202 = vunpack.c.l.b16 %v62
    %v203 = vunpack.c.l.b16 %v63
    %v204 = vunpack.c.l.b16 %v64
    %v205 = vunpack.c.l.b16 %v65
    %v206 = vunpack.c.l.b16 %v66
    %v207 = vunpack.c.l.b16 %v67
    %v208 = vunpack.c.l.b16 %v68
    %v209 = vunpack.c.l.b16 %v69
    %v210 = vunpack.c.l.b16 %v70
    %v211 = vunpack.c.l.b16 %v71
    %v212 = vunpack.c.l.b16 %v72
    %v213 = vunpack.c.l.b16 %v73
    %v214 = vunpack.c.l.b16 %v74
    %v215 = vunpack.c.l.b16 %v75
    %v216 = vunpack.c.l.b16 %v76
    %v217 = vunpack.c.l.b16 %v77
    %v218 = vunpack.c.l.b16 %v78
    %v219 = vunpack.c.l.b16 %v79
    %v220 = vunpack.c.l.b16 %v80
    %v221 = vunpack.c.l.b16 %v81
    %v222 = vunpack.c.l.b16 %v82
    %v223 = vunpack.c.l.b16 %v83
    %v224 = vunpack.c.l.b16 %v84
    %v225 = vunpack.c.l.b16 %v85
    %v226 = vunpack.c.l.b16 %v86
    %v227 = vunpack.c.l.b16 %v87
    %v228 = vunpack.c.l.b16 %v88
    %v229 = vunpack.c.l.b16 %v89
    %v230 = vunpack.c.l.b16 %v90
    %v231 = vunpack.c.l.b16 %v91
    %v232 = vunpack.c.l.b16 %v92
    %v233 = vunpack.c.l.b16 %v93
    %v234 = vunpack.c.l.b16 %v94
    %v235 = vunpack.c.l.b16 %v95
    %v236 = vunpack.c.l.b16 %v96
    %v237 = vunpack.c.l.b16 %v97
    %v238 = vunpack.c.l.b16 %v98
    %v239 = vunpack.c.l.b16 %v99
    %v240 = vunpack.c.l.b16 %v100
    %v241 = vunpack.c.l.b16 %v101
    %v242 = vunpack.c.l.b16 %v102
    %v243 = vunpack.c.l.b16 %v103
    %v244 = vunpack.c.l.b16 %v104
    %v245 = vunpack.c.l.b16 %v105
    %v246 = vunpack.c.l.b16 %v106
    %v247 = vunpack.c.l.b16 %v107
    %v248 = vunpack.c.l.b16 %v108
    %v249 = vunpack.c.l.b16 %v109
    %v250 = vunpack.c.l.b16 %v110
    %v251 = vunpack.c.l.b16 %v111
    %v252 = vunpack.c.l.b16 %v112
    %v253 = vunpack.c.l.b16 %v113
    %v254 = vunpack.c.l.b16 %v114
    %v255 = vunpack.c.l.b16 %v115
    %v256 = vunpack.c.l.b16 %v116
    %v257 = vunpack.c.l.b16 %v117
    %v258 = vunpack.c.l.b16 %v118
    %v259 = vpack.c.b16 %v196, %v195
    %v260 = vpack.c.b16 %v198, %v197
    %v261 = vpack.c.b16 %v200, %v199
    %v262 = vpack.c.b16 %v202, %v201
    %v263 = vpack.c.b16 %v204, %v203
    %v264 = vpack.c.b16 %v206, %v205
    %v265 = vpack.c.b16 %v208, %v207
    %v266 = vpack.c.b16 %v210, %v209
    %v267 = vpack.c.b16 %v212, %v211
    %v268 = vpack.c.b16 %v214, %v213
    %v269 = vpack.c.b16 %v216, %v215
    %v270 = vpack.c.b16 %v218, %v217
    %v271 = vpack.c.b16 %v220, %v219
    %v272 = vpack.c.b16 %v222, %v221
    %v273 = vpack.c.b16 %v224, %v223
    %v274 = vpack.c.b16 %v226, %v225
    %v275 = vpack.c.b16 %v228, %v227
    %v276 = vpack.c.b16 %v230, %v229
    %v277 = vpack.c.b16 %v232, %v231
    %v278 = vpack.c.b16 %v234, %v233
    %v279 = vpack.c.b16 %v236, %v235
    %v280 = vpack.c.b16 %v238, %v237
    %v281 = vpack.c.b16 %v240, %v239
    %v282 = vpack.c.b16 %v242, %v241
    %v283 = vpack.c.b16 %v244, %v243
    %v284 = vpack.c.b16 %v246, %v245
    %v285 = vpack.c.b16 %v248, %v247
    %v286 = vpack.c.b16 %v250, %v249
    %v287 = vpack.c.b16 %v252, %v251
    %v288 = vpack.c.b16 %v254, %v253
    %v289 = vpack.c.b16 %v256, %v255
    %v290 = vpack.c.b16 %v258, %v257
    %v296 = vunpack.c.l.b16 %v119
    %v297 = vunpack.c.l.b16 %v120
    %v298 = vunpack.c.l.b16 %v121
    %v299 = vunpack.c.l.b16 %v122
    %v300 = vunpack.c.l.b16 %v123
    %v301 = vpack.c.b16 %v297, %v296
    %v302 = vpack.c.b16 %v299, %v298
    %v303 = vpack.c.b16 %v300, %v300
    %vm306 = vcmask 293888
    %v308 = vsel %vm306, %v259, 0
    %v311 = vsel %vm306, %v260, 0
    %v314 = vsel %vm306, %v261, 0
    %v317 = vsel %vm306, %v262, 0
    %v320 = vsel %vm306, %v263, 0
    %v323 = vsel %vm306, %v264, 0
    %v326 = vsel %vm306, %v265, 0
    %v329 = vsel %vm306, %v266, 0
    %v332 = vsel %vm306, %v267, 0
    %v335 = vsel %vm306, %v268, 0
    %v338 = vsel %vm306, %v269, 0
    %v341 = vsel %vm306, %v270, 0
    %v344 = vsel %vm306, %v271, 0
    %v347 = vsel %vm306, %v272, 0
    %v350 = vsel %vm306, %v273, 0
    %v353 = vsel %vm306, %v274, 0
    %v356 = vsel %vm306, %v275, 0
    %v359 = vsel %vm306, %v276, 0
    %v362 = vsel %vm306, %v277, 0
    %v365 = vsel %vm306, %v278, 0
    %v368 = vsel %vm306, %v279, 0
    %v371 = vsel %vm306, %v280, 0
    %v374 = vsel %vm306, %v281, 0
    %v377 = vsel %vm306, %v282, 0
    %v380 = vsel %vm306, %v283, 0
    %v383 = vsel %vm306, %v284, 0
    %v386 = vsel %vm306, %v285, 0
    %v389 = vsel %vm306, %v286, 0
    %v392 = vsel %vm306, %v287, 0
    %v395 = vsel %vm306, %v288, 0
    %v398 = vsel %vm306, %v289, 0
    %v401 = vsel %vm306, %v290, 0
    %vm403 = vcmask 1041408
    %v405 = vsel %vm403, %v303, 0
    %407 = vmatprep.subr.bf16.mxu0 0
    %408 = vmatpush1.bf16.msra.mxu0 %v301
    %409 = vmatprep.subr.bf16.mxu0 0
    %410 = vmatpush1.bf16.msra.mxu0 %v302
    %411 = vmatprep.subr.bf16.mxu0 0
    %412 = vmatpush1.bf16.msra.mxu0 %v405
    %413 = vmatprep.subr.bf16.mxu0 0
    %414 = vmatpush1.bf16.msra.mxu0 0
    %415 = vmatprep.subr.bf16.mxu0 0
    %416 = vmatpush1.bf16.msra.mxu0 0
    %417 = vmatprep.subr.bf16.mxu0 0
    %418 = vmatpush1.bf16.msra.mxu0 0
    %419 = vmatprep.subr.bf16.mxu0 0
    %420 = vmatpush1.bf16.msra.mxu0 0
    %421 = vmatprep.subr.bf16.mxu0 0
    %422 = vmatpush1.bf16.msra.mxu0 0
    %423 = vmatprep.subr.bf16.mxu0 0
    %424 = vmatpush1.bf16.msra.mxu0 0
    %425 = vmatprep.subr.bf16.mxu0 0
    %426 = vmatpush1.bf16.msra.mxu0 0
    %427 = vmatprep.subr.bf16.mxu0 0
    %428 = vmatpush1.bf16.msra.mxu0 0
    %429 = vmatprep.subr.bf16.mxu0 0
    %430 = vmatpush1.bf16.msra.mxu0 0
    %431 = vmatprep.subr.bf16.mxu0 0
    %432 = vmatpush1.bf16.msra.mxu0 0
    %433 = vmatprep.subr.bf16.mxu0 0
    %434 = vmatpush1.bf16.msra.mxu0 0
    %435 = vmatprep.subr.bf16.mxu0 0
    %436 = vmatpush1.bf16.msra.mxu0 0
    %437 = vmatprep.subr.bf16.mxu0 0
    %438 = vmatpush1.bf16.msra.mxu0 0
    %439 = vmatprep.mubr.bf16.mxu0 0
    %440 = vmatmul.mubr.bf16.gmra.mrb[0].mxu0 %v308
    %v441 = vpop.f32.mrb[0].mxu0
    %v442 = vadd.f32 %v129, %v441
    %v443 = vpop.f32.mrb[0].mxu0
    %v444 = vpop.f32.mrb[0].mxu0
    %v445 = vadd.f32 %v129, %v444
    %v446 = vpop.f32.mrb[0].mxu0
    %447 = vmatprep.mubr.bf16.mxu0 0
    %448 = vmatmul.mubr.bf16.gmra.mrb[0].mxu0 %v311
    %v449 = vpop.f32.mrb[0].mxu0
    %v450 = vadd.f32 %v129, %v449
    %v451 = vpop.f32.mrb[0].mxu0
    %v452 = vpop.f32.mrb[0].mxu0
    %v453 = vadd.f32 %v129, %v452
    %v454 = vpop.f32.mrb[0].mxu0
    %455 = vmatprep.mubr.bf16.mxu0 0
    %456 = vmatmul.mubr.bf16.gmra.mrb[0].mxu0 %v314
    %v457 = vpop.f32.mrb[0].mxu0
    %v458 = vadd.f32 %v129, %v457
    %v459 = vpop.f32.mrb[0].mxu0
    %v460 = vpop.f32.mrb[0].mxu0
    %v461 = vadd.f32 %v129, %v460
    %v462 = vpop.f32.mrb[0].mxu0
    %463 = vmatprep.mubr.bf16.mxu0 0
    %464 = vmatmul.mubr.bf16.gmra.mrb[0].mxu0 %v317
    %v465 = vpop.f32.mrb[0].mxu0
    %v466 = vadd.f32 %v129, %v465
    %v467 = vpop.f32.mrb[0].mxu0
    %v468 = vpop.f32.mrb[0].mxu0
    %v469 = vadd.f32 %v129, %v468
    %v470 = vpop.f32.mrb[0].mxu0
    %471 = vmatprep.mubr.bf16.mxu0 0
    %472 = vmatmul.mubr.bf16.gmra.mrb[0].mxu0 %v320
    %v473 = vpop.f32.mrb[0].mxu0
    %v474 = vadd.f32 %v129, %v473
    %v475 = vpop.f32.mrb[0].mxu0
    %v476 = vpop.f32.mrb[0].mxu0
    %v477 = vadd.f32 %v129, %v476
    %v478 = vpop.f32.mrb[0].mxu0
    %479 = vmatprep.mubr.bf16.mxu0 0
    %480 = vmatmul.mubr.bf16.gmra.mrb[0].mxu0 %v323
    %v481 = vpop.f32.mrb[0].mxu0
    %v482 = vadd.f32 %v129, %v481
    %v483 = vpop.f32.mrb[0].mxu0
    %v484 = vpop.f32.mrb[0].mxu0
    %v485 = vadd.f32 %v129, %v484
    %v486 = vpop.f32.mrb[0].mxu0
    %487 = vmatprep.mubr.bf16.mxu0 0
    %488 = vmatmul.mubr.bf16.gmra.mrb[0].mxu0 %v326
    %v489 = vpop.f32.mrb[0].mxu0
    %v490 = vadd.f32 %v129, %v489
    %v491 = vpop.f32.mrb[0].mxu0
    %v492 = vpop.f32.mrb[0].mxu0
    %v493 = vadd.f32 %v129, %v492
    %v494 = vpop.f32.mrb[0].mxu0
    %495 = vmatprep.mubr.bf16.mxu0 0
    %496 = vmatmul.mubr.bf16.gmra.mrb[0].mxu0 %v329
    %v497 = vpop.f32.mrb[0].mxu0
    %v498 = vadd.f32 %v129, %v497
    %v499 = vpop.f32.mrb[0].mxu0
    %v500 = vpop.f32.mrb[0].mxu0
    %v501 = vadd.f32 %v129, %v500
    %v502 = vpop.f32.mrb[0].mxu0
    %503 = vmatprep.mubr.bf16.mxu0 0
    %504 = vmatmul.mubr.bf16.gmra.mrb[0].mxu0 %v332
    %v505 = vpop.f32.mrb[0].mxu0
    %v506 = vadd.f32 %v129, %v505
    %v507 = vpop.f32.mrb[0].mxu0
    %v508 = vpop.f32.mrb[0].mxu0
    %v509 = vadd.f32 %v129, %v508
    %v510 = vpop.f32.mrb[0].mxu0
    %511 = vmatprep.mubr.bf16.mxu0 0
    %512 = vmatmul.mubr.bf16.gmra.mrb[0].mxu0 %v335
    %v513 = vpop.f32.mrb[0].mxu0
    %v514 = vadd.f32 %v129, %v513
    %v515 = vpop.f32.mrb[0].mxu0
    %v516 = vpop.f32.mrb[0].mxu0
    %v517 = vadd.f32 %v129, %v516
    %v518 = vpop.f32.mrb[0].mxu0
    %519 = vmatprep.mubr.bf16.mxu0 0
    %520 = vmatmul.mubr.bf16.gmra.mrb[0].mxu0 %v338
    %v521 = vpop.f32.mrb[0].mxu0
    %v522 = vadd.f32 %v129, %v521
    %v523 = vpop.f32.mrb[0].mxu0
    %v524 = vpop.f32.mrb[0].mxu0
    %v525 = vadd.f32 %v129, %v524
    %v526 = vpop.f32.mrb[0].mxu0
    %527 = vmatprep.mubr.bf16.mxu0 0
    %528 = vmatmul.mubr.bf16.gmra.mrb[0].mxu0 %v341
    %v529 = vpop.f32.mrb[0].mxu0
    %v530 = vadd.f32 %v129, %v529
    %v531 = vpop.f32.mrb[0].mxu0
    %v532 = vpop.f32.mrb[0].mxu0
    %v533 = vadd.f32 %v129, %v532
    %v534 = vpop.f32.mrb[0].mxu0
    %535 = vmatprep.mubr.bf16.mxu0 0
    %536 = vmatmul.mubr.bf16.gmra.mrb[0].mxu0 %v344
    %v537 = vpop.f32.mrb[0].mxu0
    %v538 = vadd.f32 %v129, %v537
    %v539 = vpop.f32.mrb[0].mxu0
    %v540 = vpop.f32.mrb[0].mxu0
    %v541 = vadd.f32 %v129, %v540
    %v542 = vpop.f32.mrb[0].mxu0
    %543 = vmatprep.mubr.bf16.mxu0 0
    %544 = vmatmul.mubr.bf16.gmra.mrb[0].mxu0 %v347
    %v545 = vpop.f32.mrb[0].mxu0
    %v546 = vadd.f32 %v129, %v545
    %v547 = vpop.f32.mrb[0].mxu0
    %v548 = vpop.f32.mrb[0].mxu0
    %v549 = vadd.f32 %v129, %v548
    %v550 = vpop.f32.mrb[0].mxu0
    %551 = vmatprep.mubr.bf16.mxu0 0
    %552 = vmatmul.mubr.bf16.gmra.mrb[0].mxu0 %v350
    %v553 = vpop.f32.mrb[0].mxu0
    %v554 = vadd.f32 %v129, %v553
    %v555 = vpop.f32.mrb[0].mxu0
    %v556 = vpop.f32.mrb[0].mxu0
    %v557 = vadd.f32 %v129, %v556
    %v558 = vpop.f32.mrb[0].mxu0
    %559 = vmatprep.mubr.bf16.mxu0 0
    %560 = vmatmul.mubr.bf16.gmra.mrb[0].mxu0 %v353
    %v561 = vpop.f32.mrb[0].mxu0
    %v562 = vadd.f32 %v129, %v561
    %v563 = vpop.f32.mrb[0].mxu0
    %v564 = vpop.f32.mrb[0].mxu0
    %v565 = vadd.f32 %v129, %v564
    %v566 = vpop.f32.mrb[0].mxu0
    %567 = vmatprep.mubr.bf16.mxu0 0
    %568 = vmatmul.mubr.bf16.gmra.mrb[0].mxu0 %v356
    %v569 = vpop.f32.mrb[0].mxu0
    %v570 = vadd.f32 %v129, %v569
    %v571 = vpop.f32.mrb[0].mxu0
    %v572 = vpop.f32.mrb[0].mxu0
    %v573 = vadd.f32 %v129, %v572
    %v574 = vpop.f32.mrb[0].mxu0
    %575 = vmatprep.mubr.bf16.mxu0 0
    %576 = vmatmul.mubr.bf16.gmra.mrb[0].mxu0 %v359
    %v577 = vpop.f32.mrb[0].mxu0
    %v578 = vadd.f32 %v129, %v577
    %v579 = vpop.f32.mrb[0].mxu0
    %v580 = vpop.f32.mrb[0].mxu0
    %v581 = vadd.f32 %v129, %v580
    %v582 = vpop.f32.mrb[0].mxu0
    %583 = vmatprep.mubr.bf16.mxu0 0
    %584 = vmatmul.mubr.bf16.gmra.mrb[0].mxu0 %v362
    %v585 = vpop.f32.mrb[0].mxu0
    %v586 = vadd.f32 %v129, %v585
    %v587 = vpop.f32.mrb[0].mxu0
    %v588 = vpop.f32.mrb[0].mxu0
    %v589 = vadd.f32 %v129, %v588
    %v590 = vpop.f32.mrb[0].mxu0
    %591 = vmatprep.mubr.bf16.mxu0 0
    %592 = vmatmul.mubr.bf16.gmra.mrb[0].mxu0 %v365
    %v593 = vpop.f32.mrb[0].mxu0
    %v594 = vadd.f32 %v129, %v593
    %v595 = vpop.f32.mrb[0].mxu0
    %v596 = vpop.f32.mrb[0].mxu0
    %v597 = vadd.f32 %v129, %v596
    %v598 = vpop.f32.mrb[0].mxu0
    %599 = vmatprep.mubr.bf16.mxu0 0
    %600 = vmatmul.mubr.bf16.gmra.mrb[0].mxu0 %v368
    %v601 = vpop.f32.mrb[0].mxu0
    %v602 = vadd.f32 %v129, %v601
    %v603 = vpop.f32.mrb[0].mxu0
    %v604 = vpop.f32.mrb[0].mxu0
    %v605 = vadd.f32 %v129, %v604
    %v606 = vpop.f32.mrb[0].mxu0
    %607 = vmatprep.mubr.bf16.mxu0 0
    %608 = vmatmul.mubr.bf16.gmra.mrb[0].mxu0 %v371
    %v609 = vpop.f32.mrb[0].mxu0
    %v610 = vadd.f32 %v129, %v609
    %v611 = vpop.f32.mrb[0].mxu0
    %v612 = vpop.f32.mrb[0].mxu0
    %v613 = vadd.f32 %v129, %v612
    %v614 = vpop.f32.mrb[0].mxu0
    %615 = vmatprep.mubr.bf16.mxu0 0
    %616 = vmatmul.mubr.bf16.gmra.mrb[0].mxu0 %v374
    %v617 = vpop.f32.mrb[0].mxu0
    %v618 = vadd.f32 %v129, %v617
    %v619 = vpop.f32.mrb[0].mxu0
    %v620 = vpop.f32.mrb[0].mxu0
    %v621 = vadd.f32 %v129, %v620
    %v622 = vpop.f32.mrb[0].mxu0
    %623 = vmatprep.mubr.bf16.mxu0 0
    %624 = vmatmul.mubr.bf16.gmra.mrb[0].mxu0 %v377
    %v625 = vpop.f32.mrb[0].mxu0
    %v626 = vadd.f32 %v129, %v625
    %v627 = vpop.f32.mrb[0].mxu0
    %v628 = vpop.f32.mrb[0].mxu0
    %v629 = vadd.f32 %v129, %v628
    %v630 = vpop.f32.mrb[0].mxu0
    %631 = vmatprep.mubr.bf16.mxu0 0
    %632 = vmatmul.mubr.bf16.gmra.mrb[0].mxu0 %v380
    %v633 = vpop.f32.mrb[0].mxu0
    %v634 = vadd.f32 %v129, %v633
    %v635 = vpop.f32.mrb[0].mxu0
    %v636 = vpop.f32.mrb[0].mxu0
    %v637 = vadd.f32 %v129, %v636
    %v638 = vpop.f32.mrb[0].mxu0
    %639 = vmatprep.mubr.bf16.mxu0 0
    %640 = vmatmul.mubr.bf16.gmra.mrb[0].mxu0 %v383
    %v641 = vpop.f32.mrb[0].mxu0
    %v642 = vadd.f32 %v129, %v641
    %v643 = vpop.f32.mrb[0].mxu0
    %v644 = vpop.f32.mrb[0].mxu0
    %v645 = vadd.f32 %v129, %v644
    %v646 = vpop.f32.mrb[0].mxu0
    %647 = vmatprep.mubr.bf16.mxu0 0
    %648 = vmatmul.mubr.bf16.gmra.mrb[0].mxu0 %v386
    %v649 = vpop.f32.mrb[0].mxu0
    %v650 = vadd.f32 %v129, %v649
    %v651 = vpop.f32.mrb[0].mxu0
    %v652 = vpop.f32.mrb[0].mxu0
    %v653 = vadd.f32 %v129, %v652
    %v654 = vpop.f32.mrb[0].mxu0
    %655 = vmatprep.mubr.bf16.mxu0 0
    %656 = vmatmul.mubr.bf16.gmra.mrb[0].mxu0 %v389
    %v657 = vpop.f32.mrb[0].mxu0
    %v658 = vadd.f32 %v129, %v657
    %v659 = vpop.f32.mrb[0].mxu0
    %v660 = vpop.f32.mrb[0].mxu0
    %v661 = vadd.f32 %v129, %v660
    %v662 = vpop.f32.mrb[0].mxu0
    %663 = vmatprep.mubr.bf16.mxu0 0
    %664 = vmatmul.mubr.bf16.gmra.mrb[0].mxu0 %v392
    %v665 = vpop.f32.mrb[0].mxu0
    %v666 = vadd.f32 %v129, %v665
    %v667 = vpop.f32.mrb[0].mxu0
    %v668 = vpop.f32.mrb[0].mxu0
    %v669 = vadd.f32 %v129, %v668
    %v670 = vpop.f32.mrb[0].mxu0
    %671 = vmatprep.mubr.bf16.mxu0 0
    %672 = vmatmul.mubr.bf16.gmra.mrb[0].mxu0 %v395
    %v673 = vpop.f32.mrb[0].mxu0
    %v674 = vadd.f32 %v129, %v673
    %v675 = vpop.f32.mrb[0].mxu0
    %v676 = vpop.f32.mrb[0].mxu0
    %v677 = vadd.f32 %v129, %v676
    %v678 = vpop.f32.mrb[0].mxu0
    %679 = vmatprep.mubr.bf16.mxu0 0
    %680 = vmatmul.mubr.bf16.gmra.mrb[0].mxu0 %v398
    %v681 = vpop.f32.mrb[0].mxu0
    %v682 = vadd.f32 %v129, %v681
    %v683 = vpop.f32.mrb[0].mxu0
    %v684 = vpop.f32.mrb[0].mxu0
    %v685 = vadd.f32 %v129, %v684
    %v686 = vpop.f32.mrb[0].mxu0
    %687 = vmatprep.mubr.bf16.mxu0 0
    %688 = vmatmul.mubr.bf16.gmra.mrb[0].mxu0 %v401
    %v689 = vpop.f32.mrb[0].mxu0
    %v690 = vadd.f32 %v129, %v689
    %v691 = vpop.f32.mrb[0].mxu0
    %v692 = vpop.f32.mrb[0].mxu0
    %v693 = vadd.f32 %v129, %v692
    %v694 = vpop.f32.mrb[0].mxu0
    %695 = vdwg.mxu0
    %v696 = vmax.f32 %v442, 0.0
    %v697 = vmax.f32 %v445, 0.0
    %v698 = vmax.f32 %v450, 0.0
    %v699 = vmax.f32 %v453, 0.0
    %v700 = vmax.f32 %v458, 0.0
    %v701 = vmax.f32 %v461, 0.0
    %v702 = vmax.f32 %v466, 0.0
    %v703 = vmax.f32 %v469, 0.0
    %v704 = vmax.f32 %v474, 0.0
    %v705 = vmax.f32 %v477, 0.0
    %v706 = vmax.f32 %v482, 0.0
    %v707 = vmax.f32 %v485, 0.0
    %v708 = vmax.f32 %v490, 0.0
    %v709 = vmax.f32 %v493, 0.0
    %v710 = vmax.f32 %v498, 0.0
    %v711 = vmax.f32 %v501, 0.0
    %v712 = vmax.f32 %v506, 0.0
    %v713 = vmax.f32 %v509, 0.0
    %v714 = vmax.f32 %v514, 0.0
    %v715 = vmax.f32 %v517, 0.0
    %v716 = vmax.f32 %v522, 0.0
    %v717 = vmax.f32 %v525, 0.0
    %v718 = vmax.f32 %v530, 0.0
    %v719 = vmax.f32 %v533, 0.0
    %v720 = vmax.f32 %v538, 0.0
    %v721 = vmax.f32 %v541, 0.0
    %v722 = vmax.f32 %v546, 0.0
    %v723 = vmax.f32 %v549, 0.0
    %v724 = vmax.f32 %v554, 0.0
    %v725 = vmax.f32 %v557, 0.0
    %v726 = vmax.f32 %v562, 0.0
    %v727 = vmax.f32 %v565, 0.0
    %v728 = vmax.f32 %v570, 0.0
    %v729 = vmax.f32 %v573, 0.0
    %v730 = vmax.f32 %v578, 0.0
    %v731 = vmax.f32 %v581, 0.0
    %v732 = vmax.f32 %v586, 0.0
    %v733 = vmax.f32 %v589, 0.0
    %v734 = vmax.f32 %v594, 0.0
    %v735 = vmax.f32 %v597, 0.0
    %v736 = vmax.f32 %v602, 0.0
    %v737 = vmax.f32 %v605, 0.0
    %v738 = vmax.f32 %v610, 0.0
    %v739 = vmax.f32 %v613, 0.0
    %v740 = vmax.f32 %v618, 0.0
    %v741 = vmax.f32 %v621, 0.0
    %v742 = vmax.f32 %v626, 0.0
    %v743 = vmax.f32 %v629, 0.0
    %v744 = vmax.f32 %v634, 0.0
    %v745 = vmax.f32 %v637, 0.0
    %v746 = vmax.f32 %v642, 0.0
    %v747 = vmax.f32 %v645, 0.0
    %v748 = vmax.f32 %v650, 0.0
    %v749 = vmax.f32 %v653, 0.0
    %v750 = vmax.f32 %v658, 0.0
    %v751 = vmax.f32 %v661, 0.0
    %v752 = vmax.f32 %v666, 0.0
    %v753 = vmax.f32 %v669, 0.0
    %v754 = vmax.f32 %v674, 0.0
    %v755 = vmax.f32 %v677, 0.0
    %v756 = vmax.f32 %v682, 0.0
    %v757 = vmax.f32 %v685, 0.0
    %v758 = vmax.f32 %v690, 0.0
    %v759 = vmax.f32 %v693, 0.0
    %v760 = vpack.c.bf16 %v697, %v696
    %v761 = vpack.c.bf16 %v699, %v698
    %v762 = vpack.c.bf16 %v701, %v700
    %v763 = vpack.c.bf16 %v703, %v702
    %v764 = vpack.c.bf16 %v705, %v704
    %v765 = vpack.c.bf16 %v707, %v706
    %v766 = vpack.c.bf16 %v709, %v708
    %v767 = vpack.c.bf16 %v711, %v710
    %v768 = vpack.c.bf16 %v713, %v712
    %v769 = vpack.c.bf16 %v715, %v714
    %v770 = vpack.c.bf16 %v717, %v716
    %v771 = vpack.c.bf16 %v719, %v718
    %v772 = vpack.c.bf16 %v721, %v720
    %v773 = vpack.c.bf16 %v723, %v722
    %v774 = vpack.c.bf16 %v725, %v724
    %v775 = vpack.c.bf16 %v727, %v726
    %v776 = vpack.c.bf16 %v729, %v728
    %v777 = vpack.c.bf16 %v731, %v730
    %v778 = vpack.c.bf16 %v733, %v732
    %v779 = vpack.c.bf16 %v735, %v734
    %v780 = vpack.c.bf16 %v737, %v736
    %v781 = vpack.c.bf16 %v739, %v738
    %v782 = vpack.c.bf16 %v741, %v740
    %v783 = vpack.c.bf16 %v743, %v742
    %v784 = vpack.c.bf16 %v745, %v744
    %v785 = vpack.c.bf16 %v747, %v746
    %v786 = vpack.c.bf16 %v749, %v748
    %v787 = vpack.c.bf16 %v751, %v750
    %v788 = vpack.c.bf16 %v753, %v752
    %v789 = vpack.c.bf16 %v755, %v754
    %v790 = vpack.c.bf16 %v757, %v756
    %v791 = vpack.c.bf16 %v759, %v758
    %v824 = vunpack.c.l.b16 %v760
    %v825 = vunpack.c.h.b16 %v760
    %v826 = vunpack.c.l.b16 %v761
    %v827 = vunpack.c.h.b16 %v761
    %v828 = vunpack.c.l.b16 %v762
    %v829 = vunpack.c.h.b16 %v762
    %v830 = vunpack.c.l.b16 %v763
    %v831 = vunpack.c.h.b16 %v763
    %v832 = vunpack.c.l.b16 %v764
    %v833 = vunpack.c.h.b16 %v764
    %v834 = vunpack.c.l.b16 %v765
    %v835 = vunpack.c.h.b16 %v765
    %v836 = vunpack.c.l.b16 %v766
    %v837 = vunpack.c.h.b16 %v766
    %v838 = vunpack.c.l.b16 %v767
    %v839 = vunpack.c.h.b16 %v767
    %v840 = vunpack.c.l.b16 %v768
    %v841 = vunpack.c.h.b16 %v768
    %v842 = vunpack.c.l.b16 %v769
    %v843 = vunpack.c.h.b16 %v769
    %v844 = vunpack.c.l.b16 %v770
    %v845 = vunpack.c.h.b16 %v770
    %v846 = vunpack.c.l.b16 %v771
    %v847 = vunpack.c.h.b16 %v771
    %v848 = vunpack.c.l.b16 %v772
    %v849 = vunpack.c.h.b16 %v772
    %v850 = vunpack.c.l.b16 %v773
    %v851 = vunpack.c.h.b16 %v773
    %v852 = vunpack.c.l.b16 %v774
    %v853 = vunpack.c.h.b16 %v774
    %v854 = vunpack.c.l.b16 %v775
    %v855 = vunpack.c.h.b16 %v775
    %v856 = vunpack.c.l.b16 %v776
    %v857 = vunpack.c.h.b16 %v776
    %v858 = vunpack.c.l.b16 %v777
    %v859 = vunpack.c.h.b16 %v777
    %v860 = vunpack.c.l.b16 %v778
    %v861 = vunpack.c.h.b16 %v778
    %v862 = vunpack.c.l.b16 %v779
    %v863 = vunpack.c.h.b16 %v779
    %v864 = vunpack.c.l.b16 %v780
    %v865 = vunpack.c.h.b16 %v780
    %v866 = vunpack.c.l.b16 %v781
    %v867 = vunpack.c.h.b16 %v781
    %v868 = vunpack.c.l.b16 %v782
    %v869 = vunpack.c.h.b16 %v782
    %v870 = vunpack.c.l.b16 %v783
    %v871 = vunpack.c.h.b16 %v783
    %v872 = vunpack.c.l.b16 %v784
    %v873 = vunpack.c.h.b16 %v784
    %v874 = vunpack.c.l.b16 %v785
    %v875 = vunpack.c.h.b16 %v785
    %v876 = vunpack.c.l.b16 %v786
    %v877 = vunpack.c.h.b16 %v786
    %v878 = vunpack.c.l.b16 %v787
    %v879 = vunpack.c.h.b16 %v787
    %v880 = vunpack.c.l.b16 %v788
    %v881 = vunpack.c.h.b16 %v788
    %v882 = vunpack.c.l.b16 %v789
    %v883 = vunpack.c.h.b16 %v789
    %v884 = vunpack.c.l.b16 %v790
    %v885 = vunpack.c.h.b16 %v790
    %v886 = vunpack.c.l.b16 %v791
    %v887 = vunpack.c.h.b16 %v791
    %v888 = vpack.c.b16 %v824, %v824
    %v889 = vpack.c.b16 %v825, %v825
    %v890 = vpack.c.b16 %v826, %v826
    %v891 = vpack.c.b16 %v827, %v827
    %v892 = vpack.c.b16 %v828, %v828
    %v893 = vpack.c.b16 %v829, %v829
    %v894 = vpack.c.b16 %v830, %v830
    %v895 = vpack.c.b16 %v831, %v831
    %v896 = vpack.c.b16 %v832, %v832
    %v897 = vpack.c.b16 %v833, %v833
    %v898 = vpack.c.b16 %v834, %v834
    %v899 = vpack.c.b16 %v835, %v835
    %v900 = vpack.c.b16 %v836, %v836
    %v901 = vpack.c.b16 %v837, %v837
    %v902 = vpack.c.b16 %v838, %v838
    %v903 = vpack.c.b16 %v839, %v839
    %v904 = vpack.c.b16 %v840, %v840
    %v905 = vpack.c.b16 %v841, %v841
    %v906 = vpack.c.b16 %v842, %v842
    %v907 = vpack.c.b16 %v843, %v843
    %v908 = vpack.c.b16 %v844, %v844
    %v909 = vpack.c.b16 %v845, %v845
    %v910 = vpack.c.b16 %v846, %v846
    %v911 = vpack.c.b16 %v847, %v847
    %v912 = vpack.c.b16 %v848, %v848
    %v913 = vpack.c.b16 %v849, %v849
    %v914 = vpack.c.b16 %v850, %v850
    %v915 = vpack.c.b16 %v851, %v851
    %v916 = vpack.c.b16 %v852, %v852
    %v917 = vpack.c.b16 %v853, %v853
    %v918 = vpack.c.b16 %v854, %v854
    %v919 = vpack.c.b16 %v855, %v855
    %v920 = vpack.c.b16 %v856, %v856
    %v921 = vpack.c.b16 %v857, %v857
    %v922 = vpack.c.b16 %v858, %v858
    %v923 = vpack.c.b16 %v859, %v859
    %v924 = vpack.c.b16 %v860, %v860
    %v925 = vpack.c.b16 %v861, %v861
    %v926 = vpack.c.b16 %v862, %v862
    %v927 = vpack.c.b16 %v863, %v863
    %v928 = vpack.c.b16 %v864, %v864
    %v929 = vpack.c.b16 %v865, %v865
    %v930 = vpack.c.b16 %v866, %v866
    %v931 = vpack.c.b16 %v867, %v867
    %v932 = vpack.c.b16 %v868, %v868
    %v933 = vpack.c.b16 %v869, %v869
    %v934 = vpack.c.b16 %v870, %v870
    %v935 = vpack.c.b16 %v871, %v871
    %v936 = vpack.c.b16 %v872, %v872
    %v937 = vpack.c.b16 %v873, %v873
    %v938 = vpack.c.b16 %v874, %v874
    %v939 = vpack.c.b16 %v875, %v875
    %v940 = vpack.c.b16 %v876, %v876
    %v941 = vpack.c.b16 %v877, %v877
    %v942 = vpack.c.b16 %v878, %v878
    %v943 = vpack.c.b16 %v879, %v879
    %v944 = vpack.c.b16 %v880, %v880
    %v945 = vpack.c.b16 %v881, %v881
    %v946 = vpack.c.b16 %v882, %v882
    %v947 = vpack.c.b16 %v883, %v883
    %v948 = vpack.c.b16 %v884, %v884
    %v949 = vpack.c.b16 %v885, %v885
    %v950 = vpack.c.b16 %v886, %v886
    %v951 = vpack.c.b16 %v887, %v887
    %1016 = vst [vmem:[#allocation8] sm:$0xf] %v888
    %1017 = vst [vmem:[#allocation8 + $0x4] sm:$0xf] %v889
    %1018 = vst [vmem:[#allocation8 + $0x8] sm:$0xf] %v890
    %1019 = vst [vmem:[#allocation8 + $0xc] sm:$0xf] %v891
    %1020 = vst [vmem:[#allocation8 + $0x10] sm:$0xf] %v892
    %1021 = vst [vmem:[#allocation8 + $0x14] sm:$0xf] %v893
    %1022 = vst [vmem:[#allocation8 + $0x18] sm:$0xf] %v894
    %1023 = vst [vmem:[#allocation8 + $0x1c] sm:$0xf] %v895
    %1024 = vst [vmem:[#allocation8 + $0x20] sm:$0xf] %v896
    %1025 = vst [vmem:[#allocation8 + $0x24] sm:$0xf] %v897
    %1026 = vst [vmem:[#allocation8 + $0x28] sm:$0xf] %v898
    %1027 = vst [vmem:[#allocation8 + $0x2c] sm:$0xf] %v899
    %1028 = vst [vmem:[#allocation8 + $0x30] sm:$0xf] %v900
    %1029 = vst [vmem:[#allocation8 + $0x34] sm:$0xf] %v901
    %1030 = vst [vmem:[#allocation8 + $0x38] sm:$0xf] %v902
    %1031 = vst [vmem:[#allocation8 + $0x3c] sm:$0xf] %v903
    %1032 = vst [vmem:[#allocation8 + $0x40] sm:$0xf] %v904
    %1033 = vst [vmem:[#allocation8 + $0x44] sm:$0xf] %v905
    %1034 = vst [vmem:[#allocation8 + $0x48] sm:$0xf] %v906
    %1035 = vst [vmem:[#allocation8 + $0x4c] sm:$0xf] %v907
    %1036 = vst [vmem:[#allocation8 + $0x50] sm:$0xf] %v908
    %1037 = vst [vmem:[#allocation8 + $0x54] sm:$0xf] %v909
    %1038 = vst [vmem:[#allocation8 + $0x58] sm:$0xf] %v910
    %1039 = vst [vmem:[#allocation8 + $0x5c] sm:$0xf] %v911
    %1040 = vst [vmem:[#allocation8 + $0x60] sm:$0xf] %v912
    %1041 = vst [vmem:[#allocation8 + $0x64] sm:$0xf] %v913
    %1042 = vst [vmem:[#allocation8 + $0x68] sm:$0xf] %v914
    %1043 = vst [vmem:[#allocation8 + $0x6c] sm:$0xf] %v915
    %1044 = vst [vmem:[#allocation8 + $0x70] sm:$0xf] %v916
    %1045 = vst [vmem:[#allocation8 + $0x74] sm:$0xf] %v917
    %1046 = vst [vmem:[#allocation8 + $0x78] sm:$0xf] %v918
    %1047 = vst [vmem:[#allocation8 + $0x7c] sm:$0xf] %v919
    %1048 = vst [vmem:[#allocation8 + $0x80] sm:$0xf] %v920
    %1049 = vst [vmem:[#allocation8 + $0x84] sm:$0xf] %v921
    %1050 = vst [vmem:[#allocation8 + $0x88] sm:$0xf] %v922
    %1051 = vst [vmem:[#allocation8 + $0x8c] sm:$0xf] %v923
    %1052 = vst [vmem:[#allocation8 + $0x90] sm:$0xf] %v924
    %1053 = vst [vmem:[#allocation8 + $0x94] sm:$0xf] %v925
    %1054 = vst [vmem:[#allocation8 + $0x98] sm:$0xf] %v926
    %1055 = vst [vmem:[#allocation8 + $0x9c] sm:$0xf] %v927
    %1056 = vst [vmem:[#allocation8 + $0xa0] sm:$0xf] %v928
    %1057 = vst [vmem:[#allocation8 + $0xa4] sm:$0xf] %v929
    %1058 = vst [vmem:[#allocation8 + $0xa8] sm:$0xf] %v930
    %1059 = vst [vmem:[#allocation8 + $0xac] sm:$0xf] %v931
    %1060 = vst [vmem:[#allocation8 + $0xb0] sm:$0xf] %v932
    %1061 = vst [vmem:[#allocation8 + $0xb4] sm:$0xf] %v933
    %1062 = vst [vmem:[#allocation8 + $0xb8] sm:$0xf] %v934
    %1063 = vst [vmem:[#allocation8 + $0xbc] sm:$0xf] %v935
    %1064 = vst [vmem:[#allocation8 + $0xc0] sm:$0xf] %v936
    %1065 = vst [vmem:[#allocation8 + $0xc4] sm:$0xf] %v937
    %1066 = vst [vmem:[#allocation8 + $0xc8] sm:$0xf] %v938
    %1067 = vst [vmem:[#allocation8 + $0xcc] sm:$0xf] %v939
    %1068 = vst [vmem:[#allocation8 + $0xd0] sm:$0xf] %v940
    %1069 = vst [vmem:[#allocation8 + $0xd4] sm:$0xf] %v941
    %1070 = vst [vmem:[#allocation8 + $0xd8] sm:$0xf] %v942
    %1071 = vst [vmem:[#allocation8 + $0xdc] sm:$0xf] %v943
    %1072 = vst [vmem:[#allocation8 + $0xe0] sm:$0xf] %v944
    %1073 = vst [vmem:[#allocation8 + $0xe4] sm:$0xf] %v945
    %1074 = vst [vmem:[#allocation8 + $0xe8] sm:$0xf] %v946
    %1075 = vst [vmem:[#allocation8 + $0xec] sm:$0xf] %v947
    %1076 = vst [vmem:[#allocation8 + $0xf0] sm:$0xf] %v948
    %1077 = vst [vmem:[#allocation8 + $0xf4] sm:$0xf] %v949
    %1078 = vst [vmem:[#allocation8 + $0xf8] sm:$0xf] %v950
    %1079 = vst [vmem:[#allocation8 + $0xfc] sm:$0xf] %v951
    // Predicated region
    $region26: #{deform_bottleneck_forward.6} parent=1 // pred_check
      _
    $region27: #{deform_bottleneck_forward.6} parent=1 // pred_check_branch
      %1081 = sbr.rel (0) target = $region29
    $region28: #{deform_bottleneck_forward.6} parent=1 // pred_region
      %s1083 = ssub.s32 4096, 4096
      %1084 = vsyncadd [#allocation4], %s1083
      %s1085 = sshll.u32 [#allocation8], 4
      %s1086 = int_to_ptr.vmem [resolvable:$true] %s1085
      %1091 = dma.vmem_to_hbm [thread:$0]  %s1086, 4096, %s3, [#allocation4], 64, 64, 4
    $region29: #{deform_bottleneck_forward.6} parent=1 // pred_fallthru
      _
    // Predicated region
    $region30: #{deform_bottleneck_forward.6} parent=1 // pred_check
      _
    $region31: #{deform_bottleneck_forward.6} parent=1 // pred_check_branch
      %1093 = sbr.rel (0) target = $region33
    $region32: #{deform_bottleneck_forward.6} parent=1 // pred_region
      %1094 = dma.done [#allocation4], 4096
    $region33: #{deform_bottleneck_forward.6} parent=1 // pred_fallthru
      _
    %1095 = vsyncpa [#allocation3], 1
    %1096 = vsyncpa [#allocation6], 1
    %1097 = vsyncpa [#allocation4], 1

// kernel: deform_bottleneck_forward.7
$region0: #{deform_bottleneck_forward.7}
  #allocation0 [shape = 'u32[]', space=smem, size = 0x4, offset = 0x4, fixed_abs, tag = 'smem constant byte address 0x4 - core index']
  #allocation1 [shape = 'u32[144,128]{1,0:T(1,128)}', space=vmem, size = 0x12000, scoped, tag = 'internal scratch']
  %s0 = inlined_call_operand.hbm [shape: bf16[512,128], index: 0, kind: input, shape index: {}]
  %s1 = inlined_call_operand.hbm [shape: bf16[128,128], index: 1, kind: input, shape index: {}]
  %s2 = inlined_call_operand.hbm [shape: f32[1,128], index: 2, kind: input, shape index: {}]
  %s3 = inlined_call_operand.hbm [shape: bf16[512,128], index: 3, kind: input, shape index: {}]
  %s4 = inlined_call_operand.hbm [shape: f32[512,128], index: 4, kind: output, shape index: {}]
  %s5 = sld [smem:[#allocation0]]
  $region42: #{deform_bottleneck_forward.7} parent=0
    _
  %s7 = ssub.s32 1, %s5
  %s8 = scalar_select 0, %s7, %s5
  $region1: #{deform_bottleneck_forward.7} parent=0
    #allocation2 [shape = 'u8[131072]{0}', space=vmem, size = 0x20000, scoped, tag = 'input window, operand 0, single buffered']
    #allocation3 [shape = 's32[1]{0}', space=sflag, size = 0x4, scoped, tag = 'scoped memory for deform_bottleneck_forward.7']
    #allocation4 [shape = 's32[1]{0}', space=sflag, size = 0x4, scoped, tag = 'scoped memory for deform_bottleneck_forward.7']
    #allocation5 [shape = 'u8[32768]{0}', space=vmem, size = 0x8000, scoped, tag = 'input window, operand 1, single buffered']
    #allocation6 [shape = 's32[1]{0}', space=sflag, size = 0x4, scoped, tag = 'scoped memory for deform_bottleneck_forward.7']
    #allocation7 [shape = 'u8[512]{0}', space=vmem, size = 0x400, scoped, tag = 'input window, operand 2, single buffered']
    #allocation8 [shape = 'u8[131072]{0}', space=vmem, size = 0x20000, scoped, tag = 'input window, operand 3, single buffered']
    #allocation9 [shape = 's32[1]{0}', space=sflag, size = 0x4, scoped, tag = 'scoped memory for deform_bottleneck_forward.7']
    #allocation10 [shape = 'u8[262144]{0}', space=vmem, size = 0x40000, scoped, tag = 'output window, operand 0, single buffered']
    %9 = vsyncpa [#allocation3], 0
    %10 = vsyncpa [#allocation6], 0
    %11 = vsyncpa [#allocation9], 0
    %12 = vsyncpa [#allocation4], 0
    // Predicated region
    $region2: #{deform_bottleneck_forward.7} parent=1 // pred_check
      _
    $region3: #{deform_bottleneck_forward.7} parent=1 // pred_check_branch
      %14 = sbr.rel (0) target = $region5
    $region4: #{deform_bottleneck_forward.7} parent=1 // pred_region
      %s16 = ssub.s32 4096, 4096
      %17 = vsyncadd [#allocation3], %s16
      %s18 = sshll.u32 [#allocation2], 4
      %s19 = int_to_ptr.vmem [resolvable:$true] %s18
      %24 = dma.hbm_to_vmem [thread:$0]  %s0, 4096, %s19, [#allocation3], 64, 64, 4
    $region5: #{deform_bottleneck_forward.7} parent=1 // pred_fallthru
      _
    // Predicated region
    $region6: #{deform_bottleneck_forward.7} parent=1 // pred_check
      _
    $region7: #{deform_bottleneck_forward.7} parent=1 // pred_check_branch
      %26 = sbr.rel (0) target = $region9
    $region8: #{deform_bottleneck_forward.7} parent=1 // pred_region
      %s28 = ssub.s32 1024, 1024
      %29 = vsyncadd [#allocation6], %s28
      %s30 = sshll.u32 [#allocation5], 4
      %s31 = int_to_ptr.vmem [resolvable:$true] %s30
      %36 = dma.hbm_to_vmem [thread:$0]  %s1, 1024, %s31, [#allocation6], 64, 64, 4
    $region9: #{deform_bottleneck_forward.7} parent=1 // pred_fallthru
      _
    // Predicated region
    $region10: #{deform_bottleneck_forward.7} parent=1 // pred_check
      _
    $region11: #{deform_bottleneck_forward.7} parent=1 // pred_check_branch
      %38 = sbr.rel (0) target = $region13
    $region12: #{deform_bottleneck_forward.7} parent=1 // pred_region
      %s40 = ssub.s32 16, 16
      %41 = vsyncadd [#allocation6], %s40
      %s43 = sshll.u32 [#allocation7], 4
      %s44 = int_to_ptr.vmem [resolvable:$true] %s43
      %46 = dma.hbm_to_vmem [thread:$0]  %s2, 16, %s44, [#allocation6]
    $region13: #{deform_bottleneck_forward.7} parent=1 // pred_fallthru
      _
    // Predicated region
    $region14: #{deform_bottleneck_forward.7} parent=1 // pred_check
      _
    $region15: #{deform_bottleneck_forward.7} parent=1 // pred_check_branch
      %48 = sbr.rel (0) target = $region17
    $region16: #{deform_bottleneck_forward.7} parent=1 // pred_region
      %s50 = ssub.s32 4096, 4096
      %51 = vsyncadd [#allocation9], %s50
      %s52 = sshll.u32 [#allocation8], 4
      %s53 = int_to_ptr.vmem [resolvable:$true] %s52
      %58 = dma.hbm_to_vmem [thread:$0]  %s3, 4096, %s53, [#allocation9], 64, 64, 4
    $region17: #{deform_bottleneck_forward.7} parent=1 // pred_fallthru
      _
    // Predicated region
    $region18: #{deform_bottleneck_forward.7} parent=1 // pred_check
      _
    $region19: #{deform_bottleneck_forward.7} parent=1 // pred_check_branch
      %60 = sbr.rel (0) target = $region21
    $region20: #{deform_bottleneck_forward.7} parent=1 // pred_region
      %61 = dma.done [#allocation3], 4096
    $region21: #{deform_bottleneck_forward.7} parent=1 // pred_fallthru
      _
    // Predicated region
    $region22: #{deform_bottleneck_forward.7} parent=1 // pred_check
      _
    $region23: #{deform_bottleneck_forward.7} parent=1 // pred_check_branch
      %63 = sbr.rel (0) target = $region25
    $region24: #{deform_bottleneck_forward.7} parent=1 // pred_region
      %64 = dma.done [#allocation6], 1024
    $region25: #{deform_bottleneck_forward.7} parent=1 // pred_fallthru
      _
    // Predicated region
    $region26: #{deform_bottleneck_forward.7} parent=1 // pred_check
      _
    $region27: #{deform_bottleneck_forward.7} parent=1 // pred_check_branch
      %66 = sbr.rel (0) target = $region29
    $region28: #{deform_bottleneck_forward.7} parent=1 // pred_region
      %67 = dma.done [#allocation6], 16
    $region29: #{deform_bottleneck_forward.7} parent=1 // pred_fallthru
      _
    // Predicated region
    $region30: #{deform_bottleneck_forward.7} parent=1 // pred_check
      _
    $region31: #{deform_bottleneck_forward.7} parent=1 // pred_check_branch
      %69 = sbr.rel (0) target = $region33
    $region32: #{deform_bottleneck_forward.7} parent=1 // pred_region
      %70 = dma.done [#allocation9], 4096
    $region33: #{deform_bottleneck_forward.7} parent=1 // pred_fallthru
      _
    %v72 = vld [vmem:[#allocation2] sm:$0xf]
    %v73 = vld [vmem:[#allocation2 + $0x4] sm:$0xf]
    %v74 = vld [vmem:[#allocation2 + $0x8] sm:$0xf]
    %v75 = vld [vmem:[#allocation2 + $0xc] sm:$0xf]
    %v76 = vld [vmem:[#allocation2 + $0x10] sm:$0xf]
    %v77 = vld [vmem:[#allocation2 + $0x14] sm:$0xf]
    %v78 = vld [vmem:[#allocation2 + $0x18] sm:$0xf]
    %v79 = vld [vmem:[#allocation2 + $0x1c] sm:$0xf]
    %v80 = vld [vmem:[#allocation2 + $0x20] sm:$0xf]
    %v81 = vld [vmem:[#allocation2 + $0x24] sm:$0xf]
    %v82 = vld [vmem:[#allocation2 + $0x28] sm:$0xf]
    %v83 = vld [vmem:[#allocation2 + $0x2c] sm:$0xf]
    %v84 = vld [vmem:[#allocation2 + $0x30] sm:$0xf]
    %v85 = vld [vmem:[#allocation2 + $0x34] sm:$0xf]
    %v86 = vld [vmem:[#allocation2 + $0x38] sm:$0xf]
    %v87 = vld [vmem:[#allocation2 + $0x3c] sm:$0xf]
    %v88 = vld [vmem:[#allocation2 + $0x40] sm:$0xf]
    %v89 = vld [vmem:[#allocation2 + $0x44] sm:$0xf]
    %v90 = vld [vmem:[#allocation2 + $0x48] sm:$0xf]
    %v91 = vld [vmem:[#allocation2 + $0x4c] sm:$0xf]
    %v92 = vld [vmem:[#allocation2 + $0x50] sm:$0xf]
    %v93 = vld [vmem:[#allocation2 + $0x54] sm:$0xf]
    %v94 = vld [vmem:[#allocation2 + $0x58] sm:$0xf]
    %v95 = vld [vmem:[#allocation2 + $0x5c] sm:$0xf]
    %v96 = vld [vmem:[#allocation2 + $0x60] sm:$0xf]
    %v97 = vld [vmem:[#allocation2 + $0x64] sm:$0xf]
    %v98 = vld [vmem:[#allocation2 + $0x68] sm:$0xf]
    %v99 = vld [vmem:[#allocation2 + $0x6c] sm:$0xf]
    %v100 = vld [vmem:[#allocation2 + $0x70] sm:$0xf]
    %v101 = vld [vmem:[#allocation2 + $0x74] sm:$0xf]
    %v102 = vld [vmem:[#allocation2 + $0x78] sm:$0xf]
    %v103 = vld [vmem:[#allocation2 + $0x7c] sm:$0xf]
    %v104 = vld [vmem:[#allocation2 + $0x80] sm:$0xf]
    %v105 = vld [vmem:[#allocation2 + $0x84] sm:$0xf]
    %v106 = vld [vmem:[#allocation2 + $0x88] sm:$0xf]
    %v107 = vld [vmem:[#allocation2 + $0x8c] sm:$0xf]
    %v108 = vld [vmem:[#allocation2 + $0x90] sm:$0xf]
    %v109 = vld [vmem:[#allocation2 + $0x94] sm:$0xf]
    %v110 = vld [vmem:[#allocation2 + $0x98] sm:$0xf]
    %v111 = vld [vmem:[#allocation2 + $0x9c] sm:$0xf]
    %v112 = vld [vmem:[#allocation2 + $0xa0] sm:$0xf]
    %v113 = vld [vmem:[#allocation2 + $0xa4] sm:$0xf]
    %v114 = vld [vmem:[#allocation2 + $0xa8] sm:$0xf]
    %v115 = vld [vmem:[#allocation2 + $0xac] sm:$0xf]
    %v116 = vld [vmem:[#allocation2 + $0xb0] sm:$0xf]
    %v117 = vld [vmem:[#allocation2 + $0xb4] sm:$0xf]
    %v118 = vld [vmem:[#allocation2 + $0xb8] sm:$0xf]
    %v119 = vld [vmem:[#allocation2 + $0xbc] sm:$0xf]
    %v120 = vld [vmem:[#allocation2 + $0xc0] sm:$0xf]
    %v121 = vld [vmem:[#allocation2 + $0xc4] sm:$0xf]
    %v122 = vld [vmem:[#allocation2 + $0xc8] sm:$0xf]
    %v123 = vld [vmem:[#allocation2 + $0xcc] sm:$0xf]
    %v124 = vld [vmem:[#allocation2 + $0xd0] sm:$0xf]
    %v125 = vld [vmem:[#allocation2 + $0xd4] sm:$0xf]
    %v126 = vld [vmem:[#allocation2 + $0xd8] sm:$0xf]
    %v127 = vld [vmem:[#allocation2 + $0xdc] sm:$0xf]
    %v128 = vld [vmem:[#allocation2 + $0xe0] sm:$0xf]
    %v129 = vld [vmem:[#allocation2 + $0xe4] sm:$0xf]
    %v130 = vld [vmem:[#allocation2 + $0xe8] sm:$0xf]
    %v131 = vld [vmem:[#allocation2 + $0xec] sm:$0xf]
    %v132 = vld [vmem:[#allocation2 + $0xf0] sm:$0xf]
    %v133 = vld [vmem:[#allocation2 + $0xf4] sm:$0xf]
    %v134 = vld [vmem:[#allocation2 + $0xf8] sm:$0xf]
    %v135 = vld [vmem:[#allocation2 + $0xfc] sm:$0xf]
    %v136 = vld [vmem:[#allocation5] sm:$0xf]
    %v137 = vld [vmem:[#allocation5 + $0x4] sm:$0xf]
    %v138 = vld [vmem:[#allocation5 + $0x8] sm:$0xf]
    %v139 = vld [vmem:[#allocation5 + $0xc] sm:$0xf]
    %v140 = vld [vmem:[#allocation5 + $0x10] sm:$0xf]
    %v141 = vld [vmem:[#allocation5 + $0x14] sm:$0xf]
    %v142 = vld [vmem:[#allocation5 + $0x18] sm:$0xf]
    %v143 = vld [vmem:[#allocation5 + $0x1c] sm:$0xf]
    %v144 = vld [vmem:[#allocation5 + $0x20] sm:$0xf]
    %v145 = vld [vmem:[#allocation5 + $0x24] sm:$0xf]
    %v146 = vld [vmem:[#allocation5 + $0x28] sm:$0xf]
    %v147 = vld [vmem:[#allocation5 + $0x2c] sm:$0xf]
    %v148 = vld [vmem:[#allocation5 + $0x30] sm:$0xf]
    %v149 = vld [vmem:[#allocation5 + $0x34] sm:$0xf]
    %v150 = vld [vmem:[#allocation5 + $0x38] sm:$0xf]
    %v151 = vld [vmem:[#allocation5 + $0x3c] sm:$0xf]
    %v152 = vld [vmem:[#allocation7] sm:$0x1]
    %v154 = vlaneseq
    %v155 = vshrl.u32 %v154, 7
    %v156 = vsub.s32 0, %v155
    %v157 = vrot.slane %v152, %v156
    %v223 = vunpack.c.l.b16 %v72
    %v224 = vunpack.c.l.b16 %v73
    %v225 = vunpack.c.l.b16 %v74
    %v226 = vunpack.c.l.b16 %v75
    %v227 = vunpack.c.l.b16 %v76
    %v228 = vunpack.c.l.b16 %v77
    %v229 = vunpack.c.l.b16 %v78
    %v230 = vunpack.c.l.b16 %v79
    %v231 = vunpack.c.l.b16 %v80
    %v232 = vunpack.c.l.b16 %v81
    %v233 = vunpack.c.l.b16 %v82
    %v234 = vunpack.c.l.b16 %v83
    %v235 = vunpack.c.l.b16 %v84
    %v236 = vunpack.c.l.b16 %v85
    %v237 = vunpack.c.l.b16 %v86
    %v238 = vunpack.c.l.b16 %v87
    %v239 = vunpack.c.l.b16 %v88
    %v240 = vunpack.c.l.b16 %v89
    %v241 = vunpack.c.l.b16 %v90
    %v242 = vunpack.c.l.b16 %v91
    %v243 = vunpack.c.l.b16 %v92
    %v244 = vunpack.c.l.b16 %v93
    %v245 = vunpack.c.l.b16 %v94
    %v246 = vunpack.c.l.b16 %v95
    %v247 = vunpack.c.l.b16 %v96
    %v248 = vunpack.c.l.b16 %v97
    %v249 = vunpack.c.l.b16 %v98
    %v250 = vunpack.c.l.b16 %v99
    %v251 = vunpack.c.l.b16 %v100
    %v252 = vunpack.c.l.b16 %v101
    %v253 = vunpack.c.l.b16 %v102
    %v254 = vunpack.c.l.b16 %v103
    %v255 = vunpack.c.l.b16 %v104
    %v256 = vunpack.c.l.b16 %v105
    %v257 = vunpack.c.l.b16 %v106
    %v258 = vunpack.c.l.b16 %v107
    %v259 = vunpack.c.l.b16 %v108
    %v260 = vunpack.c.l.b16 %v109
    %v261 = vunpack.c.l.b16 %v110
    %v262 = vunpack.c.l.b16 %v111
    %v263 = vunpack.c.l.b16 %v112
    %v264 = vunpack.c.l.b16 %v113
    %v265 = vunpack.c.l.b16 %v114
    %v266 = vunpack.c.l.b16 %v115
    %v267 = vunpack.c.l.b16 %v116
    %v268 = vunpack.c.l.b16 %v117
    %v269 = vunpack.c.l.b16 %v118
    %v270 = vunpack.c.l.b16 %v119
    %v271 = vunpack.c.l.b16 %v120
    %v272 = vunpack.c.l.b16 %v121
    %v273 = vunpack.c.l.b16 %v122
    %v274 = vunpack.c.l.b16 %v123
    %v275 = vunpack.c.l.b16 %v124
    %v276 = vunpack.c.l.b16 %v125
    %v277 = vunpack.c.l.b16 %v126
    %v278 = vunpack.c.l.b16 %v127
    %v279 = vunpack.c.l.b16 %v128
    %v280 = vunpack.c.l.b16 %v129
    %v281 = vunpack.c.l.b16 %v130
    %v282 = vunpack.c.l.b16 %v131
    %v283 = vunpack.c.l.b16 %v132
    %v284 = vunpack.c.l.b16 %v133
    %v285 = vunpack.c.l.b16 %v134
    %v286 = vunpack.c.l.b16 %v135
    %v287 = vpack.c.b16 %v224, %v223
    %v288 = vpack.c.b16 %v226, %v225
    %v289 = vpack.c.b16 %v228, %v227
    %v290 = vpack.c.b16 %v230, %v229
    %v291 = vpack.c.b16 %v232, %v231
    %v292 = vpack.c.b16 %v234, %v233
    %v293 = vpack.c.b16 %v236, %v235
    %v294 = vpack.c.b16 %v238, %v237
    %v295 = vpack.c.b16 %v240, %v239
    %v296 = vpack.c.b16 %v242, %v241
    %v297 = vpack.c.b16 %v244, %v243
    %v298 = vpack.c.b16 %v246, %v245
    %v299 = vpack.c.b16 %v248, %v247
    %v300 = vpack.c.b16 %v250, %v249
    %v301 = vpack.c.b16 %v252, %v251
    %v302 = vpack.c.b16 %v254, %v253
    %v303 = vpack.c.b16 %v256, %v255
    %v304 = vpack.c.b16 %v258, %v257
    %v305 = vpack.c.b16 %v260, %v259
    %v306 = vpack.c.b16 %v262, %v261
    %v307 = vpack.c.b16 %v264, %v263
    %v308 = vpack.c.b16 %v266, %v265
    %v309 = vpack.c.b16 %v268, %v267
    %v310 = vpack.c.b16 %v270, %v269
    %v311 = vpack.c.b16 %v272, %v271
    %v312 = vpack.c.b16 %v274, %v273
    %v313 = vpack.c.b16 %v276, %v275
    %v314 = vpack.c.b16 %v278, %v277
    %v315 = vpack.c.b16 %v280, %v279
    %v316 = vpack.c.b16 %v282, %v281
    %v317 = vpack.c.b16 %v284, %v283
    %v318 = vpack.c.b16 %v286, %v285
    %v367 = vunpack.c.l.b16 %v136
    %v368 = vunpack.c.l.b16 %v137
    %v369 = vunpack.c.l.b16 %v138
    %v370 = vunpack.c.l.b16 %v139
    %v371 = vunpack.c.l.b16 %v140
    %v372 = vunpack.c.l.b16 %v141
    %v373 = vunpack.c.l.b16 %v142
    %v374 = vunpack.c.l.b16 %v143
    %v375 = vunpack.c.l.b16 %v144
    %v376 = vunpack.c.l.b16 %v145
    %v377 = vunpack.c.l.b16 %v146
    %v378 = vunpack.c.l.b16 %v147
    %v379 = vunpack.c.l.b16 %v148
    %v380 = vunpack.c.l.b16 %v149
    %v381 = vunpack.c.l.b16 %v150
    %v382 = vunpack.c.l.b16 %v151
    %v383 = vpack.c.b16 %v368, %v367
    %v384 = vpack.c.b16 %v370, %v369
    %v385 = vpack.c.b16 %v372, %v371
    %v386 = vpack.c.b16 %v374, %v373
    %v387 = vpack.c.b16 %v376, %v375
    %v388 = vpack.c.b16 %v378, %v377
    %v389 = vpack.c.b16 %v380, %v379
    %v390 = vpack.c.b16 %v382, %v381
    %399 = vmatprep.subr.bf16.mxu0 0
    %400 = vmatpush1.bf16.msra.mxu0 %v383
    %401 = vmatprep.subr.bf16.mxu0 0
    %402 = vmatpush1.bf16.msra.mxu0 %v384
    %403 = vmatprep.subr.bf16.mxu0 0
    %404 = vmatpush1.bf16.msra.mxu0 %v385
    %405 = vmatprep.subr.bf16.mxu0 0
    %406 = vmatpush1.bf16.msra.mxu0 %v386
    %407 = vmatprep.subr.bf16.mxu0 0
    %408 = vmatpush1.bf16.msra.mxu0 %v387
    %409 = vmatprep.subr.bf16.mxu0 0
    %410 = vmatpush1.bf16.msra.mxu0 %v388
    %411 = vmatprep.subr.bf16.mxu0 0
    %412 = vmatpush1.bf16.msra.mxu0 %v389
    %413 = vmatprep.subr.bf16.mxu0 0
    %414 = vmatpush1.bf16.msra.mxu0 %v390
    %415 = vmatprep.subr.bf16.mxu0 0
    %416 = vmatpush1.bf16.msra.mxu0 0
    %417 = vmatprep.subr.bf16.mxu0 0
    %418 = vmatpush1.bf16.msra.mxu0 0
    %419 = vmatprep.subr.bf16.mxu0 0
    %420 = vmatpush1.bf16.msra.mxu0 0
    %421 = vmatprep.subr.bf16.mxu0 0
    %422 = vmatpush1.bf16.msra.mxu0 0
    %423 = vmatprep.subr.bf16.mxu0 0
    %424 = vmatpush1.bf16.msra.mxu0 0
    %425 = vmatprep.subr.bf16.mxu0 0
    %426 = vmatpush1.bf16.msra.mxu0 0
    %427 = vmatprep.subr.bf16.mxu0 0
    %428 = vmatpush1.bf16.msra.mxu0 0
    %429 = vmatprep.subr.bf16.mxu0 0
    %430 = vmatpush1.bf16.msra.mxu0 0
    %431 = vmatprep.mubr.bf16.mxu0 0
    %432 = vmatmul.mubr.bf16.gmra.mrb[0].mxu0 %v287
    %v433 = vpop.f32.mrb[0].mxu0
    %v434 = vadd.f32 %v157, %v433
    %v435 = vpop.f32.mrb[0].mxu0
    %v436 = vpop.f32.mrb[0].mxu0
    %v437 = vadd.f32 %v157, %v436
    %v438 = vpop.f32.mrb[0].mxu0
    %439 = vmatprep.mubr.bf16.mxu0 0
    %440 = vmatmul.mubr.bf16.gmra.mrb[0].mxu0 %v288
    %v441 = vpop.f32.mrb[0].mxu0
    %v442 = vadd.f32 %v157, %v441
    %v443 = vpop.f32.mrb[0].mxu0
    %v444 = vpop.f32.mrb[0].mxu0
    %v445 = vadd.f32 %v157, %v444
    %v446 = vpop.f32.mrb[0].mxu0
    %447 = vmatprep.mubr.bf16.mxu0 0
    %448 = vmatmul.mubr.bf16.gmra.mrb[0].mxu0 %v289
    %v449 = vpop.f32.mrb[0].mxu0
    %v450 = vadd.f32 %v157, %v449
    %v451 = vpop.f32.mrb[0].mxu0
    %v452 = vpop.f32.mrb[0].mxu0
    %v453 = vadd.f32 %v157, %v452
    %v454 = vpop.f32.mrb[0].mxu0
    %455 = vmatprep.mubr.bf16.mxu0 0
    %456 = vmatmul.mubr.bf16.gmra.mrb[0].mxu0 %v290
    %v457 = vpop.f32.mrb[0].mxu0
    %v458 = vadd.f32 %v157, %v457
    %v459 = vpop.f32.mrb[0].mxu0
    %v460 = vpop.f32.mrb[0].mxu0
    %v461 = vadd.f32 %v157, %v460
    %v462 = vpop.f32.mrb[0].mxu0
    %463 = vmatprep.mubr.bf16.mxu0 0
    %464 = vmatmul.mubr.bf16.gmra.mrb[0].mxu0 %v291
    %v465 = vpop.f32.mrb[0].mxu0
    %v466 = vadd.f32 %v157, %v465
    %v467 = vpop.f32.mrb[0].mxu0
    %v468 = vpop.f32.mrb[0].mxu0
    %v469 = vadd.f32 %v157, %v468
    %v470 = vpop.f32.mrb[0].mxu0
    %471 = vmatprep.mubr.bf16.mxu0 0
    %472 = vmatmul.mubr.bf16.gmra.mrb[0].mxu0 %v292
    %v473 = vpop.f32.mrb[0].mxu0
    %v474 = vadd.f32 %v157, %v473
    %v475 = vpop.f32.mrb[0].mxu0
    %v476 = vpop.f32.mrb[0].mxu0
    %v477 = vadd.f32 %v157, %v476
    %v478 = vpop.f32.mrb[0].mxu0
    %479 = vmatprep.mubr.bf16.mxu0 0
    %480 = vmatmul.mubr.bf16.gmra.mrb[0].mxu0 %v293
    %v481 = vpop.f32.mrb[0].mxu0
    %v482 = vadd.f32 %v157, %v481
    %v483 = vpop.f32.mrb[0].mxu0
    %v484 = vpop.f32.mrb[0].mxu0
    %v485 = vadd.f32 %v157, %v484
    %v486 = vpop.f32.mrb[0].mxu0
    %487 = vmatprep.mubr.bf16.mxu0 0
    %488 = vmatmul.mubr.bf16.gmra.mrb[0].mxu0 %v294
    %v489 = vpop.f32.mrb[0].mxu0
    %v490 = vadd.f32 %v157, %v489
    %v491 = vpop.f32.mrb[0].mxu0
    %v492 = vpop.f32.mrb[0].mxu0
    %v493 = vadd.f32 %v157, %v492
    %v494 = vpop.f32.mrb[0].mxu0
    %495 = vmatprep.mubr.bf16.mxu0 0
    %496 = vmatmul.mubr.bf16.gmra.mrb[0].mxu0 %v295
    %v497 = vpop.f32.mrb[0].mxu0
    %v498 = vadd.f32 %v157, %v497
    %v499 = vpop.f32.mrb[0].mxu0
    %v500 = vpop.f32.mrb[0].mxu0
    %v501 = vadd.f32 %v157, %v500
    %v502 = vpop.f32.mrb[0].mxu0
    %503 = vmatprep.mubr.bf16.mxu0 0
    %504 = vmatmul.mubr.bf16.gmra.mrb[0].mxu0 %v296
    %v505 = vpop.f32.mrb[0].mxu0
    %v506 = vadd.f32 %v157, %v505
    %v507 = vpop.f32.mrb[0].mxu0
    %v508 = vpop.f32.mrb[0].mxu0
    %v509 = vadd.f32 %v157, %v508
    %v510 = vpop.f32.mrb[0].mxu0
    %511 = vmatprep.mubr.bf16.mxu0 0
    %512 = vmatmul.mubr.bf16.gmra.mrb[0].mxu0 %v297
    %v513 = vpop.f32.mrb[0].mxu0
    %v514 = vadd.f32 %v157, %v513
    %v515 = vpop.f32.mrb[0].mxu0
    %v516 = vpop.f32.mrb[0].mxu0
    %v517 = vadd.f32 %v157, %v516
    %v518 = vpop.f32.mrb[0].mxu0
    %519 = vmatprep.mubr.bf16.mxu0 0
    %520 = vmatmul.mubr.bf16.gmra.mrb[0].mxu0 %v298
    %v521 = vpop.f32.mrb[0].mxu0
    %v522 = vadd.f32 %v157, %v521
    %v523 = vpop.f32.mrb[0].mxu0
    %v524 = vpop.f32.mrb[0].mxu0
    %v525 = vadd.f32 %v157, %v524
    %v526 = vpop.f32.mrb[0].mxu0
    %527 = vmatprep.mubr.bf16.mxu0 0
    %528 = vmatmul.mubr.bf16.gmra.mrb[0].mxu0 %v299
    %v529 = vpop.f32.mrb[0].mxu0
    %v530 = vadd.f32 %v157, %v529
    %v531 = vpop.f32.mrb[0].mxu0
    %v532 = vpop.f32.mrb[0].mxu0
    %v533 = vadd.f32 %v157, %v532
    %v534 = vpop.f32.mrb[0].mxu0
    %535 = vmatprep.mubr.bf16.mxu0 0
    %536 = vmatmul.mubr.bf16.gmra.mrb[0].mxu0 %v300
    %v537 = vpop.f32.mrb[0].mxu0
    %v538 = vadd.f32 %v157, %v537
    %v539 = vpop.f32.mrb[0].mxu0
    %v540 = vpop.f32.mrb[0].mxu0
    %v541 = vadd.f32 %v157, %v540
    %v542 = vpop.f32.mrb[0].mxu0
    %543 = vmatprep.mubr.bf16.mxu0 0
    %544 = vmatmul.mubr.bf16.gmra.mrb[0].mxu0 %v301
    %v545 = vpop.f32.mrb[0].mxu0
    %v546 = vadd.f32 %v157, %v545
    %v547 = vpop.f32.mrb[0].mxu0
    %v548 = vpop.f32.mrb[0].mxu0
    %v549 = vadd.f32 %v157, %v548
    %v550 = vpop.f32.mrb[0].mxu0
    %551 = vmatprep.mubr.bf16.mxu0 0
    %552 = vmatmul.mubr.bf16.gmra.mrb[0].mxu0 %v302
    %v553 = vpop.f32.mrb[0].mxu0
    %v554 = vadd.f32 %v157, %v553
    %v555 = vpop.f32.mrb[0].mxu0
    %v556 = vpop.f32.mrb[0].mxu0
    %v557 = vadd.f32 %v157, %v556
    %v558 = vpop.f32.mrb[0].mxu0
    %559 = vmatprep.mubr.bf16.mxu0 0
    %560 = vmatmul.mubr.bf16.gmra.mrb[0].mxu0 %v303
    %v561 = vpop.f32.mrb[0].mxu0
    %v562 = vadd.f32 %v157, %v561
    %v563 = vpop.f32.mrb[0].mxu0
    %v564 = vpop.f32.mrb[0].mxu0
    %v565 = vadd.f32 %v157, %v564
    %v566 = vpop.f32.mrb[0].mxu0
    %567 = vmatprep.mubr.bf16.mxu0 0
    %568 = vmatmul.mubr.bf16.gmra.mrb[0].mxu0 %v304
    %v569 = vpop.f32.mrb[0].mxu0
    %v570 = vadd.f32 %v157, %v569
    %v571 = vpop.f32.mrb[0].mxu0
    %v572 = vpop.f32.mrb[0].mxu0
    %v573 = vadd.f32 %v157, %v572
    %v574 = vpop.f32.mrb[0].mxu0
    %575 = vmatprep.mubr.bf16.mxu0 0
    %576 = vmatmul.mubr.bf16.gmra.mrb[0].mxu0 %v305
    %v577 = vpop.f32.mrb[0].mxu0
    %v578 = vadd.f32 %v157, %v577
    %v579 = vpop.f32.mrb[0].mxu0
    %v580 = vpop.f32.mrb[0].mxu0
    %v581 = vadd.f32 %v157, %v580
    %v582 = vpop.f32.mrb[0].mxu0
    %583 = vmatprep.mubr.bf16.mxu0 0
    %584 = vmatmul.mubr.bf16.gmra.mrb[0].mxu0 %v306
    %v585 = vpop.f32.mrb[0].mxu0
    %v586 = vadd.f32 %v157, %v585
    %v587 = vpop.f32.mrb[0].mxu0
    %v588 = vpop.f32.mrb[0].mxu0
    %v589 = vadd.f32 %v157, %v588
    %v590 = vpop.f32.mrb[0].mxu0
    %591 = vmatprep.mubr.bf16.mxu0 0
    %592 = vmatmul.mubr.bf16.gmra.mrb[0].mxu0 %v307
    %v593 = vpop.f32.mrb[0].mxu0
    %v594 = vadd.f32 %v157, %v593
    %v595 = vpop.f32.mrb[0].mxu0
    %v596 = vpop.f32.mrb[0].mxu0
    %v597 = vadd.f32 %v157, %v596
    %v598 = vpop.f32.mrb[0].mxu0
    %599 = vmatprep.mubr.bf16.mxu0 0
    %600 = vmatmul.mubr.bf16.gmra.mrb[0].mxu0 %v308
    %v601 = vpop.f32.mrb[0].mxu0
    %v602 = vadd.f32 %v157, %v601
    %v603 = vpop.f32.mrb[0].mxu0
    %v604 = vpop.f32.mrb[0].mxu0
    %v605 = vadd.f32 %v157, %v604
    %v606 = vpop.f32.mrb[0].mxu0
    %607 = vmatprep.mubr.bf16.mxu0 0
    %608 = vmatmul.mubr.bf16.gmra.mrb[0].mxu0 %v309
    %v609 = vpop.f32.mrb[0].mxu0
    %v610 = vadd.f32 %v157, %v609
    %v611 = vpop.f32.mrb[0].mxu0
    %v612 = vpop.f32.mrb[0].mxu0
    %v613 = vadd.f32 %v157, %v612
    %v614 = vpop.f32.mrb[0].mxu0
    %615 = vmatprep.mubr.bf16.mxu0 0
    %616 = vmatmul.mubr.bf16.gmra.mrb[0].mxu0 %v310
    %v617 = vpop.f32.mrb[0].mxu0
    %v618 = vadd.f32 %v157, %v617
    %v619 = vpop.f32.mrb[0].mxu0
    %v620 = vpop.f32.mrb[0].mxu0
    %v621 = vadd.f32 %v157, %v620
    %v622 = vpop.f32.mrb[0].mxu0
    %623 = vmatprep.mubr.bf16.mxu0 0
    %624 = vmatmul.mubr.bf16.gmra.mrb[0].mxu0 %v311
    %v625 = vpop.f32.mrb[0].mxu0
    %v626 = vadd.f32 %v157, %v625
    %v627 = vpop.f32.mrb[0].mxu0
    %v628 = vpop.f32.mrb[0].mxu0
    %v629 = vadd.f32 %v157, %v628
    %v630 = vpop.f32.mrb[0].mxu0
    %631 = vmatprep.mubr.bf16.mxu0 0
    %632 = vmatmul.mubr.bf16.gmra.mrb[0].mxu0 %v312
    %v633 = vpop.f32.mrb[0].mxu0
    %v634 = vadd.f32 %v157, %v633
    %v635 = vpop.f32.mrb[0].mxu0
    %v636 = vpop.f32.mrb[0].mxu0
    %v637 = vadd.f32 %v157, %v636
    %v638 = vpop.f32.mrb[0].mxu0
    %639 = vmatprep.mubr.bf16.mxu0 0
    %640 = vmatmul.mubr.bf16.gmra.mrb[0].mxu0 %v313
    %v641 = vpop.f32.mrb[0].mxu0
    %v642 = vadd.f32 %v157, %v641
    %v643 = vpop.f32.mrb[0].mxu0
    %v644 = vpop.f32.mrb[0].mxu0
    %v645 = vadd.f32 %v157, %v644
    %v646 = vpop.f32.mrb[0].mxu0
    %647 = vmatprep.mubr.bf16.mxu0 0
    %648 = vmatmul.mubr.bf16.gmra.mrb[0].mxu0 %v314
    %v649 = vpop.f32.mrb[0].mxu0
    %v650 = vadd.f32 %v157, %v649
    %v651 = vpop.f32.mrb[0].mxu0
    %v652 = vpop.f32.mrb[0].mxu0
    %v653 = vadd.f32 %v157, %v652
    %v654 = vpop.f32.mrb[0].mxu0
    %655 = vmatprep.mubr.bf16.mxu0 0
    %656 = vmatmul.mubr.bf16.gmra.mrb[0].mxu0 %v315
    %v657 = vpop.f32.mrb[0].mxu0
    %v658 = vadd.f32 %v157, %v657
    %v659 = vpop.f32.mrb[0].mxu0
    %v660 = vpop.f32.mrb[0].mxu0
    %v661 = vadd.f32 %v157, %v660
    %v662 = vpop.f32.mrb[0].mxu0
    %663 = vmatprep.mubr.bf16.mxu0 0
    %664 = vmatmul.mubr.bf16.gmra.mrb[0].mxu0 %v316
    %v665 = vpop.f32.mrb[0].mxu0
    %v666 = vadd.f32 %v157, %v665
    %v667 = vpop.f32.mrb[0].mxu0
    %v668 = vpop.f32.mrb[0].mxu0
    %v669 = vadd.f32 %v157, %v668
    %v670 = vpop.f32.mrb[0].mxu0
    %671 = vmatprep.mubr.bf16.mxu0 0
    %672 = vmatmul.mubr.bf16.gmra.mrb[0].mxu0 %v317
    %v673 = vpop.f32.mrb[0].mxu0
    %v674 = vadd.f32 %v157, %v673
    %v675 = vpop.f32.mrb[0].mxu0
    %v676 = vpop.f32.mrb[0].mxu0
    %v677 = vadd.f32 %v157, %v676
    %v678 = vpop.f32.mrb[0].mxu0
    %679 = vmatprep.mubr.bf16.mxu0 0
    %680 = vmatmul.mubr.bf16.gmra.mrb[0].mxu0 %v318
    %v681 = vpop.f32.mrb[0].mxu0
    %v682 = vadd.f32 %v157, %v681
    %v683 = vpop.f32.mrb[0].mxu0
    %v684 = vpop.f32.mrb[0].mxu0
    %v685 = vadd.f32 %v157, %v684
    %v686 = vpop.f32.mrb[0].mxu0
    %687 = vdwg.mxu0
    %v688 = vld [vmem:[#allocation8] sm:$0xf]
    %v689 = vld [vmem:[#allocation8 + $0x4] sm:$0xf]
    %v690 = vld [vmem:[#allocation8 + $0x8] sm:$0xf]
    %v691 = vld [vmem:[#allocation8 + $0xc] sm:$0xf]
    %v692 = vld [vmem:[#allocation8 + $0x10] sm:$0xf]
    %v693 = vld [vmem:[#allocation8 + $0x14] sm:$0xf]
    %v694 = vld [vmem:[#allocation8 + $0x18] sm:$0xf]
    %v695 = vld [vmem:[#allocation8 + $0x1c] sm:$0xf]
    %v696 = vld [vmem:[#allocation8 + $0x20] sm:$0xf]
    %v697 = vld [vmem:[#allocation8 + $0x24] sm:$0xf]
    %v698 = vld [vmem:[#allocation8 + $0x28] sm:$0xf]
    %v699 = vld [vmem:[#allocation8 + $0x2c] sm:$0xf]
    %v700 = vld [vmem:[#allocation8 + $0x30] sm:$0xf]
    %v701 = vld [vmem:[#allocation8 + $0x34] sm:$0xf]
    %v702 = vld [vmem:[#allocation8 + $0x38] sm:$0xf]
    %v703 = vld [vmem:[#allocation8 + $0x3c] sm:$0xf]
    %v704 = vld [vmem:[#allocation8 + $0x40] sm:$0xf]
    %v705 = vld [vmem:[#allocation8 + $0x44] sm:$0xf]
    %v706 = vld [vmem:[#allocation8 + $0x48] sm:$0xf]
    %v707 = vld [vmem:[#allocation8 + $0x4c] sm:$0xf]
    %v708 = vld [vmem:[#allocation8 + $0x50] sm:$0xf]
    %v709 = vld [vmem:[#allocation8 + $0x54] sm:$0xf]
    %v710 = vld [vmem:[#allocation8 + $0x58] sm:$0xf]
    %v711 = vld [vmem:[#allocation8 + $0x5c] sm:$0xf]
    %v712 = vld [vmem:[#allocation8 + $0x60] sm:$0xf]
    %v713 = vld [vmem:[#allocation8 + $0x64] sm:$0xf]
    %v714 = vld [vmem:[#allocation8 + $0x68] sm:$0xf]
    %v715 = vld [vmem:[#allocation8 + $0x6c] sm:$0xf]
    %v716 = vld [vmem:[#allocation8 + $0x70] sm:$0xf]
    %v717 = vld [vmem:[#allocation8 + $0x74] sm:$0xf]
    %v718 = vld [vmem:[#allocation8 + $0x78] sm:$0xf]
    %v719 = vld [vmem:[#allocation8 + $0x7c] sm:$0xf]
    %v720 = vld [vmem:[#allocation8 + $0x80] sm:$0xf]
    %v721 = vld [vmem:[#allocation8 + $0x84] sm:$0xf]
    %v722 = vld [vmem:[#allocation8 + $0x88] sm:$0xf]
    %v723 = vld [vmem:[#allocation8 + $0x8c] sm:$0xf]
    %v724 = vld [vmem:[#allocation8 + $0x90] sm:$0xf]
    %v725 = vld [vmem:[#allocation8 + $0x94] sm:$0xf]
    %v726 = vld [vmem:[#allocation8 + $0x98] sm:$0xf]
    %v727 = vld [vmem:[#allocation8 + $0x9c] sm:$0xf]
    %v728 = vld [vmem:[#allocation8 + $0xa0] sm:$0xf]
    %v729 = vld [vmem:[#allocation8 + $0xa4] sm:$0xf]
    %v730 = vld [vmem:[#allocation8 + $0xa8] sm:$0xf]
    %v731 = vld [vmem:[#allocation8 + $0xac] sm:$0xf]
    %v732 = vld [vmem:[#allocation8 + $0xb0] sm:$0xf]
    %v733 = vld [vmem:[#allocation8 + $0xb4] sm:$0xf]
    %v734 = vld [vmem:[#allocation8 + $0xb8] sm:$0xf]
    %v735 = vld [vmem:[#allocation8 + $0xbc] sm:$0xf]
    %v736 = vld [vmem:[#allocation8 + $0xc0] sm:$0xf]
    %v737 = vld [vmem:[#allocation8 + $0xc4] sm:$0xf]
    %v738 = vld [vmem:[#allocation8 + $0xc8] sm:$0xf]
    %v739 = vld [vmem:[#allocation8 + $0xcc] sm:$0xf]
    %v740 = vld [vmem:[#allocation8 + $0xd0] sm:$0xf]
    %v741 = vld [vmem:[#allocation8 + $0xd4] sm:$0xf]
    %v742 = vld [vmem:[#allocation8 + $0xd8] sm:$0xf]
    %v743 = vld [vmem:[#allocation8 + $0xdc] sm:$0xf]
    %v744 = vld [vmem:[#allocation8 + $0xe0] sm:$0xf]
    %v745 = vld [vmem:[#allocation8 + $0xe4] sm:$0xf]
    %v746 = vld [vmem:[#allocation8 + $0xe8] sm:$0xf]
    %v747 = vld [vmem:[#allocation8 + $0xec] sm:$0xf]
    %v748 = vld [vmem:[#allocation8 + $0xf0] sm:$0xf]
    %v749 = vld [vmem:[#allocation8 + $0xf4] sm:$0xf]
    %v750 = vld [vmem:[#allocation8 + $0xf8] sm:$0xf]
    %v751 = vld [vmem:[#allocation8 + $0xfc] sm:$0xf]
    %v752 = vunpack.c.l.bf16 %v688
    %v753 = vunpack.c.l.bf16 %v689
    %v754 = vunpack.c.l.bf16 %v690
    %v755 = vunpack.c.l.bf16 %v691
    %v756 = vunpack.c.l.bf16 %v692
    %v757 = vunpack.c.l.bf16 %v693
    %v758 = vunpack.c.l.bf16 %v694
    %v759 = vunpack.c.l.bf16 %v695
    %v760 = vunpack.c.l.bf16 %v696
    %v761 = vunpack.c.l.bf16 %v697
    %v762 = vunpack.c.l.bf16 %v698
    %v763 = vunpack.c.l.bf16 %v699
    %v764 = vunpack.c.l.bf16 %v700
    %v765 = vunpack.c.l.bf16 %v701
    %v766 = vunpack.c.l.bf16 %v702
    %v767 = vunpack.c.l.bf16 %v703
    %v768 = vunpack.c.l.bf16 %v704
    %v769 = vunpack.c.l.bf16 %v705
    %v770 = vunpack.c.l.bf16 %v706
    %v771 = vunpack.c.l.bf16 %v707
    %v772 = vunpack.c.l.bf16 %v708
    %v773 = vunpack.c.l.bf16 %v709
    %v774 = vunpack.c.l.bf16 %v710
    %v775 = vunpack.c.l.bf16 %v711
    %v776 = vunpack.c.l.bf16 %v712
    %v777 = vunpack.c.l.bf16 %v713
    %v778 = vunpack.c.l.bf16 %v714
    %v779 = vunpack.c.l.bf16 %v715
    %v780 = vunpack.c.l.bf16 %v716
    %v781 = vunpack.c.l.bf16 %v717
    %v782 = vunpack.c.l.bf16 %v718
    %v783 = vunpack.c.l.bf16 %v719
    %v784 = vunpack.c.l.bf16 %v720
    %v785 = vunpack.c.l.bf16 %v721
    %v786 = vunpack.c.l.bf16 %v722
    %v787 = vunpack.c.l.bf16 %v723
    %v788 = vunpack.c.l.bf16 %v724
    %v789 = vunpack.c.l.bf16 %v725
    %v790 = vunpack.c.l.bf16 %v726
    %v791 = vunpack.c.l.bf16 %v727
    %v792 = vunpack.c.l.bf16 %v728
    %v793 = vunpack.c.l.bf16 %v729
    %v794 = vunpack.c.l.bf16 %v730
    %v795 = vunpack.c.l.bf16 %v731
    %v796 = vunpack.c.l.bf16 %v732
    %v797 = vunpack.c.l.bf16 %v733
    %v798 = vunpack.c.l.bf16 %v734
    %v799 = vunpack.c.l.bf16 %v735
    %v800 = vunpack.c.l.bf16 %v736
    %v801 = vunpack.c.l.bf16 %v737
    %v802 = vunpack.c.l.bf16 %v738
    %v803 = vunpack.c.l.bf16 %v739
    %v804 = vunpack.c.l.bf16 %v740
    %v805 = vunpack.c.l.bf16 %v741
    %v806 = vunpack.c.l.bf16 %v742
    %v807 = vunpack.c.l.bf16 %v743
    %v808 = vunpack.c.l.bf16 %v744
    %v809 = vunpack.c.l.bf16 %v745
    %v810 = vunpack.c.l.bf16 %v746
    %v811 = vunpack.c.l.bf16 %v747
    %v812 = vunpack.c.l.bf16 %v748
    %v813 = vunpack.c.l.bf16 %v749
    %v814 = vunpack.c.l.bf16 %v750
    %v815 = vunpack.c.l.bf16 %v751
    %v816 = vadd.f32 %v434, %v752
    %v817 = vadd.f32 %v437, %v753
    %v818 = vadd.f32 %v442, %v754
    %v819 = vadd.f32 %v445, %v755
    %v820 = vadd.f32 %v450, %v756
    %v821 = vadd.f32 %v453, %v757
    %v822 = vadd.f32 %v458, %v758
    %v823 = vadd.f32 %v461, %v759
    %v824 = vadd.f32 %v466, %v760
    %v825 = vadd.f32 %v469, %v761
    %v826 = vadd.f32 %v474, %v762
    %v827 = vadd.f32 %v477, %v763
    %v828 = vadd.f32 %v482, %v764
    %v829 = vadd.f32 %v485, %v765
    %v830 = vadd.f32 %v490, %v766
    %v831 = vadd.f32 %v493, %v767
    %v832 = vadd.f32 %v498, %v768
    %v833 = vadd.f32 %v501, %v769
    %v834 = vadd.f32 %v506, %v770
    %v835 = vadd.f32 %v509, %v771
    %v836 = vadd.f32 %v514, %v772
    %v837 = vadd.f32 %v517, %v773
    %v838 = vadd.f32 %v522, %v774
    %v839 = vadd.f32 %v525, %v775
    %v840 = vadd.f32 %v530, %v776
    %v841 = vadd.f32 %v533, %v777
    %v842 = vadd.f32 %v538, %v778
    %v843 = vadd.f32 %v541, %v779
    %v844 = vadd.f32 %v546, %v780
    %v845 = vadd.f32 %v549, %v781
    %v846 = vadd.f32 %v554, %v782
    %v847 = vadd.f32 %v557, %v783
    %v848 = vadd.f32 %v562, %v784
    %v849 = vadd.f32 %v565, %v785
    %v850 = vadd.f32 %v570, %v786
    %v851 = vadd.f32 %v573, %v787
    %v852 = vadd.f32 %v578, %v788
    %v853 = vadd.f32 %v581, %v789
    %v854 = vadd.f32 %v586, %v790
    %v855 = vadd.f32 %v589, %v791
    %v856 = vadd.f32 %v594, %v792
    %v857 = vadd.f32 %v597, %v793
    %v858 = vadd.f32 %v602, %v794
    %v859 = vadd.f32 %v605, %v795
    %v860 = vadd.f32 %v610, %v796
    %v861 = vadd.f32 %v613, %v797
    %v862 = vadd.f32 %v618, %v798
    %v863 = vadd.f32 %v621, %v799
    %v864 = vadd.f32 %v626, %v800
    %v865 = vadd.f32 %v629, %v801
    %v866 = vadd.f32 %v634, %v802
    %v867 = vadd.f32 %v637, %v803
    %v868 = vadd.f32 %v642, %v804
    %v869 = vadd.f32 %v645, %v805
    %v870 = vadd.f32 %v650, %v806
    %v871 = vadd.f32 %v653, %v807
    %v872 = vadd.f32 %v658, %v808
    %v873 = vadd.f32 %v661, %v809
    %v874 = vadd.f32 %v666, %v810
    %v875 = vadd.f32 %v669, %v811
    %v876 = vadd.f32 %v674, %v812
    %v877 = vadd.f32 %v677, %v813
    %v878 = vadd.f32 %v682, %v814
    %v879 = vadd.f32 %v685, %v815
    %v880 = vmax.f32 %v816, 0.0
    %v881 = vmax.f32 %v817, 0.0
    %v882 = vmax.f32 %v818, 0.0
    %v883 = vmax.f32 %v819, 0.0
    %v884 = vmax.f32 %v820, 0.0
    %v885 = vmax.f32 %v821, 0.0
    %v886 = vmax.f32 %v822, 0.0
    %v887 = vmax.f32 %v823, 0.0
    %v888 = vmax.f32 %v824, 0.0
    %v889 = vmax.f32 %v825, 0.0
    %v890 = vmax.f32 %v826, 0.0
    %v891 = vmax.f32 %v827, 0.0
    %v892 = vmax.f32 %v828, 0.0
    %v893 = vmax.f32 %v829, 0.0
    %v894 = vmax.f32 %v830, 0.0
    %v895 = vmax.f32 %v831, 0.0
    %v896 = vmax.f32 %v832, 0.0
    %v897 = vmax.f32 %v833, 0.0
    %v898 = vmax.f32 %v834, 0.0
    %v899 = vmax.f32 %v835, 0.0
    %v900 = vmax.f32 %v836, 0.0
    %v901 = vmax.f32 %v837, 0.0
    %v902 = vmax.f32 %v838, 0.0
    %v903 = vmax.f32 %v839, 0.0
    %v904 = vmax.f32 %v840, 0.0
    %v905 = vmax.f32 %v841, 0.0
    %v906 = vmax.f32 %v842, 0.0
    %v907 = vmax.f32 %v843, 0.0
    %v908 = vmax.f32 %v844, 0.0
    %v909 = vmax.f32 %v845, 0.0
    %v910 = vmax.f32 %v846, 0.0
    %v911 = vmax.f32 %v847, 0.0
    %v912 = vmax.f32 %v848, 0.0
    %v913 = vmax.f32 %v849, 0.0
    %v914 = vmax.f32 %v850, 0.0
    %v915 = vmax.f32 %v851, 0.0
    %v916 = vmax.f32 %v852, 0.0
    %v917 = vmax.f32 %v853, 0.0
    %v918 = vmax.f32 %v854, 0.0
    %v919 = vmax.f32 %v855, 0.0
    %v920 = vmax.f32 %v856, 0.0
    %v921 = vmax.f32 %v857, 0.0
    %v922 = vmax.f32 %v858, 0.0
    %v923 = vmax.f32 %v859, 0.0
    %v924 = vmax.f32 %v860, 0.0
    %v925 = vmax.f32 %v861, 0.0
    %v926 = vmax.f32 %v862, 0.0
    %v927 = vmax.f32 %v863, 0.0
    %v928 = vmax.f32 %v864, 0.0
    %v929 = vmax.f32 %v865, 0.0
    %v930 = vmax.f32 %v866, 0.0
    %v931 = vmax.f32 %v867, 0.0
    %v932 = vmax.f32 %v868, 0.0
    %v933 = vmax.f32 %v869, 0.0
    %v934 = vmax.f32 %v870, 0.0
    %v935 = vmax.f32 %v871, 0.0
    %v936 = vmax.f32 %v872, 0.0
    %v937 = vmax.f32 %v873, 0.0
    %v938 = vmax.f32 %v874, 0.0
    %v939 = vmax.f32 %v875, 0.0
    %v940 = vmax.f32 %v876, 0.0
    %v941 = vmax.f32 %v877, 0.0
    %v942 = vmax.f32 %v878, 0.0
    %v943 = vmax.f32 %v879, 0.0
    %944 = vst [vmem:[#allocation10] sm:$0xff] %v880
    %945 = vst [vmem:[#allocation10 + $0x8] sm:$0xff] %v881
    %946 = vst [vmem:[#allocation10 + $0x10] sm:$0xff] %v882
    %947 = vst [vmem:[#allocation10 + $0x18] sm:$0xff] %v883
    %948 = vst [vmem:[#allocation10 + $0x20] sm:$0xff] %v884
    %949 = vst [vmem:[#allocation10 + $0x28] sm:$0xff] %v885
    %950 = vst [vmem:[#allocation10 + $0x30] sm:$0xff] %v886
    %951 = vst [vmem:[#allocation10 + $0x38] sm:$0xff] %v887
    %952 = vst [vmem:[#allocation10 + $0x40] sm:$0xff] %v888
    %953 = vst [vmem:[#allocation10 + $0x48] sm:$0xff] %v889
    %954 = vst [vmem:[#allocation10 + $0x50] sm:$0xff] %v890
    %955 = vst [vmem:[#allocation10 + $0x58] sm:$0xff] %v891
    %956 = vst [vmem:[#allocation10 + $0x60] sm:$0xff] %v892
    %957 = vst [vmem:[#allocation10 + $0x68] sm:$0xff] %v893
    %958 = vst [vmem:[#allocation10 + $0x70] sm:$0xff] %v894
    %959 = vst [vmem:[#allocation10 + $0x78] sm:$0xff] %v895
    %960 = vst [vmem:[#allocation10 + $0x80] sm:$0xff] %v896
    %961 = vst [vmem:[#allocation10 + $0x88] sm:$0xff] %v897
    %962 = vst [vmem:[#allocation10 + $0x90] sm:$0xff] %v898
    %963 = vst [vmem:[#allocation10 + $0x98] sm:$0xff] %v899
    %964 = vst [vmem:[#allocation10 + $0xa0] sm:$0xff] %v900
    %965 = vst [vmem:[#allocation10 + $0xa8] sm:$0xff] %v901
    %966 = vst [vmem:[#allocation10 + $0xb0] sm:$0xff] %v902
    %967 = vst [vmem:[#allocation10 + $0xb8] sm:$0xff] %v903
    %968 = vst [vmem:[#allocation10 + $0xc0] sm:$0xff] %v904
    %969 = vst [vmem:[#allocation10 + $0xc8] sm:$0xff] %v905
    %970 = vst [vmem:[#allocation10 + $0xd0] sm:$0xff] %v906
    %971 = vst [vmem:[#allocation10 + $0xd8] sm:$0xff] %v907
    %972 = vst [vmem:[#allocation10 + $0xe0] sm:$0xff] %v908
    %973 = vst [vmem:[#allocation10 + $0xe8] sm:$0xff] %v909
    %974 = vst [vmem:[#allocation10 + $0xf0] sm:$0xff] %v910
    %975 = vst [vmem:[#allocation10 + $0xf8] sm:$0xff] %v911
    %976 = vst [vmem:[#allocation10 + $0x100] sm:$0xff] %v912
    %977 = vst [vmem:[#allocation10 + $0x108] sm:$0xff] %v913
    %978 = vst [vmem:[#allocation10 + $0x110] sm:$0xff] %v914
    %979 = vst [vmem:[#allocation10 + $0x118] sm:$0xff] %v915
    %980 = vst [vmem:[#allocation10 + $0x120] sm:$0xff] %v916
    %981 = vst [vmem:[#allocation10 + $0x128] sm:$0xff] %v917
    %982 = vst [vmem:[#allocation10 + $0x130] sm:$0xff] %v918
    %983 = vst [vmem:[#allocation10 + $0x138] sm:$0xff] %v919
    %984 = vst [vmem:[#allocation10 + $0x140] sm:$0xff] %v920
    %985 = vst [vmem:[#allocation10 + $0x148] sm:$0xff] %v921
    %986 = vst [vmem:[#allocation10 + $0x150] sm:$0xff] %v922
    %987 = vst [vmem:[#allocation10 + $0x158] sm:$0xff] %v923
    %988 = vst [vmem:[#allocation10 + $0x160] sm:$0xff] %v924
    %989 = vst [vmem:[#allocation10 + $0x168] sm:$0xff] %v925
    %990 = vst [vmem:[#allocation10 + $0x170] sm:$0xff] %v926
    %991 = vst [vmem:[#allocation10 + $0x178] sm:$0xff] %v927
    %992 = vst [vmem:[#allocation10 + $0x180] sm:$0xff] %v928
    %993 = vst [vmem:[#allocation10 + $0x188] sm:$0xff] %v929
    %994 = vst [vmem:[#allocation10 + $0x190] sm:$0xff] %v930
    %995 = vst [vmem:[#allocation10 + $0x198] sm:$0xff] %v931
    %996 = vst [vmem:[#allocation10 + $0x1a0] sm:$0xff] %v932
    %997 = vst [vmem:[#allocation10 + $0x1a8] sm:$0xff] %v933
    %998 = vst [vmem:[#allocation10 + $0x1b0] sm:$0xff] %v934
    %999 = vst [vmem:[#allocation10 + $0x1b8] sm:$0xff] %v935
    %1000 = vst [vmem:[#allocation10 + $0x1c0] sm:$0xff] %v936
    %1001 = vst [vmem:[#allocation10 + $0x1c8] sm:$0xff] %v937
    %1002 = vst [vmem:[#allocation10 + $0x1d0] sm:$0xff] %v938
    %1003 = vst [vmem:[#allocation10 + $0x1d8] sm:$0xff] %v939
    %1004 = vst [vmem:[#allocation10 + $0x1e0] sm:$0xff] %v940
    %1005 = vst [vmem:[#allocation10 + $0x1e8] sm:$0xff] %v941
    %1006 = vst [vmem:[#allocation10 + $0x1f0] sm:$0xff] %v942
    %1007 = vst [vmem:[#allocation10 + $0x1f8] sm:$0xff] %v943
    // Predicated region
    $region34: #{deform_bottleneck_forward.7} parent=1 // pred_check
      _
    $region35: #{deform_bottleneck_forward.7} parent=1 // pred_check_branch
      %1009 = sbr.rel (0) target = $region37
    $region36: #{deform_bottleneck_forward.7} parent=1 // pred_region
      %s1011 = ssub.s32 8192, 8192
      %1012 = vsyncadd [#allocation4], %s1011
      %s1013 = sshll.u32 [#allocation10], 4
      %s1014 = int_to_ptr.vmem [resolvable:$true] %s1013
      %1019 = dma.vmem_to_hbm [thread:$0]  %s1014, 8192, %s4, [#allocation4], 128, 128, 8
    $region37: #{deform_bottleneck_forward.7} parent=1 // pred_fallthru
      _
    // Predicated region
    $region38: #{deform_bottleneck_forward.7} parent=1 // pred_check
      _
    $region39: #{deform_bottleneck_forward.7} parent=1 // pred_check_branch
      %1021 = sbr.rel (0) target = $region41
    $region40: #{deform_bottleneck_forward.7} parent=1 // pred_region
      %1022 = dma.done [#allocation4], 8192
    $region41: #{deform_bottleneck_forward.7} parent=1 // pred_fallthru
      _
    %1023 = vsyncpa [#allocation3], 1
    %1024 = vsyncpa [#allocation6], 1
    %1025 = vsyncpa [#allocation9], 1
    %1026 = vsyncpa [#allocation4], 1

</llo_original>
